<compile_context>
chip_gen: v7x
topology: tpu7x:2x2x1
jax: 0.10.0
libtpu: 0.0.40
codegen_flags: <defaults>
</compile_context>

<pallas_src>
import functools

import jax
import jax.numpy as jnp
from jax.experimental import pallas as pl
from jax.experimental.pallas import tpu as pltpu


# ---------------------------------------------------------------------------
# Single fused kernel: fc1 + 5 ResBlocks + 1x1 conv + gumbel-softmax (tau=0.5)
# ---------------------------------------------------------------------------
def generator_kernel(noise_ref, fcw_ref, fcb_ref, wres_ref, bres_ref,
                     w1_ref, b1_ref, gumbel_ref, out_ref, xpad_ref,
                     *, n_resblocks, inv_tau, seq_len, hidden_p):
    T, Hp = seq_len, hidden_p
    TB = noise_ref.shape[0]
    Cp = out_ref.shape[-1]                       # n_chars padded to 128 lanes

    # --- fc1: noise @ W (columns pre-permuted to (t, h) order) -> (TB, T, Hp) f32
    nz = noise_ref[...].astype(jnp.bfloat16)
    x = jnp.dot(nz, fcw_ref[...], preferred_element_type=jnp.float32) + fcb_ref[...]
    h = x.reshape(TB, T, Hp)                     # channels-last, padded lanes are 0

    # Zero the 2+2 halo rows of the persistent padded im2col buffer. Done every grid
    # step (cheap: 4 rows) so it is correct even when the parallel batch axis is
    # split across TensorCores (each core owns its own scratch).
    xpad_ref[:, 0:2, :] = jnp.zeros((TB, 2, Hp), jnp.bfloat16)
    xpad_ref[:, T + 2:T + 4, :] = jnp.zeros((TB, 2, Hp), jnp.bfloat16)

    def conv5(act, layer):
        # relu -> Conv1d(k=5, padding=2) as ONE im2col matmul (TB*T, 5Hp)@(5Hp, Hp).
        # relu(act) is cast to bf16 once and written into the interior rows of the
        # persistent padded buffer (halo rows already 0).
        xpad_ref[:, 2:T + 2, :] = jnp.maximum(act, 0.0).astype(jnp.bfloat16)
        xp = xpad_ref[...]                                           # (TB, T+4, Hp)
        cols = jnp.concatenate([xp[:, k:k + T, :] for k in range(5)],
                               axis=-1)                              # (TB, T, 5Hp)
        y = jnp.dot(cols.reshape(TB * T, 5 * Hp), wres_ref[layer],
                    preferred_element_type=jnp.float32)
        return y.reshape(TB, T, Hp) + bres_ref[layer]                # f32

    # Residual stream stays f32 across all 10 convs.
    for l in range(n_resblocks):
        r = conv5(h, 2 * l)                  # ReLU folded into conv5
        r = conv5(r, 2 * l + 1)              # 0.3 residual scale folded into weights
        h = h + r

    # 1x1 conv: pure channel mix -> logits (TB*T, Cp); padded columns have bias -1e9.
    logits = jnp.dot(h.reshape(TB * T, Hp).astype(jnp.bfloat16), w1_ref[...],
                     preferred_element_type=jnp.float32) + b1_ref[...]

    # gumbel_softmax(logits, tau) = softmax((logits + g) / tau, dim=-1)
    g = gumbel_ref[...].reshape(TB * T, Cp).astype(jnp.float32)
    y = (logits + g) * inv_tau
    y = y - jnp.max(y, axis=-1, keepdims=True)
    e = jnp.exp(y)
    p = e / jnp.sum(e, axis=-1, keepdims=True)   # exact reciprocal (review concern)
    out_ref[...] = p.reshape(TB, T, Cp).astype(out_ref.dtype)


# ---------------------------------------------------------------------------
# Parameter construction / packing (done once, outside the kernel)
# ---------------------------------------------------------------------------
def init_params(key, n_chars, seq_len, hidden):
    """Deterministic synthetic parameters (shapes match the nn.Module math)."""
    H, T, C = hidden, seq_len, n_chars
    ks = jax.random.split(key, 6)
    scale = 0.05
    return dict(
        # Linear(128, H*T): stored pre-transposed as (128, H*T); column j = h*T + t
        fc_w=jax.random.normal(ks[0], (128, H * T), jnp.float32) * scale,
        fc_b=jax.random.normal(ks[1], (1, H * T), jnp.float32) * scale,
        # 5 ResBlocks x 2 convs = 10 layers, each 5 taps of (in=H, out=H)
        res_w=jax.random.normal(ks[2], (10, 5, H, H), jnp.float32) * scale,
        res_b=jax.random.normal(ks[3], (10, 1, H), jnp.float32) * scale,
        # Conv1d(H, C, 1) as an (H, C) matmul
        conv1_w=jax.random.normal(ks[4], (H, C), jnp.float32) * scale,
        conv1_b=jax.random.normal(ks[5], (1, C), jnp.float32) * scale,
    )


def pack_params(params, *, n_chars, seq_len, hidden):
    """Permute / fold / pad / cast parameters into the kernel-friendly layout."""
    H, T, C = hidden, seq_len, n_chars
    Hp = -(-H // 128) * 128          # hidden padded to full lanes / MXU columns
    Cp = -(-C // 128) * 128          # output chars padded to full lanes

    # fc1: permute columns (h, t) -> (t, h) and zero-pad h -> Hp so the fc output
    # reshapes to channels-last (B, T, Hp) for free; padded channels are exactly 0.
    fc_w = params["fc_w"].reshape(128, H, T).transpose(0, 2, 1)        # (128, T, H)
    fc_w = jnp.zeros((128, T, Hp), jnp.float32).at[:, :, :H].set(fc_w)
    fc_b = params["fc_b"].reshape(1, H, T).transpose(0, 2, 1)
    fc_b = jnp.zeros((1, T, Hp), jnp.float32).at[:, :, :H].set(fc_b)

    # ResBlock convs: fold the 0.3 residual scale into the 2nd conv of each block,
    # zero-pad in/out channels to Hp, lay taps out for im2col (row index = k*Hp + cin).
    scale = jnp.where(jnp.arange(10) % 2 == 1, 0.3, 1.0).astype(jnp.float32)
    rw = params["res_w"] * scale[:, None, None, None]                  # (10,5,H,H)
    rb = params["res_b"] * scale[:, None, None]                        # (10,1,H)
    res_w = jnp.zeros((10, 5, Hp, Hp), jnp.float32).at[:, :, :H, :H].set(rw)
    res_b = jnp.zeros((10, 1, Hp), jnp.float32).at[:, :, :H].set(rb)

    # 1x1 conv: pad output channels to Cp lanes; padded columns get -1e9 bias so the
    # softmax puts ~zero mass there.
    w1 = jnp.zeros((Hp, Cp), jnp.float32).at[:H, :C].set(params["conv1_w"])
    b1 = jnp.full((1, Cp), -1e9, jnp.float32).at[:, :C].set(params["conv1_b"])

    return dict(
        fc_w=fc_w.reshape(128, T * Hp).astype(jnp.bfloat16),
        fc_b=fc_b.reshape(1, T * Hp),
        res_w=res_w.reshape(10, 5 * Hp, Hp).astype(jnp.bfloat16),
        res_b=res_b,
        conv1_w=w1.astype(jnp.bfloat16),
        conv1_b=b1,
        h_pad=Hp, c_pad=Cp,
    )


def _pick_batch_tile(B, T, target_rows=256):
    """Batch tile: target TB*T >= 256 MXU rows, TB | B, keep >=2 grid steps if
    that still fills the MXU (so v7x megacore can split the parallel axis)."""
    tb = min(B, max(1, -(-target_rows // T)))
    while B % tb:
        tb -= 1
    if tb == B and B % 2 == 0 and (B // 2) * T >= target_rows:
        tb = B // 2
    return tb


# ---------------------------------------------------------------------------
# Wrapper
# ---------------------------------------------------------------------------
def generator_fbgan_forward(noise, packed, gumbel_key, *, n_chars, seq_len,
                            hidden, tau=0.5, block_b=None):
    B = noise.shape[0]
    T, C = seq_len, n_chars
    Hp, Cp = int(packed["h_pad"]), int(packed["c_pad"])
    n_res = 5

    TB = block_b if block_b is not None else _pick_batch_tile(B, T)
    assert B % TB == 0, "batch must be divisible by the batch tile"

    # Gumbel noise sampled host-side (the TPU PRNG has no interpret/CPU lowering);
    # bf16 transfer halves its HBM traffic, the add happens in f32 in-kernel.
    gumbel = jax.random.gumbel(gumbel_key, (B, T, Cp), jnp.float32)
    gumbel = gumbel.astype(jnp.bfloat16)

    kernel = functools.partial(generator_kernel, n_resblocks=n_res,
                               inv_tau=1.0 / tau, seq_len=T, hidden_p=Hp)

    out_padded = pl.pallas_call(
        kernel,
        out_shape=jax.ShapeDtypeStruct((B, T, Cp), jnp.bfloat16),
        grid_spec=pltpu.PrefetchScalarGridSpec(
            num_scalar_prefetch=0,
            grid=(B // TB,),
            in_specs=[
                pl.BlockSpec((TB, 128), lambda i: (i, 0)),               # noise
                pl.BlockSpec((128, T * Hp), lambda i: (0, 0)),           # fc_w
                pl.BlockSpec((1, T * Hp), lambda i: (0, 0)),             # fc_b
                pl.BlockSpec((2 * n_res, 5 * Hp, Hp), lambda i: (0, 0, 0)),  # res_w
                pl.BlockSpec((2 * n_res, 1, Hp), lambda i: (0, 0, 0)),   # res_b
                pl.BlockSpec((Hp, Cp), lambda i: (0, 0)),                # conv1_w
                pl.BlockSpec((1, Cp), lambda i: (0, 0)),                 # conv1_b
                pl.BlockSpec((TB, T, Cp), lambda i: (i, 0, 0)),          # gumbel
            ],
            out_specs=pl.BlockSpec((TB, T, Cp), lambda i: (i, 0, 0)),
            scratch_shapes=[pltpu.VMEM((TB, T + 4, Hp), jnp.bfloat16)],  # im2col pad
        ),
        compiler_params=pltpu.CompilerParams(
            dimension_semantics=("parallel",),
            vmem_limit_bytes=64 * 1024 * 1024,
        ),
    )(noise.astype(jnp.float32), packed["fc_w"], packed["fc_b"],
      packed["res_w"], packed["res_b"], packed["conv1_w"], packed["conv1_b"],
      gumbel)

    # TODO(synk): downstream consumers should read the padded bf16 tensor directly
    # (or fuse this slice) to avoid an extra HBM round trip of the Cp-padded array.
    return out_padded[..., :C]


if __name__ == "__main__":
    # Small shapes consistent with the module's forward.
    batch_size, n_chars, seq_len, hidden = 2, 8, 8, 32

    key = jax.random.PRNGKey(0)
    k_param, k_noise, k_gumbel = jax.random.split(key, 3)

    params = init_params(k_param, n_chars, seq_len, hidden)
    packed = pack_params(params, n_chars=n_chars, seq_len=seq_len, hidden=hidden)

    noise = jax.random.normal(k_noise, (batch_size, 128), jnp.float32)

    out = generator_fbgan_forward(
        noise, packed, k_gumbel,
        n_chars=n_chars, seq_len=seq_len, hidden=hidden, tau=0.5,
    )
    out = jax.block_until_ready(out)

    assert out.shape == (batch_size, seq_len, n_chars)
    out_f32 = out.astype(jnp.float32)
    assert bool(jnp.all(jnp.isfinite(out_f32)))
    assert bool(jnp.all(out_f32 >= 0.0))
    # Each (b, t) row is a softmax distribution over n_chars (padded lanes get ~0
    # mass); tolerance covers the bf16 output cast.
    row_sums = jnp.sum(out_f32, axis=-1)
    assert bool(jnp.allclose(row_sums, 1.0, atol=1e-2)), row_sums

    print("KERNEL_OK")
</pallas_src>

<mosaic_0001>
module attributes {stable_mosaic.version = 11 : i64} {
  func.func @generator_kernel(%arg0: i32, %arg1: memref<2x128xf32, #tpu.memory_space<vmem>>, %arg2: memref<128x1024xbf16, #tpu.memory_space<vmem>>, %arg3: memref<1x1024xf32, #tpu.memory_space<vmem>>, %arg4: memref<10x640x128xbf16, #tpu.memory_space<vmem>>, %arg5: memref<10x1x128xf32, #tpu.memory_space<vmem>>, %arg6: memref<128x128xbf16, #tpu.memory_space<vmem>>, %arg7: memref<1x128xf32, #tpu.memory_space<vmem>>, %arg8: memref<2x8x128xbf16, #tpu.memory_space<vmem>>, %arg9: memref<2x8x128xbf16, #tpu.memory_space<vmem>>, %arg10: memref<2x12x128xbf16, #tpu.memory_space<vmem>>) attributes {dimension_semantics = [#tpu.dimension_semantics<parallel>], iteration_bounds = array<i64: 1>, scalar_prefetch = 0 : i64, scratch_operands = 1 : i64, tpu.core_type = #tpu.core_type<tc>, window_params = [{transform_indices = @transform_0, window_bounds = array<i64: 2, 128>}, {pipeline_mode = #tpu.pipeline_mode<synchronous>, transform_indices = @transform_1, window_bounds = array<i64: 128, 1024>}, {pipeline_mode = #tpu.pipeline_mode<synchronous>, transform_indices = @transform_2, window_bounds = array<i64: 1, 1024>}, {pipeline_mode = #tpu.pipeline_mode<synchronous>, transform_indices = @transform_3, window_bounds = array<i64: 10, 640, 128>}, {pipeline_mode = #tpu.pipeline_mode<synchronous>, transform_indices = @transform_4, window_bounds = array<i64: 10, 1, 128>}, {pipeline_mode = #tpu.pipeline_mode<synchronous>, transform_indices = @transform_5, window_bounds = array<i64: 128, 128>}, {pipeline_mode = #tpu.pipeline_mode<synchronous>, transform_indices = @transform_6, window_bounds = array<i64: 1, 128>}, {transform_indices = @transform_7, window_bounds = array<i64: 2, 8, 128>}, {transform_indices = @transform_8, window_bounds = array<i64: 2, 8, 128>}]} {
    %c0 = arith.constant 0 : index
    %c0_0 = arith.constant 0 : index
    %0 = vector.load %arg1[%c0, %c0_0] : memref<2x128xf32, #tpu.memory_space<vmem>>, vector<2x128xf32>
    %1 = arith.truncf %0 : vector<2x128xf32> to vector<2x128xbf16>
    %c0_1 = arith.constant 0 : index
    %c0_2 = arith.constant 0 : index
    %2 = vector.load %arg2[%c0_1, %c0_2] : memref<128x1024xbf16, #tpu.memory_space<vmem>>, vector<128x1024xbf16>
    %cst = arith.constant dense<0.000000e+00> : vector<2x1024xf32>
    %3 = tpu.matmul %1, %2, %cst {dimension_numbers = #tpu.dot_dimension_numbers<[1], [0], [0], [1], [0, 0, 1, 1], [], []>} : vector<2x128xbf16>, vector<128x1024xbf16>, vector<2x1024xf32> -> vector<2x1024xf32>
    %c0_3 = arith.constant 0 : index
    %c0_4 = arith.constant 0 : index
    %4 = vector.load %arg3[%c0_3, %c0_4] : memref<1x1024xf32, #tpu.memory_space<vmem>>, vector<1x1024xf32>
    %5 = vector.broadcast %4 : vector<1x1024xf32> to vector<2x1024xf32>
    %6 = arith.addf %3, %5 : vector<2x1024xf32>
    %7 = vector.shape_cast %6 : vector<2x1024xf32> to vector<2x8x128xf32>
    %cst_5 = arith.constant 0.000000e+00 : bf16
    %8 = vector.broadcast %cst_5 : bf16 to vector<2x2x128xbf16>
    %c0_6 = arith.constant 0 : index
    %c0_7 = arith.constant 0 : index
    %c0_8 = arith.constant 0 : index
    %9 = vector.load %arg10[%c0_6, %c0_7, %c0_8] : memref<2x12x128xbf16, #tpu.memory_space<vmem>>, vector<2x2x128xbf16>
    tpu.vector_store %arg10[%c0_6, %c0_7, %c0_8], %8 {strides = array<i32>} : memref<2x12x128xbf16, #tpu.memory_space<vmem>>, vector<2x2x128xbf16>,
    %cst_9 = arith.constant 0.000000e+00 : bf16
    %10 = vector.broadcast %cst_9 : bf16 to vector<2x2x128xbf16>
    %c0_10 = arith.constant 0 : index
    %c10 = arith.constant 10 : index
    %c0_11 = arith.constant 0 : index
    %11 = vector.load %arg10[%c0_10, %c10, %c0_11] : memref<2x12x128xbf16, #tpu.memory_space<vmem>>, vector<2x2x128xbf16>
    tpu.vector_store %arg10[%c0_10, %c10, %c0_11], %10 {strides = array<i32>} : memref<2x12x128xbf16, #tpu.memory_space<vmem>>, vector<2x2x128xbf16>,
    %cst_12 = arith.constant 0.000000e+00 : f32
    %12 = vector.broadcast %cst_12 : f32 to vector<2x8x128xf32>
    %13 = arith.maximumf %7, %12 : vector<2x8x128xf32>
    %14 = arith.truncf %13 : vector<2x8x128xf32> to vector<2x8x128xbf16>
    %c0_13 = arith.constant 0 : index
    %c2 = arith.constant 2 : index
    %c0_14 = arith.constant 0 : index
    %15 = vector.load %arg10[%c0_13, %c2, %c0_14] : memref<2x12x128xbf16, #tpu.memory_space<vmem>>, vector<2x8x128xbf16>
    tpu.vector_store %arg10[%c0_13, %c2, %c0_14], %14 {strides = array<i32>} : memref<2x12x128xbf16, #tpu.memory_space<vmem>>, vector<2x8x128xbf16>,
    %c0_15 = arith.constant 0 : index
    %c0_16 = arith.constant 0 : index
    %c0_17 = arith.constant 0 : index
    %16 = vector.load %arg10[%c0_15, %c0_16, %c0_17] : memref<2x12x128xbf16, #tpu.memory_space<vmem>>, vector<2x12x128xbf16>
    %17 = vector.extract_strided_slice %16 {offsets = [0, 0, 0], sizes = [2, 8, 128], strides = [1, 1, 1]} : vector<2x12x128xbf16> to vector<2x8x128xbf16>
    %18 = vector.extract_strided_slice %16 {offsets = [0, 1, 0], sizes = [2, 8, 128], strides = [1, 1, 1]} : vector<2x12x128xbf16> to vector<2x8x128xbf16>
    %19 = vector.extract_strided_slice %16 {offsets = [0, 2, 0], sizes = [2, 8, 128], strides = [1, 1, 1]} : vector<2x12x128xbf16> to vector<2x8x128xbf16>
    %20 = vector.extract_strided_slice %16 {offsets = [0, 3, 0], sizes = [2, 8, 128], strides = [1, 1, 1]} : vector<2x12x128xbf16> to vector<2x8x128xbf16>
    %21 = vector.extract_strided_slice %16 {offsets = [0, 4, 0], sizes = [2, 8, 128], strides = [1, 1, 1]} : vector<2x12x128xbf16> to vector<2x8x128xbf16>
    %22 = tpu.concatenate %17, %18, %19, %20, %21 in 2 : vector<2x8x128xbf16>, vector<2x8x128xbf16>, vector<2x8x128xbf16>, vector<2x8x128xbf16>, vector<2x8x128xbf16> -> vector<2x8x640xbf16>
    %23 = vector.shape_cast %22 : vector<2x8x640xbf16> to vector<16x640xbf16>
    %c0_18 = arith.constant 0 : index
    %c0_19 = arith.constant 0 : index
    %c0_20 = arith.constant 0 : index
    %24 = vector.load %arg4[%c0_18, %c0_19, %c0_20] : memref<10x640x128xbf16, #tpu.memory_space<vmem>>, vector<1x640x128xbf16>
    %25 = vector.shape_cast %24 : vector<1x640x128xbf16> to vector<640x128xbf16>
    %cst_21 = arith.constant dense<0.000000e+00> : vector<16x128xf32>
    %26 = tpu.matmul %23, %25, %cst_21 {dimension_numbers = #tpu.dot_dimension_numbers<[1], [0], [0], [1], [0, 0, 1, 1], [], []>} : vector<16x640xbf16>, vector<640x128xbf16>, vector<16x128xf32> -> vector<16x128xf32>
    %27 = vector.shape_cast %26 : vector<16x128xf32> to vector<2x8x128xf32>
    %c0_22 = arith.constant 0 : index
    %c0_23 = arith.constant 0 : index
    %c0_24 = arith.constant 0 : index
    %28 = vector.load %arg5[%c0_22, %c0_23, %c0_24] : memref<10x1x128xf32, #tpu.memory_space<vmem>>, vector<1x1x128xf32>
    %29 = vector.shape_cast %28 : vector<1x1x128xf32> to vector<1x128xf32>
    %30 = vector.shape_cast %29 : vector<1x128xf32> to vector<1x1x128xf32>
    %31 = vector.broadcast %30 : vector<1x1x128xf32> to vector<2x8x128xf32>
    %32 = arith.addf %27, %31 : vector<2x8x128xf32>
    %cst_25 = arith.constant 0.000000e+00 : f32
    %33 = vector.broadcast %cst_25 : f32 to vector<2x8x128xf32>
    %34 = arith.maximumf %32, %33 : vector<2x8x128xf32>
    %35 = arith.truncf %34 : vector<2x8x128xf32> to vector<2x8x128xbf16>
    %c0_26 = arith.constant 0 : index
    %c2_27 = arith.constant 2 : index
    %c0_28 = arith.constant 0 : index
    %36 = vector.load %arg10[%c0_26, %c2_27, %c0_28] : memref<2x12x128xbf16, #tpu.memory_space<vmem>>, vector<2x8x128xbf16>
    tpu.vector_store %arg10[%c0_26, %c2_27, %c0_28], %35 {strides = array<i32>} : memref<2x12x128xbf16, #tpu.memory_space<vmem>>, vector<2x8x128xbf16>,
    %c0_29 = arith.constant 0 : index
    %c0_30 = arith.constant 0 : index
    %c0_31 = arith.constant 0 : index
    %37 = vector.load %arg10[%c0_29, %c0_30, %c0_31] : memref<2x12x128xbf16, #tpu.memory_space<vmem>>, vector<2x12x128xbf16>
    %38 = vector.extract_strided_slice %37 {offsets = [0, 0, 0], sizes = [2, 8, 128], strides = [1, 1, 1]} : vector<2x12x128xbf16> to vector<2x8x128xbf16>
    %39 = vector.extract_strided_slice %37 {offsets = [0, 1, 0], sizes = [2, 8, 128], strides = [1, 1, 1]} : vector<2x12x128xbf16> to vector<2x8x128xbf16>
    %40 = vector.extract_strided_slice %37 {offsets = [0, 2, 0], sizes = [2, 8, 128], strides = [1, 1, 1]} : vector<2x12x128xbf16> to vector<2x8x128xbf16>
    %41 = vector.extract_strided_slice %37 {offsets = [0, 3, 0], sizes = [2, 8, 128], strides = [1, 1, 1]} : vector<2x12x128xbf16> to vector<2x8x128xbf16>
    %42 = vector.extract_strided_slice %37 {offsets = [0, 4, 0], sizes = [2, 8, 128], strides = [1, 1, 1]} : vector<2x12x128xbf16> to vector<2x8x128xbf16>
    %43 = tpu.concatenate %38, %39, %40, %41, %42 in 2 : vector<2x8x128xbf16>, vector<2x8x128xbf16>, vector<2x8x128xbf16>, vector<2x8x128xbf16>, vector<2x8x128xbf16> -> vector<2x8x640xbf16>
    %44 = vector.shape_cast %43 : vector<2x8x640xbf16> to vector<16x640xbf16>
    %c1 = arith.constant 1 : index
    %c0_32 = arith.constant 0 : index
    %c0_33 = arith.constant 0 : index
    %45 = vector.load %arg4[%c1, %c0_32, %c0_33] : memref<10x640x128xbf16, #tpu.memory_space<vmem>>, vector<1x640x128xbf16>
    %46 = vector.shape_cast %45 : vector<1x640x128xbf16> to vector<640x128xbf16>
    %cst_34 = arith.constant dense<0.000000e+00> : vector<16x128xf32>
    %47 = tpu.matmul %44, %46, %cst_34 {dimension_numbers = #tpu.dot_dimension_numbers<[1], [0], [0], [1], [0, 0, 1, 1], [], []>} : vector<16x640xbf16>, vector<640x128xbf16>, vector<16x128xf32> -> vector<16x128xf32>
    %48 = vector.shape_cast %47 : vector<16x128xf32> to vector<2x8x128xf32>
    %c1_35 = arith.constant 1 : index
    %c0_36 = arith.constant 0 : index
    %c0_37 = arith.constant 0 : index
    %49 = vector.load %arg5[%c1_35, %c0_36, %c0_37] : memref<10x1x128xf32, #tpu.memory_space<vmem>>, vector<1x1x128xf32>
    %50 = vector.shape_cast %49 : vector<1x1x128xf32> to vector<1x128xf32>
    %51 = vector.shape_cast %50 : vector<1x128xf32> to vector<1x1x128xf32>
    %52 = vector.broadcast %51 : vector<1x1x128xf32> to vector<2x8x128xf32>
    %53 = arith.addf %48, %52 : vector<2x8x128xf32>
    %54 = arith.addf %7, %53 : vector<2x8x128xf32>
    %cst_38 = arith.constant 0.000000e+00 : f32
    %55 = vector.broadcast %cst_38 : f32 to vector<2x8x128xf32>
    %56 = arith.maximumf %54, %55 : vector<2x8x128xf32>
    %57 = arith.truncf %56 : vector<2x8x128xf32> to vector<2x8x128xbf16>
    %c0_39 = arith.constant 0 : index
    %c2_40 = arith.constant 2 : index
    %c0_41 = arith.constant 0 : index
    %58 = vector.load %arg10[%c0_39, %c2_40, %c0_41] : memref<2x12x128xbf16, #tpu.memory_space<vmem>>, vector<2x8x128xbf16>
    tpu.vector_store %arg10[%c0_39, %c2_40, %c0_41], %57 {strides = array<i32>} : memref<2x12x128xbf16, #tpu.memory_space<vmem>>, vector<2x8x128xbf16>,
    %c0_42 = arith.constant 0 : index
    %c0_43 = arith.constant 0 : index
    %c0_44 = arith.constant 0 : index
    %59 = vector.load %arg10[%c0_42, %c0_43, %c0_44] : memref<2x12x128xbf16, #tpu.memory_space<vmem>>, vector<2x12x128xbf16>
    %60 = vector.extract_strided_slice %59 {offsets = [0, 0, 0], sizes = [2, 8, 128], strides = [1, 1, 1]} : vector<2x12x128xbf16> to vector<2x8x128xbf16>
    %61 = vector.extract_strided_slice %59 {offsets = [0, 1, 0], sizes = [2, 8, 128], strides = [1, 1, 1]} : vector<2x12x128xbf16> to vector<2x8x128xbf16>
    %62 = vector.extract_strided_slice %59 {offsets = [0, 2, 0], sizes = [2, 8, 128], strides = [1, 1, 1]} : vector<2x12x128xbf16> to vector<2x8x128xbf16>
    %63 = vector.extract_strided_slice %59 {offsets = [0, 3, 0], sizes = [2, 8, 128], strides = [1, 1, 1]} : vector<2x12x128xbf16> to vector<2x8x128xbf16>
    %64 = vector.extract_strided_slice %59 {offsets = [0, 4, 0], sizes = [2, 8, 128], strides = [1, 1, 1]} : vector<2x12x128xbf16> to vector<2x8x128xbf16>
    %65 = tpu.concatenate %60, %61, %62, %63, %64 in 2 : vector<2x8x128xbf16>, vector<2x8x128xbf16>, vector<2x8x128xbf16>, vector<2x8x128xbf16>, vector<2x8x128xbf16> -> vector<2x8x640xbf16>
    %66 = vector.shape_cast %65 : vector<2x8x640xbf16> to vector<16x640xbf16>
    %c2_45 = arith.constant 2 : index
    %c0_46 = arith.constant 0 : index
    %c0_47 = arith.constant 0 : index
    %67 = vector.load %arg4[%c2_45, %c0_46, %c0_47] : memref<10x640x128xbf16, #tpu.memory_space<vmem>>, vector<1x640x128xbf16>
    %68 = vector.shape_cast %67 : vector<1x640x128xbf16> to vector<640x128xbf16>
    %cst_48 = arith.constant dense<0.000000e+00> : vector<16x128xf32>
    %69 = tpu.matmul %66, %68, %cst_48 {dimension_numbers = #tpu.dot_dimension_numbers<[1], [0], [0], [1], [0, 0, 1, 1], [], []>} : vector<16x640xbf16>, vector<640x128xbf16>, vector<16x128xf32> -> vector<16x128xf32>
    %70 = vector.shape_cast %69 : vector<16x128xf32> to vector<2x8x128xf32>
    %c2_49 = arith.constant 2 : index
    %c0_50 = arith.constant 0 : index
    %c0_51 = arith.constant 0 : index
    %71 = vector.load %arg5[%c2_49, %c0_50, %c0_51] : memref<10x1x128xf32, #tpu.memory_space<vmem>>, vector<1x1x128xf32>
    %72 = vector.shape_cast %71 : vector<1x1x128xf32> to vector<1x128xf32>
    %73 = vector.shape_cast %72 : vector<1x128xf32> to vector<1x1x128xf32>
    %74 = vector.broadcast %73 : vector<1x1x128xf32> to vector<2x8x128xf32>
    %75 = arith.addf %70, %74 : vector<2x8x128xf32>
    %cst_52 = arith.constant 0.000000e+00 : f32
    %76 = vector.broadcast %cst_52 : f32 to vector<2x8x128xf32>
    %77 = arith.maximumf %75, %76 : vector<2x8x128xf32>
    %78 = arith.truncf %77 : vector<2x8x128xf32> to vector<2x8x128xbf16>
    %c0_53 = arith.constant 0 : index
    %c2_54 = arith.constant 2 : index
    %c0_55 = arith.constant 0 : index
    %79 = vector.load %arg10[%c0_53, %c2_54, %c0_55] : memref<2x12x128xbf16, #tpu.memory_space<vmem>>, vector<2x8x128xbf16>
    tpu.vector_store %arg10[%c0_53, %c2_54, %c0_55], %78 {strides = array<i32>} : memref<2x12x128xbf16, #tpu.memory_space<vmem>>, vector<2x8x128xbf16>,
    %c0_56 = arith.constant 0 : index
    %c0_57 = arith.constant 0 : index
    %c0_58 = arith.constant 0 : index
    %80 = vector.load %arg10[%c0_56, %c0_57, %c0_58] : memref<2x12x128xbf16, #tpu.memory_space<vmem>>, vector<2x12x128xbf16>
    %81 = vector.extract_strided_slice %80 {offsets = [0, 0, 0], sizes = [2, 8, 128], strides = [1, 1, 1]} : vector<2x12x128xbf16> to vector<2x8x128xbf16>
    %82 = vector.extract_strided_slice %80 {offsets = [0, 1, 0], sizes = [2, 8, 128], strides = [1, 1, 1]} : vector<2x12x128xbf16> to vector<2x8x128xbf16>
    %83 = vector.extract_strided_slice %80 {offsets = [0, 2, 0], sizes = [2, 8, 128], strides = [1, 1, 1]} : vector<2x12x128xbf16> to vector<2x8x128xbf16>
    %84 = vector.extract_strided_slice %80 {offsets = [0, 3, 0], sizes = [2, 8, 128], strides = [1, 1, 1]} : vector<2x12x128xbf16> to vector<2x8x128xbf16>
    %85 = vector.extract_strided_slice %80 {offsets = [0, 4, 0], sizes = [2, 8, 128], strides = [1, 1, 1]} : vector<2x12x128xbf16> to vector<2x8x128xbf16>
    %86 = tpu.concatenate %81, %82, %83, %84, %85 in 2 : vector<2x8x128xbf16>, vector<2x8x128xbf16>, vector<2x8x128xbf16>, vector<2x8x128xbf16>, vector<2x8x128xbf16> -> vector<2x8x640xbf16>
    %87 = vector.shape_cast %86 : vector<2x8x640xbf16> to vector<16x640xbf16>
    %c3 = arith.constant 3 : index
    %c0_59 = arith.constant 0 : index
    %c0_60 = arith.constant 0 : index
    %88 = vector.load %arg4[%c3, %c0_59, %c0_60] : memref<10x640x128xbf16, #tpu.memory_space<vmem>>, vector<1x640x128xbf16>
    %89 = vector.shape_cast %88 : vector<1x640x128xbf16> to vector<640x128xbf16>
    %cst_61 = arith.constant dense<0.000000e+00> : vector<16x128xf32>
    %90 = tpu.matmul %87, %89, %cst_61 {dimension_numbers = #tpu.dot_dimension_numbers<[1], [0], [0], [1], [0, 0, 1, 1], [], []>} : vector<16x640xbf16>, vector<640x128xbf16>, vector<16x128xf32> -> vector<16x128xf32>
    %91 = vector.shape_cast %90 : vector<16x128xf32> to vector<2x8x128xf32>
    %c3_62 = arith.constant 3 : index
    %c0_63 = arith.constant 0 : index
    %c0_64 = arith.constant 0 : index
    %92 = vector.load %arg5[%c3_62, %c0_63, %c0_64] : memref<10x1x128xf32, #tpu.memory_space<vmem>>, vector<1x1x128xf32>
    %93 = vector.shape_cast %92 : vector<1x1x128xf32> to vector<1x128xf32>
    %94 = vector.shape_cast %93 : vector<1x128xf32> to vector<1x1x128xf32>
    %95 = vector.broadcast %94 : vector<1x1x128xf32> to vector<2x8x128xf32>
    %96 = arith.addf %91, %95 : vector<2x8x128xf32>
    %97 = arith.addf %54, %96 : vector<2x8x128xf32>
    %cst_65 = arith.constant 0.000000e+00 : f32
    %98 = vector.broadcast %cst_65 : f32 to vector<2x8x128xf32>
    %99 = arith.maximumf %97, %98 : vector<2x8x128xf32>
    %100 = arith.truncf %99 : vector<2x8x128xf32> to vector<2x8x128xbf16>
    %c0_66 = arith.constant 0 : index
    %c2_67 = arith.constant 2 : index
    %c0_68 = arith.constant 0 : index
    %101 = vector.load %arg10[%c0_66, %c2_67, %c0_68] : memref<2x12x128xbf16, #tpu.memory_space<vmem>>, vector<2x8x128xbf16>
    tpu.vector_store %arg10[%c0_66, %c2_67, %c0_68], %100 {strides = array<i32>} : memref<2x12x128xbf16, #tpu.memory_space<vmem>>, vector<2x8x128xbf16>,
    %c0_69 = arith.constant 0 : index
    %c0_70 = arith.constant 0 : index
    %c0_71 = arith.constant 0 : index
    %102 = vector.load %arg10[%c0_69, %c0_70, %c0_71] : memref<2x12x128xbf16, #tpu.memory_space<vmem>>, vector<2x12x128xbf16>
    %103 = vector.extract_strided_slice %102 {offsets = [0, 0, 0], sizes = [2, 8, 128], strides = [1, 1, 1]} : vector<2x12x128xbf16> to vector<2x8x128xbf16>
    %104 = vector.extract_strided_slice %102 {offsets = [0, 1, 0], sizes = [2, 8, 128], strides = [1, 1, 1]} : vector<2x12x128xbf16> to vector<2x8x128xbf16>
    %105 = vector.extract_strided_slice %102 {offsets = [0, 2, 0], sizes = [2, 8, 128], strides = [1, 1, 1]} : vector<2x12x128xbf16> to vector<2x8x128xbf16>
    %106 = vector.extract_strided_slice %102 {offsets = [0, 3, 0], sizes = [2, 8, 128], strides = [1, 1, 1]} : vector<2x12x128xbf16> to vector<2x8x128xbf16>
    %107 = vector.extract_strided_slice %102 {offsets = [0, 4, 0], sizes = [2, 8, 128], strides = [1, 1, 1]} : vector<2x12x128xbf16> to vector<2x8x128xbf16>
    %108 = tpu.concatenate %103, %104, %105, %106, %107 in 2 : vector<2x8x128xbf16>, vector<2x8x128xbf16>, vector<2x8x128xbf16>, vector<2x8x128xbf16>, vector<2x8x128xbf16> -> vector<2x8x640xbf16>
    %109 = vector.shape_cast %108 : vector<2x8x640xbf16> to vector<16x640xbf16>
    %c4 = arith.constant 4 : index
    %c0_72 = arith.constant 0 : index
    %c0_73 = arith.constant 0 : index
    %110 = vector.load %arg4[%c4, %c0_72, %c0_73] : memref<10x640x128xbf16, #tpu.memory_space<vmem>>, vector<1x640x128xbf16>
    %111 = vector.shape_cast %110 : vector<1x640x128xbf16> to vector<640x128xbf16>
    %cst_74 = arith.constant dense<0.000000e+00> : vector<16x128xf32>
    %112 = tpu.matmul %109, %111, %cst_74 {dimension_numbers = #tpu.dot_dimension_numbers<[1], [0], [0], [1], [0, 0, 1, 1], [], []>} : vector<16x640xbf16>, vector<640x128xbf16>, vector<16x128xf32> -> vector<16x128xf32>
    %113 = vector.shape_cast %112 : vector<16x128xf32> to vector<2x8x128xf32>
    %c4_75 = arith.constant 4 : index
    %c0_76 = arith.constant 0 : index
    %c0_77 = arith.constant 0 : index
    %114 = vector.load %arg5[%c4_75, %c0_76, %c0_77] : memref<10x1x128xf32, #tpu.memory_space<vmem>>, vector<1x1x128xf32>
    %115 = vector.shape_cast %114 : vector<1x1x128xf32> to vector<1x128xf32>
    %116 = vector.shape_cast %115 : vector<1x128xf32> to vector<1x1x128xf32>
    %117 = vector.broadcast %116 : vector<1x1x128xf32> to vector<2x8x128xf32>
    %118 = arith.addf %113, %117 : vector<2x8x128xf32>
    %cst_78 = arith.constant 0.000000e+00 : f32
    %119 = vector.broadcast %cst_78 : f32 to vector<2x8x128xf32>
    %120 = arith.maximumf %118, %119 : vector<2x8x128xf32>
    %121 = arith.truncf %120 : vector<2x8x128xf32> to vector<2x8x128xbf16>
    %c0_79 = arith.constant 0 : index
    %c2_80 = arith.constant 2 : index
    %c0_81 = arith.constant 0 : index
    %122 = vector.load %arg10[%c0_79, %c2_80, %c0_81] : memref<2x12x128xbf16, #tpu.memory_space<vmem>>, vector<2x8x128xbf16>
    tpu.vector_store %arg10[%c0_79, %c2_80, %c0_81], %121 {strides = array<i32>} : memref<2x12x128xbf16, #tpu.memory_space<vmem>>, vector<2x8x128xbf16>,
    %c0_82 = arith.constant 0 : index
    %c0_83 = arith.constant 0 : index
    %c0_84 = arith.constant 0 : index
    %123 = vector.load %arg10[%c0_82, %c0_83, %c0_84] : memref<2x12x128xbf16, #tpu.memory_space<vmem>>, vector<2x12x128xbf16>
    %124 = vector.extract_strided_slice %123 {offsets = [0, 0, 0], sizes = [2, 8, 128], strides = [1, 1, 1]} : vector<2x12x128xbf16> to vector<2x8x128xbf16>
    %125 = vector.extract_strided_slice %123 {offsets = [0, 1, 0], sizes = [2, 8, 128], strides = [1, 1, 1]} : vector<2x12x128xbf16> to vector<2x8x128xbf16>
    %126 = vector.extract_strided_slice %123 {offsets = [0, 2, 0], sizes = [2, 8, 128], strides = [1, 1, 1]} : vector<2x12x128xbf16> to vector<2x8x128xbf16>
    %127 = vector.extract_strided_slice %123 {offsets = [0, 3, 0], sizes = [2, 8, 128], strides = [1, 1, 1]} : vector<2x12x128xbf16> to vector<2x8x128xbf16>
    %128 = vector.extract_strided_slice %123 {offsets = [0, 4, 0], sizes = [2, 8, 128], strides = [1, 1, 1]} : vector<2x12x128xbf16> to vector<2x8x128xbf16>
    %129 = tpu.concatenate %124, %125, %126, %127, %128 in 2 : vector<2x8x128xbf16>, vector<2x8x128xbf16>, vector<2x8x128xbf16>, vector<2x8x128xbf16>, vector<2x8x128xbf16> -> vector<2x8x640xbf16>
    %130 = vector.shape_cast %129 : vector<2x8x640xbf16> to vector<16x640xbf16>
    %c5 = arith.constant 5 : index
    %c0_85 = arith.constant 0 : index
    %c0_86 = arith.constant 0 : index
    %131 = vector.load %arg4[%c5, %c0_85, %c0_86] : memref<10x640x128xbf16, #tpu.memory_space<vmem>>, vector<1x640x128xbf16>
    %132 = vector.shape_cast %131 : vector<1x640x128xbf16> to vector<640x128xbf16>
    %cst_87 = arith.constant dense<0.000000e+00> : vector<16x128xf32>
    %133 = tpu.matmul %130, %132, %cst_87 {dimension_numbers = #tpu.dot_dimension_numbers<[1], [0], [0], [1], [0, 0, 1, 1], [], []>} : vector<16x640xbf16>, vector<640x128xbf16>, vector<16x128xf32> -> vector<16x128xf32>
    %134 = vector.shape_cast %133 : vector<16x128xf32> to vector<2x8x128xf32>
    %c5_88 = arith.constant 5 : index
    %c0_89 = arith.constant 0 : index
    %c0_90 = arith.constant 0 : index
    %135 = vector.load %arg5[%c5_88, %c0_89, %c0_90] : memref<10x1x128xf32, #tpu.memory_space<vmem>>, vector<1x1x128xf32>
    %136 = vector.shape_cast %135 : vector<1x1x128xf32> to vector<1x128xf32>
    %137 = vector.shape_cast %136 : vector<1x128xf32> to vector<1x1x128xf32>
    %138 = vector.broadcast %137 : vector<1x1x128xf32> to vector<2x8x128xf32>
    %139 = arith.addf %134, %138 : vector<2x8x128xf32>
    %140 = arith.addf %97, %139 : vector<2x8x128xf32>
    %cst_91 = arith.constant 0.000000e+00 : f32
    %141 = vector.broadcast %cst_91 : f32 to vector<2x8x128xf32>
    %142 = arith.maximumf %140, %141 : vector<2x8x128xf32>
    %143 = arith.truncf %142 : vector<2x8x128xf32> to vector<2x8x128xbf16>
    %c0_92 = arith.constant 0 : index
    %c2_93 = arith.constant 2 : index
    %c0_94 = arith.constant 0 : index
    %144 = vector.load %arg10[%c0_92, %c2_93, %c0_94] : memref<2x12x128xbf16, #tpu.memory_space<vmem>>, vector<2x8x128xbf16>
    tpu.vector_store %arg10[%c0_92, %c2_93, %c0_94], %143 {strides = array<i32>} : memref<2x12x128xbf16, #tpu.memory_space<vmem>>, vector<2x8x128xbf16>,
    %c0_95 = arith.constant 0 : index
    %c0_96 = arith.constant 0 : index
    %c0_97 = arith.constant 0 : index
    %145 = vector.load %arg10[%c0_95, %c0_96, %c0_97] : memref<2x12x128xbf16, #tpu.memory_space<vmem>>, vector<2x12x128xbf16>
    %146 = vector.extract_strided_slice %145 {offsets = [0, 0, 0], sizes = [2, 8, 128], strides = [1, 1, 1]} : vector<2x12x128xbf16> to vector<2x8x128xbf16>
    %147 = vector.extract_strided_slice %145 {offsets = [0, 1, 0], sizes = [2, 8, 128], strides = [1, 1, 1]} : vector<2x12x128xbf16> to vector<2x8x128xbf16>
    %148 = vector.extract_strided_slice %145 {offsets = [0, 2, 0], sizes = [2, 8, 128], strides = [1, 1, 1]} : vector<2x12x128xbf16> to vector<2x8x128xbf16>
    %149 = vector.extract_strided_slice %145 {offsets = [0, 3, 0], sizes = [2, 8, 128], strides = [1, 1, 1]} : vector<2x12x128xbf16> to vector<2x8x128xbf16>
    %150 = vector.extract_strided_slice %145 {offsets = [0, 4, 0], sizes = [2, 8, 128], strides = [1, 1, 1]} : vector<2x12x128xbf16> to vector<2x8x128xbf16>
    %151 = tpu.concatenate %146, %147, %148, %149, %150 in 2 : vector<2x8x128xbf16>, vector<2x8x128xbf16>, vector<2x8x128xbf16>, vector<2x8x128xbf16>, vector<2x8x128xbf16> -> vector<2x8x640xbf16>
    %152 = vector.shape_cast %151 : vector<2x8x640xbf16> to vector<16x640xbf16>
    %c6 = arith.constant 6 : index
    %c0_98 = arith.constant 0 : index
    %c0_99 = arith.constant 0 : index
    %153 = vector.load %arg4[%c6, %c0_98, %c0_99] : memref<10x640x128xbf16, #tpu.memory_space<vmem>>, vector<1x640x128xbf16>
    %154 = vector.shape_cast %153 : vector<1x640x128xbf16> to vector<640x128xbf16>
    %cst_100 = arith.constant dense<0.000000e+00> : vector<16x128xf32>
    %155 = tpu.matmul %152, %154, %cst_100 {dimension_numbers = #tpu.dot_dimension_numbers<[1], [0], [0], [1], [0, 0, 1, 1], [], []>} : vector<16x640xbf16>, vector<640x128xbf16>, vector<16x128xf32> -> vector<16x128xf32>
    %156 = vector.shape_cast %155 : vector<16x128xf32> to vector<2x8x128xf32>
    %c6_101 = arith.constant 6 : index
    %c0_102 = arith.constant 0 : index
    %c0_103 = arith.constant 0 : index
    %157 = vector.load %arg5[%c6_101, %c0_102, %c0_103] : memref<10x1x128xf32, #tpu.memory_space<vmem>>, vector<1x1x128xf32>
    %158 = vector.shape_cast %157 : vector<1x1x128xf32> to vector<1x128xf32>
    %159 = vector.shape_cast %158 : vector<1x128xf32> to vector<1x1x128xf32>
    %160 = vector.broadcast %159 : vector<1x1x128xf32> to vector<2x8x128xf32>
    %161 = arith.addf %156, %160 : vector<2x8x128xf32>
    %cst_104 = arith.constant 0.000000e+00 : f32
    %162 = vector.broadcast %cst_104 : f32 to vector<2x8x128xf32>
    %163 = arith.maximumf %161, %162 : vector<2x8x128xf32>
    %164 = arith.truncf %163 : vector<2x8x128xf32> to vector<2x8x128xbf16>
    %c0_105 = arith.constant 0 : index
    %c2_106 = arith.constant 2 : index
    %c0_107 = arith.constant 0 : index
    %165 = vector.load %arg10[%c0_105, %c2_106, %c0_107] : memref<2x12x128xbf16, #tpu.memory_space<vmem>>, vector<2x8x128xbf16>
    tpu.vector_store %arg10[%c0_105, %c2_106, %c0_107], %164 {strides = array<i32>} : memref<2x12x128xbf16, #tpu.memory_space<vmem>>, vector<2x8x128xbf16>,
    %c0_108 = arith.constant 0 : index
    %c0_109 = arith.constant 0 : index
    %c0_110 = arith.constant 0 : index
    %166 = vector.load %arg10[%c0_108, %c0_109, %c0_110] : memref<2x12x128xbf16, #tpu.memory_space<vmem>>, vector<2x12x128xbf16>
    %167 = vector.extract_strided_slice %166 {offsets = [0, 0, 0], sizes = [2, 8, 128], strides = [1, 1, 1]} : vector<2x12x128xbf16> to vector<2x8x128xbf16>
    %168 = vector.extract_strided_slice %166 {offsets = [0, 1, 0], sizes = [2, 8, 128], strides = [1, 1, 1]} : vector<2x12x128xbf16> to vector<2x8x128xbf16>
    %169 = vector.extract_strided_slice %166 {offsets = [0, 2, 0], sizes = [2, 8, 128], strides = [1, 1, 1]} : vector<2x12x128xbf16> to vector<2x8x128xbf16>
    %170 = vector.extract_strided_slice %166 {offsets = [0, 3, 0], sizes = [2, 8, 128], strides = [1, 1, 1]} : vector<2x12x128xbf16> to vector<2x8x128xbf16>
    %171 = vector.extract_strided_slice %166 {offsets = [0, 4, 0], sizes = [2, 8, 128], strides = [1, 1, 1]} : vector<2x12x128xbf16> to vector<2x8x128xbf16>
    %172 = tpu.concatenate %167, %168, %169, %170, %171 in 2 : vector<2x8x128xbf16>, vector<2x8x128xbf16>, vector<2x8x128xbf16>, vector<2x8x128xbf16>, vector<2x8x128xbf16> -> vector<2x8x640xbf16>
    %173 = vector.shape_cast %172 : vector<2x8x640xbf16> to vector<16x640xbf16>
    %c7 = arith.constant 7 : index
    %c0_111 = arith.constant 0 : index
    %c0_112 = arith.constant 0 : index
    %174 = vector.load %arg4[%c7, %c0_111, %c0_112] : memref<10x640x128xbf16, #tpu.memory_space<vmem>>, vector<1x640x128xbf16>
    %175 = vector.shape_cast %174 : vector<1x640x128xbf16> to vector<640x128xbf16>
    %cst_113 = arith.constant dense<0.000000e+00> : vector<16x128xf32>
    %176 = tpu.matmul %173, %175, %cst_113 {dimension_numbers = #tpu.dot_dimension_numbers<[1], [0], [0], [1], [0, 0, 1, 1], [], []>} : vector<16x640xbf16>, vector<640x128xbf16>, vector<16x128xf32> -> vector<16x128xf32>
    %177 = vector.shape_cast %176 : vector<16x128xf32> to vector<2x8x128xf32>
    %c7_114 = arith.constant 7 : index
    %c0_115 = arith.constant 0 : index
    %c0_116 = arith.constant 0 : index
    %178 = vector.load %arg5[%c7_114, %c0_115, %c0_116] : memref<10x1x128xf32, #tpu.memory_space<vmem>>, vector<1x1x128xf32>
    %179 = vector.shape_cast %178 : vector<1x1x128xf32> to vector<1x128xf32>
    %180 = vector.shape_cast %179 : vector<1x128xf32> to vector<1x1x128xf32>
    %181 = vector.broadcast %180 : vector<1x1x128xf32> to vector<2x8x128xf32>
    %182 = arith.addf %177, %181 : vector<2x8x128xf32>
    %183 = arith.addf %140, %182 : vector<2x8x128xf32>
    %cst_117 = arith.constant 0.000000e+00 : f32
    %184 = vector.broadcast %cst_117 : f32 to vector<2x8x128xf32>
    %185 = arith.maximumf %183, %184 : vector<2x8x128xf32>
    %186 = arith.truncf %185 : vector<2x8x128xf32> to vector<2x8x128xbf16>
    %c0_118 = arith.constant 0 : index
    %c2_119 = arith.constant 2 : index
    %c0_120 = arith.constant 0 : index
    %187 = vector.load %arg10[%c0_118, %c2_119, %c0_120] : memref<2x12x128xbf16, #tpu.memory_space<vmem>>, vector<2x8x128xbf16>
    tpu.vector_store %arg10[%c0_118, %c2_119, %c0_120], %186 {strides = array<i32>} : memref<2x12x128xbf16, #tpu.memory_space<vmem>>, vector<2x8x128xbf16>,
    %c0_121 = arith.constant 0 : index
    %c0_122 = arith.constant 0 : index
    %c0_123 = arith.constant 0 : index
    %188 = vector.load %arg10[%c0_121, %c0_122, %c0_123] : memref<2x12x128xbf16, #tpu.memory_space<vmem>>, vector<2x12x128xbf16>
    %189 = vector.extract_strided_slice %188 {offsets = [0, 0, 0], sizes = [2, 8, 128], strides = [1, 1, 1]} : vector<2x12x128xbf16> to vector<2x8x128xbf16>
    %190 = vector.extract_strided_slice %188 {offsets = [0, 1, 0], sizes = [2, 8, 128], strides = [1, 1, 1]} : vector<2x12x128xbf16> to vector<2x8x128xbf16>
    %191 = vector.extract_strided_slice %188 {offsets = [0, 2, 0], sizes = [2, 8, 128], strides = [1, 1, 1]} : vector<2x12x128xbf16> to vector<2x8x128xbf16>
    %192 = vector.extract_strided_slice %188 {offsets = [0, 3, 0], sizes = [2, 8, 128], strides = [1, 1, 1]} : vector<2x12x128xbf16> to vector<2x8x128xbf16>
    %193 = vector.extract_strided_slice %188 {offsets = [0, 4, 0], sizes = [2, 8, 128], strides = [1, 1, 1]} : vector<2x12x128xbf16> to vector<2x8x128xbf16>
    %194 = tpu.concatenate %189, %190, %191, %192, %193 in 2 : vector<2x8x128xbf16>, vector<2x8x128xbf16>, vector<2x8x128xbf16>, vector<2x8x128xbf16>, vector<2x8x128xbf16> -> vector<2x8x640xbf16>
    %195 = vector.shape_cast %194 : vector<2x8x640xbf16> to vector<16x640xbf16>
    %c8 = arith.constant 8 : index
    %c0_124 = arith.constant 0 : index
    %c0_125 = arith.constant 0 : index
    %196 = vector.load %arg4[%c8, %c0_124, %c0_125] : memref<10x640x128xbf16, #tpu.memory_space<vmem>>, vector<1x640x128xbf16>
    %197 = vector.shape_cast %196 : vector<1x640x128xbf16> to vector<640x128xbf16>
    %cst_126 = arith.constant dense<0.000000e+00> : vector<16x128xf32>
    %198 = tpu.matmul %195, %197, %cst_126 {dimension_numbers = #tpu.dot_dimension_numbers<[1], [0], [0], [1], [0, 0, 1, 1], [], []>} : vector<16x640xbf16>, vector<640x128xbf16>, vector<16x128xf32> -> vector<16x128xf32>
    %199 = vector.shape_cast %198 : vector<16x128xf32> to vector<2x8x128xf32>
    %c8_127 = arith.constant 8 : index
    %c0_128 = arith.constant 0 : index
    %c0_129 = arith.constant 0 : index
    %200 = vector.load %arg5[%c8_127, %c0_128, %c0_129] : memref<10x1x128xf32, #tpu.memory_space<vmem>>, vector<1x1x128xf32>
    %201 = vector.shape_cast %200 : vector<1x1x128xf32> to vector<1x128xf32>
    %202 = vector.shape_cast %201 : vector<1x128xf32> to vector<1x1x128xf32>
    %203 = vector.broadcast %202 : vector<1x1x128xf32> to vector<2x8x128xf32>
    %204 = arith.addf %199, %203 : vector<2x8x128xf32>
    %cst_130 = arith.constant 0.000000e+00 : f32
    %205 = vector.broadcast %cst_130 : f32 to vector<2x8x128xf32>
    %206 = arith.maximumf %204, %205 : vector<2x8x128xf32>
    %207 = arith.truncf %206 : vector<2x8x128xf32> to vector<2x8x128xbf16>
    %c0_131 = arith.constant 0 : index
    %c2_132 = arith.constant 2 : index
    %c0_133 = arith.constant 0 : index
    %208 = vector.load %arg10[%c0_131, %c2_132, %c0_133] : memref<2x12x128xbf16, #tpu.memory_space<vmem>>, vector<2x8x128xbf16>
    tpu.vector_store %arg10[%c0_131, %c2_132, %c0_133], %207 {strides = array<i32>} : memref<2x12x128xbf16, #tpu.memory_space<vmem>>, vector<2x8x128xbf16>,
    %c0_134 = arith.constant 0 : index
    %c0_135 = arith.constant 0 : index
    %c0_136 = arith.constant 0 : index
    %209 = vector.load %arg10[%c0_134, %c0_135, %c0_136] : memref<2x12x128xbf16, #tpu.memory_space<vmem>>, vector<2x12x128xbf16>
    %210 = vector.extract_strided_slice %209 {offsets = [0, 0, 0], sizes = [2, 8, 128], strides = [1, 1, 1]} : vector<2x12x128xbf16> to vector<2x8x128xbf16>
    %211 = vector.extract_strided_slice %209 {offsets = [0, 1, 0], sizes = [2, 8, 128], strides = [1, 1, 1]} : vector<2x12x128xbf16> to vector<2x8x128xbf16>
    %212 = vector.extract_strided_slice %209 {offsets = [0, 2, 0], sizes = [2, 8, 128], strides = [1, 1, 1]} : vector<2x12x128xbf16> to vector<2x8x128xbf16>
    %213 = vector.extract_strided_slice %209 {offsets = [0, 3, 0], sizes = [2, 8, 128], strides = [1, 1, 1]} : vector<2x12x128xbf16> to vector<2x8x128xbf16>
    %214 = vector.extract_strided_slice %209 {offsets = [0, 4, 0], sizes = [2, 8, 128], strides = [1, 1, 1]} : vector<2x12x128xbf16> to vector<2x8x128xbf16>
    %215 = tpu.concatenate %210, %211, %212, %213, %214 in 2 : vector<2x8x128xbf16>, vector<2x8x128xbf16>, vector<2x8x128xbf16>, vector<2x8x128xbf16>, vector<2x8x128xbf16> -> vector<2x8x640xbf16>
    %216 = vector.shape_cast %215 : vector<2x8x640xbf16> to vector<16x640xbf16>
    %c9 = arith.constant 9 : index
    %c0_137 = arith.constant 0 : index
    %c0_138 = arith.constant 0 : index
    %217 = vector.load %arg4[%c9, %c0_137, %c0_138] : memref<10x640x128xbf16, #tpu.memory_space<vmem>>, vector<1x640x128xbf16>
    %218 = vector.shape_cast %217 : vector<1x640x128xbf16> to vector<640x128xbf16>
    %cst_139 = arith.constant dense<0.000000e+00> : vector<16x128xf32>
    %219 = tpu.matmul %216, %218, %cst_139 {dimension_numbers = #tpu.dot_dimension_numbers<[1], [0], [0], [1], [0, 0, 1, 1], [], []>} : vector<16x640xbf16>, vector<640x128xbf16>, vector<16x128xf32> -> vector<16x128xf32>
    %220 = vector.shape_cast %219 : vector<16x128xf32> to vector<2x8x128xf32>
    %c9_140 = arith.constant 9 : index
    %c0_141 = arith.constant 0 : index
    %c0_142 = arith.constant 0 : index
    %221 = vector.load %arg5[%c9_140, %c0_141, %c0_142] : memref<10x1x128xf32, #tpu.memory_space<vmem>>, vector<1x1x128xf32>
    %222 = vector.shape_cast %221 : vector<1x1x128xf32> to vector<1x128xf32>
    %223 = vector.shape_cast %222 : vector<1x128xf32> to vector<1x1x128xf32>
    %224 = vector.broadcast %223 : vector<1x1x128xf32> to vector<2x8x128xf32>
    %225 = arith.addf %220, %224 : vector<2x8x128xf32>
    %226 = arith.addf %183, %225 : vector<2x8x128xf32>
    %227 = vector.shape_cast %226 : vector<2x8x128xf32> to vector<16x128xf32>
    %228 = arith.truncf %227 : vector<16x128xf32> to vector<16x128xbf16>
    %c0_143 = arith.constant 0 : index
    %c0_144 = arith.constant 0 : index
    %229 = vector.load %arg6[%c0_143, %c0_144] : memref<128x128xbf16, #tpu.memory_space<vmem>>, vector<128x128xbf16>
    %cst_145 = arith.constant dense<0.000000e+00> : vector<16x128xf32>
    %230 = tpu.matmul %228, %229, %cst_145 {dimension_numbers = #tpu.dot_dimension_numbers<[1], [0], [0], [1], [0, 0, 1, 1], [], []>} : vector<16x128xbf16>, vector<128x128xbf16>, vector<16x128xf32> -> vector<16x128xf32>
    %c0_146 = arith.constant 0 : index
    %c0_147 = arith.constant 0 : index
    %231 = vector.load %arg7[%c0_146, %c0_147] : memref<1x128xf32, #tpu.memory_space<vmem>>, vector<1x128xf32>
    %232 = vector.broadcast %231 : vector<1x128xf32> to vector<16x128xf32>
    %233 = arith.addf %230, %232 : vector<16x128xf32>
    %c0_148 = arith.constant 0 : index
    %c0_149 = arith.constant 0 : index
    %c0_150 = arith.constant 0 : index
    %234 = vector.load %arg8[%c0_148, %c0_149, %c0_150] : memref<2x8x128xbf16, #tpu.memory_space<vmem>>, vector<2x8x128xbf16>
    %235 = vector.shape_cast %234 : vector<2x8x128xbf16> to vector<16x128xbf16>
    %236 = arith.extf %235 : vector<16x128xbf16> to vector<16x128xf32>
    %237 = arith.addf %233, %236 : vector<16x128xf32>
    %cst_151 = arith.constant 2.000000e+00 : f32
    %238 = vector.broadcast %cst_151 : f32 to vector<16x128xf32>
    %239 = arith.mulf %237, %238 : vector<16x128xf32>
    %cst_152 = arith.constant dense<0xFF800000> : vector<16xf32>
    %240 = vector.multi_reduction <maximumf>, %239, %cst_152 [1] : vector<16x128xf32> to vector<16xf32>
    %241 = vector.shape_cast %240 : vector<16xf32> to vector<16x1xf32>
    %242 = vector.broadcast %241 : vector<16x1xf32> to vector<16x128xf32>
    %243 = arith.subf %239, %242 : vector<16x128xf32>
    %244 = math.exp %243 : vector<16x128xf32>
    %cst_153 = arith.constant dense<0.000000e+00> : vector<16xf32>
    %245 = vector.multi_reduction <add>, %244, %cst_153 [1] : vector<16x128xf32> to vector<16xf32>
    %246 = vector.shape_cast %245 : vector<16xf32> to vector<16x1xf32>
    %247 = vector.broadcast %246 : vector<16x1xf32> to vector<16x128xf32>
    %248 = arith.divf %244, %247 : vector<16x128xf32>
    %249 = vector.shape_cast %248 : vector<16x128xf32> to vector<2x8x128xf32>
    %250 = arith.truncf %249 : vector<2x8x128xf32> to vector<2x8x128xbf16>
    %c0_154 = arith.constant 0 : index
    %c0_155 = arith.constant 0 : index
    %c0_156 = arith.constant 0 : index
    %251 = vector.load %arg9[%c0_154, %c0_155, %c0_156] : memref<2x8x128xbf16, #tpu.memory_space<vmem>>, vector<2x8x128xbf16>
    tpu.vector_store %arg9[%c0_154, %c0_155, %c0_156], %250 {strides = array<i32>} : memref<2x8x128xbf16, #tpu.memory_space<vmem>>, vector<2x8x128xbf16>,
    return
  }
  func.func @transform_0(%arg0: i32) -> (i32, i32) {
    %c0_i32 = arith.constant 0 : i32
    %c0_i32_0 = arith.constant 0 : i32
    return %arg0, %c0_i32 : i32, i32
  }
  func.func @transform_1(%arg0: i32) -> (i32, i32) {
    %c0_i32 = arith.constant 0 : i32
    %c0_i32_0 = arith.constant 0 : i32
    %c0_i32_1 = arith.constant 0 : i32
    return %c0_i32, %c0_i32_0 : i32, i32
  }
  func.func @transform_2(%arg0: i32) -> (i32, i32) {
    %c0_i32 = arith.constant 0 : i32
    %c0_i32_0 = arith.constant 0 : i32
    %c0_i32_1 = arith.constant 0 : i32
    return %c0_i32, %c0_i32_0 : i32, i32
  }
  func.func @transform_3(%arg0: i32) -> (i32, i32, i32) {
    %c0_i32 = arith.constant 0 : i32
    %c0_i32_0 = arith.constant 0 : i32
    %c0_i32_1 = arith.constant 0 : i32
    %c0_i32_2 = arith.constant 0 : i32
    return %c0_i32, %c0_i32_0, %c0_i32_1 : i32, i32, i32
  }
  func.func @transform_4(%arg0: i32) -> (i32, i32, i32) {
    %c0_i32 = arith.constant 0 : i32
    %c0_i32_0 = arith.constant 0 : i32
    %c0_i32_1 = arith.constant 0 : i32
    %c0_i32_2 = arith.constant 0 : i32
    return %c0_i32, %c0_i32_0, %c0_i32_1 : i32, i32, i32
  }
  func.func @transform_5(%arg0: i32) -> (i32, i32) {
    %c0_i32 = arith.constant 0 : i32
    %c0_i32_0 = arith.constant 0 : i32
    %c0_i32_1 = arith.constant 0 : i32
    return %c0_i32, %c0_i32_0 : i32, i32
  }
  func.func @transform_6(%arg0: i32) -> (i32, i32) {
    %c0_i32 = arith.constant 0 : i32
    %c0_i32_0 = arith.constant 0 : i32
    %c0_i32_1 = arith.constant 0 : i32
    return %c0_i32, %c0_i32_0 : i32, i32
  }
  func.func @transform_7(%arg0: i32) -> (i32, i32, i32) {
    %c0_i32 = arith.constant 0 : i32
    %c0_i32_0 = arith.constant 0 : i32
    %c0_i32_1 = arith.constant 0 : i32
    return %arg0, %c0_i32, %c0_i32_0 : i32, i32, i32
  }
  func.func @transform_8(%arg0: i32) -> (i32, i32, i32) {
    %c0_i32 = arith.constant 0 : i32
    %c0_i32_0 = arith.constant 0 : i32
    %c0_i32_1 = arith.constant 0 : i32
    return %arg0, %c0_i32, %c0_i32_0 : i32, i32, i32
  }
}

</mosaic_0001>

<llo_original>
// kernel: tpu_custom_call.1
$region0: #{tpu_custom_call.1}
  #allocation0 [shape = 'u32[]', space=smem, size = 0x4, offset = 0x4, fixed_abs, tag = 'smem constant byte address 0x4 - core index']
  #allocation1 [shape = 'u32[144,128]{1,0:T(1,128)}', space=vmem, size = 0x12000, scoped, tag = 'internal scratch']
  #allocation2 [shape = 'bf16[2,12,128]{2,1,0:T(8,128)(2,1)}', space=vmem, size = 0x2000, scoped, tag = 'scratch operand']
  %s0 = inlined_call_operand.hbm [shape: f32[2,128], index: 0, kind: input, shape index: {}]
  %s1 = inlined_call_operand.hbm [shape: bf16[128,1024], index: 1, kind: input, shape index: {}]
  %s2 = inlined_call_operand.hbm [shape: f32[1,1024], index: 2, kind: input, shape index: {}]
  %s3 = inlined_call_operand.hbm [shape: bf16[10,640,128], index: 3, kind: input, shape index: {}]
  %s4 = inlined_call_operand.hbm [shape: f32[10,1,128], index: 4, kind: input, shape index: {}]
  %s5 = inlined_call_operand.hbm [shape: bf16[128,128], index: 5, kind: input, shape index: {}]
  %s6 = inlined_call_operand.hbm [shape: f32[1,128], index: 6, kind: input, shape index: {}]
  %s7 = inlined_call_operand.hbm [shape: bf16[2,8,128], index: 7, kind: input, shape index: {}]
  %s8 = inlined_call_operand.hbm [shape: bf16[2,8,128], index: 8, kind: output, shape index: {}]
  %s9 = sld [smem:[#allocation0]]
  $region74: #{tpu_custom_call.1} parent=0
    _
  %s11 = ssub.s32 1, %s9
  %s12 = scalar_select 0, %s11, %s9
  $region1: #{tpu_custom_call.1} parent=0
    #allocation3 [shape = 'u8[1024]{0}', space=vmem, size = 0x400, scoped, tag = 'input window, operand 0, single buffered']
    #allocation4 [shape = 's32[1]{0}', space=sflag, size = 0x4, scoped, tag = 'scoped memory for tpu_custom_call.1']
    #allocation5 [shape = 's32[1]{0}', space=sflag, size = 0x4, scoped, tag = 'scoped memory for tpu_custom_call.1']
    #allocation6 [shape = 'u8[262144]{0}', space=vmem, size = 0x40000, scoped, tag = 'input window, operand 1, single buffered']
    #allocation7 [shape = 's32[1]{0}', space=sflag, size = 0x4, scoped, tag = 'scoped memory for tpu_custom_call.1']
    #allocation8 [shape = 'u8[4096]{0}', space=vmem, size = 0x1000, scoped, tag = 'input window, operand 2, single buffered']
    #allocation9 [shape = 'u8[1638400]{0}', space=vmem, size = 0x190000, scoped, tag = 'input window, operand 3, single buffered']
    #allocation10 [shape = 's32[1]{0}', space=sflag, size = 0x4, scoped, tag = 'scoped memory for tpu_custom_call.1']
    #allocation11 [shape = 'u8[5120]{0}', space=vmem, size = 0x1400, scoped, tag = 'input window, operand 4, single buffered']
    #allocation12 [shape = 'u8[32768]{0}', space=vmem, size = 0x8000, scoped, tag = 'input window, operand 5, single buffered']
    #allocation13 [shape = 's32[1]{0}', space=sflag, size = 0x4, scoped, tag = 'scoped memory for tpu_custom_call.1']
    #allocation14 [shape = 'u8[512]{0}', space=vmem, size = 0x400, scoped, tag = 'input window, operand 6, single buffered']
    #allocation15 [shape = 'u8[4096]{0}', space=vmem, size = 0x1000, scoped, tag = 'input window, operand 7, single buffered']
    #allocation16 [shape = 's32[1]{0}', space=sflag, size = 0x4, scoped, tag = 'scoped memory for tpu_custom_call.1']
    #allocation17 [shape = 'u8[4096]{0}', space=vmem, size = 0x1000, scoped, tag = 'output window, operand 0, single buffered']
    %13 = vsyncpa [#allocation4], 0
    %14 = vsyncpa [#allocation7], 0
    %15 = vsyncpa [#allocation10], 0
    %16 = vsyncpa [#allocation13], 0
    %17 = vsyncpa [#allocation16], 0
    %18 = vsyncpa [#allocation5], 0
    // Predicated region
    $region2: #{tpu_custom_call.1} parent=1 // pred_check
      _
    $region3: #{tpu_custom_call.1} parent=1 // pred_check_branch
      %20 = sbr.rel (0) target = $region5
    $region4: #{tpu_custom_call.1} parent=1 // pred_region
      %s22 = ssub.s32 32, 32
      %23 = vsyncadd [#allocation4], %s22
      %s25 = sshll.u32 [#allocation3], 4
      %s26 = int_to_ptr.vmem [resolvable:$true] %s25
      %28 = dma.hbm_to_vmem [thread:$0]  %s0, 32, %s26, [#allocation4]
    $region5: #{tpu_custom_call.1} parent=1 // pred_fallthru
      _
    // Predicated region
    $region6: #{tpu_custom_call.1} parent=1 // pred_check
      _
    $region7: #{tpu_custom_call.1} parent=1 // pred_check_branch
      %30 = sbr.rel (0) target = $region9
    $region8: #{tpu_custom_call.1} parent=1 // pred_region
      %s32 = ssub.s32 8192, 8192
      %33 = vsyncadd [#allocation7], %s32
      %s34 = sshll.u32 [#allocation6], 4
      %s35 = int_to_ptr.vmem [resolvable:$true] %s34
      %40 = dma.hbm_to_vmem [thread:$0]  %s1, 8192, %s35, [#allocation7], 512, 512, 32
    $region9: #{tpu_custom_call.1} parent=1 // pred_fallthru
      _
    // Predicated region
    $region10: #{tpu_custom_call.1} parent=1 // pred_check
      _
    $region11: #{tpu_custom_call.1} parent=1 // pred_check_branch
      %42 = sbr.rel (0) target = $region13
    $region12: #{tpu_custom_call.1} parent=1 // pred_region
      %s44 = ssub.s32 128, 128
      %45 = vsyncadd [#allocation7], %s44
      %s47 = sshll.u32 [#allocation8], 4
      %s48 = int_to_ptr.vmem [resolvable:$true] %s47
      %50 = dma.hbm_to_vmem [thread:$0]  %s2, 128, %s48, [#allocation7]
    $region13: #{tpu_custom_call.1} parent=1 // pred_fallthru
      _
    // Predicated region
    $region14: #{tpu_custom_call.1} parent=1 // pred_check
      _
    $region15: #{tpu_custom_call.1} parent=1 // pred_check_branch
      %52 = sbr.rel (0) target = $region17
    $region16: #{tpu_custom_call.1} parent=1 // pred_region
      %s54 = ssub.s32 51200, 51200
      %55 = vsyncadd [#allocation10], %s54
      %s56 = sshll.u32 [#allocation9], 4
      %s57 = int_to_ptr.vmem [resolvable:$true] %s56
      %62 = dma.hbm_to_vmem [thread:$0]  %s3, 51200, %s57, [#allocation10], 64, 64, 4
    $region17: #{tpu_custom_call.1} parent=1 // pred_fallthru
      _
    // Predicated region
    $region18: #{tpu_custom_call.1} parent=1 // pred_check
      _
    $region19: #{tpu_custom_call.1} parent=1 // pred_check_branch
      %64 = sbr.rel (0) target = $region21
    $region20: #{tpu_custom_call.1} parent=1 // pred_region
      %s66 = ssub.s32 160, 160
      %67 = vsyncadd [#allocation10], %s66
      %s68 = sshll.u32 [#allocation11], 4
      %s69 = int_to_ptr.vmem [resolvable:$true] %s68
      %74 = dma.hbm_to_vmem [thread:$0]  %s4, 160, %s69, [#allocation10], 16, 16, 1
    $region21: #{tpu_custom_call.1} parent=1 // pred_fallthru
      _
    // Predicated region
    $region22: #{tpu_custom_call.1} parent=1 // pred_check
      _
    $region23: #{tpu_custom_call.1} parent=1 // pred_check_branch
      %76 = sbr.rel (0) target = $region25
    $region24: #{tpu_custom_call.1} parent=1 // pred_region
      %s78 = ssub.s32 1024, 1024
      %79 = vsyncadd [#allocation13], %s78
      %s80 = sshll.u32 [#allocation12], 4
      %s81 = int_to_ptr.vmem [resolvable:$true] %s80
      %86 = dma.hbm_to_vmem [thread:$0]  %s5, 1024, %s81, [#allocation13], 64, 64, 4
    $region25: #{tpu_custom_call.1} parent=1 // pred_fallthru
      _
    // Predicated region
    $region26: #{tpu_custom_call.1} parent=1 // pred_check
      _
    $region27: #{tpu_custom_call.1} parent=1 // pred_check_branch
      %88 = sbr.rel (0) target = $region29
    $region28: #{tpu_custom_call.1} parent=1 // pred_region
      %s90 = ssub.s32 16, 16
      %91 = vsyncadd [#allocation13], %s90
      %s93 = sshll.u32 [#allocation14], 4
      %s94 = int_to_ptr.vmem [resolvable:$true] %s93
      %96 = dma.hbm_to_vmem [thread:$0]  %s6, 16, %s94, [#allocation13]
    $region29: #{tpu_custom_call.1} parent=1 // pred_fallthru
      _
    // Predicated region
    $region30: #{tpu_custom_call.1} parent=1 // pred_check
      _
    $region31: #{tpu_custom_call.1} parent=1 // pred_check_branch
      %98 = sbr.rel (0) target = $region33
    $region32: #{tpu_custom_call.1} parent=1 // pred_region
      %s100 = ssub.s32 128, 128
      %101 = vsyncadd [#allocation16], %s100
      %s102 = sshll.u32 [#allocation15], 4
      %s103 = int_to_ptr.vmem [resolvable:$true] %s102
      %108 = dma.hbm_to_vmem [thread:$0]  %s7, 128, %s103, [#allocation16], 64, 64, 4
    $region33: #{tpu_custom_call.1} parent=1 // pred_fallthru
      _
    // Predicated region
    $region34: #{tpu_custom_call.1} parent=1 // pred_check
      _
    $region35: #{tpu_custom_call.1} parent=1 // pred_check_branch
      %110 = sbr.rel (0) target = $region37
    $region36: #{tpu_custom_call.1} parent=1 // pred_region
      %111 = dma.done [#allocation4], 32
    $region37: #{tpu_custom_call.1} parent=1 // pred_fallthru
      _
    // Predicated region
    $region38: #{tpu_custom_call.1} parent=1 // pred_check
      _
    $region39: #{tpu_custom_call.1} parent=1 // pred_check_branch
      %113 = sbr.rel (0) target = $region41
    $region40: #{tpu_custom_call.1} parent=1 // pred_region
      %114 = dma.done [#allocation7], 8192
    $region41: #{tpu_custom_call.1} parent=1 // pred_fallthru
      _
    // Predicated region
    $region42: #{tpu_custom_call.1} parent=1 // pred_check
      _
    $region43: #{tpu_custom_call.1} parent=1 // pred_check_branch
      %116 = sbr.rel (0) target = $region45
    $region44: #{tpu_custom_call.1} parent=1 // pred_region
      %117 = dma.done [#allocation7], 128
    $region45: #{tpu_custom_call.1} parent=1 // pred_fallthru
      _
    // Predicated region
    $region46: #{tpu_custom_call.1} parent=1 // pred_check
      _
    $region47: #{tpu_custom_call.1} parent=1 // pred_check_branch
      %119 = sbr.rel (0) target = $region49
    $region48: #{tpu_custom_call.1} parent=1 // pred_region
      %120 = dma.done [#allocation10], 51200
    $region49: #{tpu_custom_call.1} parent=1 // pred_fallthru
      _
    // Predicated region
    $region50: #{tpu_custom_call.1} parent=1 // pred_check
      _
    $region51: #{tpu_custom_call.1} parent=1 // pred_check_branch
      %122 = sbr.rel (0) target = $region53
    $region52: #{tpu_custom_call.1} parent=1 // pred_region
      %123 = dma.done [#allocation10], 160
    $region53: #{tpu_custom_call.1} parent=1 // pred_fallthru
      _
    // Predicated region
    $region54: #{tpu_custom_call.1} parent=1 // pred_check
      _
    $region55: #{tpu_custom_call.1} parent=1 // pred_check_branch
      %125 = sbr.rel (0) target = $region57
    $region56: #{tpu_custom_call.1} parent=1 // pred_region
      %126 = dma.done [#allocation13], 1024
    $region57: #{tpu_custom_call.1} parent=1 // pred_fallthru
      _
    // Predicated region
    $region58: #{tpu_custom_call.1} parent=1 // pred_check
      _
    $region59: #{tpu_custom_call.1} parent=1 // pred_check_branch
      %128 = sbr.rel (0) target = $region61
    $region60: #{tpu_custom_call.1} parent=1 // pred_region
      %129 = dma.done [#allocation13], 16
    $region61: #{tpu_custom_call.1} parent=1 // pred_fallthru
      _
    // Predicated region
    $region62: #{tpu_custom_call.1} parent=1 // pred_check
      _
    $region63: #{tpu_custom_call.1} parent=1 // pred_check_branch
      %131 = sbr.rel (0) target = $region65
    $region64: #{tpu_custom_call.1} parent=1 // pred_region
      %132 = dma.done [#allocation16], 128
    $region65: #{tpu_custom_call.1} parent=1 // pred_fallthru
      _
    %v134 = vld [vmem:[#allocation3] sm:$0x3]
    %v135 = vpack.c.bf16 %v134, %v134
    %v136 = vld [vmem:[#allocation6] sm:$0xff]
    %v137 = vld [vmem:[#allocation6 + $0x8] sm:$0xff]
    %v138 = vld [vmem:[#allocation6 + $0x10] sm:$0xff]
    %v139 = vld [vmem:[#allocation6 + $0x18] sm:$0xff]
    %v140 = vld [vmem:[#allocation6 + $0x20] sm:$0xff]
    %v141 = vld [vmem:[#allocation6 + $0x28] sm:$0xff]
    %v142 = vld [vmem:[#allocation6 + $0x30] sm:$0xff]
    %v143 = vld [vmem:[#allocation6 + $0x38] sm:$0xff]
    %v144 = vld [vmem:[#allocation6 + $0x40] sm:$0xff]
    %v145 = vld [vmem:[#allocation6 + $0x48] sm:$0xff]
    %v146 = vld [vmem:[#allocation6 + $0x50] sm:$0xff]
    %v147 = vld [vmem:[#allocation6 + $0x58] sm:$0xff]
    %v148 = vld [vmem:[#allocation6 + $0x60] sm:$0xff]
    %v149 = vld [vmem:[#allocation6 + $0x68] sm:$0xff]
    %v150 = vld [vmem:[#allocation6 + $0x70] sm:$0xff]
    %v151 = vld [vmem:[#allocation6 + $0x78] sm:$0xff]
    %v152 = vld [vmem:[#allocation6 + $0x80] sm:$0xff]
    %v153 = vld [vmem:[#allocation6 + $0x88] sm:$0xff]
    %v154 = vld [vmem:[#allocation6 + $0x90] sm:$0xff]
    %v155 = vld [vmem:[#allocation6 + $0x98] sm:$0xff]
    %v156 = vld [vmem:[#allocation6 + $0xa0] sm:$0xff]
    %v157 = vld [vmem:[#allocation6 + $0xa8] sm:$0xff]
    %v158 = vld [vmem:[#allocation6 + $0xb0] sm:$0xff]
    %v159 = vld [vmem:[#allocation6 + $0xb8] sm:$0xff]
    %v160 = vld [vmem:[#allocation6 + $0xc0] sm:$0xff]
    %v161 = vld [vmem:[#allocation6 + $0xc8] sm:$0xff]
    %v162 = vld [vmem:[#allocation6 + $0xd0] sm:$0xff]
    %v163 = vld [vmem:[#allocation6 + $0xd8] sm:$0xff]
    %v164 = vld [vmem:[#allocation6 + $0xe0] sm:$0xff]
    %v165 = vld [vmem:[#allocation6 + $0xe8] sm:$0xff]
    %v166 = vld [vmem:[#allocation6 + $0xf0] sm:$0xff]
    %v167 = vld [vmem:[#allocation6 + $0xf8] sm:$0xff]
    %v168 = vld [vmem:[#allocation6 + $0x100] sm:$0xff]
    %v169 = vld [vmem:[#allocation6 + $0x108] sm:$0xff]
    %v170 = vld [vmem:[#allocation6 + $0x110] sm:$0xff]
    %v171 = vld [vmem:[#allocation6 + $0x118] sm:$0xff]
    %v172 = vld [vmem:[#allocation6 + $0x120] sm:$0xff]
    %v173 = vld [vmem:[#allocation6 + $0x128] sm:$0xff]
    %v174 = vld [vmem:[#allocation6 + $0x130] sm:$0xff]
    %v175 = vld [vmem:[#allocation6 + $0x138] sm:$0xff]
    %v176 = vld [vmem:[#allocation6 + $0x140] sm:$0xff]
    %v177 = vld [vmem:[#allocation6 + $0x148] sm:$0xff]
    %v178 = vld [vmem:[#allocation6 + $0x150] sm:$0xff]
    %v179 = vld [vmem:[#allocation6 + $0x158] sm:$0xff]
    %v180 = vld [vmem:[#allocation6 + $0x160] sm:$0xff]
    %v181 = vld [vmem:[#allocation6 + $0x168] sm:$0xff]
    %v182 = vld [vmem:[#allocation6 + $0x170] sm:$0xff]
    %v183 = vld [vmem:[#allocation6 + $0x178] sm:$0xff]
    %v184 = vld [vmem:[#allocation6 + $0x180] sm:$0xff]
    %v185 = vld [vmem:[#allocation6 + $0x188] sm:$0xff]
    %v186 = vld [vmem:[#allocation6 + $0x190] sm:$0xff]
    %v187 = vld [vmem:[#allocation6 + $0x198] sm:$0xff]
    %v188 = vld [vmem:[#allocation6 + $0x1a0] sm:$0xff]
    %v189 = vld [vmem:[#allocation6 + $0x1a8] sm:$0xff]
    %v190 = vld [vmem:[#allocation6 + $0x1b0] sm:$0xff]
    %v191 = vld [vmem:[#allocation6 + $0x1b8] sm:$0xff]
    %v192 = vld [vmem:[#allocation6 + $0x1c0] sm:$0xff]
    %v193 = vld [vmem:[#allocation6 + $0x1c8] sm:$0xff]
    %v194 = vld [vmem:[#allocation6 + $0x1d0] sm:$0xff]
    %v195 = vld [vmem:[#allocation6 + $0x1d8] sm:$0xff]
    %v196 = vld [vmem:[#allocation6 + $0x1e0] sm:$0xff]
    %v197 = vld [vmem:[#allocation6 + $0x1e8] sm:$0xff]
    %v198 = vld [vmem:[#allocation6 + $0x1f0] sm:$0xff]
    %v199 = vld [vmem:[#allocation6 + $0x1f8] sm:$0xff]
    %v200 = vld [vmem:[#allocation8] sm:$0xff]
    %v202 = vlaneseq
    %v203 = vshrl.u32 %v202, 7
    %v204 = vsub.s32 0, %v203
    %v205 = vrot.slane %v200, %v204
    %v206 = vlaneseq
    %v207 = vshrl.u32 %v206, 7
    %v208 = vsub.s32 1, %v207
    %v209 = vrot.slane %v200, %v208
    %v210 = vlaneseq
    %v211 = vshrl.u32 %v210, 7
    %v212 = vsub.s32 2, %v211
    %v213 = vrot.slane %v200, %v212
    %v214 = vlaneseq
    %v215 = vshrl.u32 %v214, 7
    %v216 = vsub.s32 3, %v215
    %v217 = vrot.slane %v200, %v216
    %v218 = vlaneseq
    %v219 = vshrl.u32 %v218, 7
    %v220 = vsub.s32 4, %v219
    %v221 = vrot.slane %v200, %v220
    %v222 = vlaneseq
    %v223 = vshrl.u32 %v222, 7
    %v224 = vsub.s32 5, %v223
    %v225 = vrot.slane %v200, %v224
    %v226 = vlaneseq
    %v227 = vshrl.u32 %v226, 7
    %v228 = vsub.s32 6, %v227
    %v229 = vrot.slane %v200, %v228
    %v230 = vlaneseq
    %v231 = vshrl.u32 %v230, 7
    %v232 = vsub.s32 7, %v231
    %v233 = vrot.slane %v200, %v232
    %v306 = vunpack.c.l.b16 %v136
    %v307 = vunpack.c.h.b16 %v136
    %v308 = vunpack.c.l.b16 %v137
    %v309 = vunpack.c.h.b16 %v137
    %v310 = vunpack.c.l.b16 %v138
    %v311 = vunpack.c.h.b16 %v138
    %v312 = vunpack.c.l.b16 %v139
    %v313 = vunpack.c.h.b16 %v139
    %v314 = vunpack.c.l.b16 %v140
    %v315 = vunpack.c.h.b16 %v140
    %v316 = vunpack.c.l.b16 %v141
    %v317 = vunpack.c.h.b16 %v141
    %v318 = vunpack.c.l.b16 %v142
    %v319 = vunpack.c.h.b16 %v142
    %v320 = vunpack.c.l.b16 %v143
    %v321 = vunpack.c.h.b16 %v143
    %v322 = vunpack.c.l.b16 %v144
    %v323 = vunpack.c.h.b16 %v144
    %v324 = vunpack.c.l.b16 %v145
    %v325 = vunpack.c.h.b16 %v145
    %v326 = vunpack.c.l.b16 %v146
    %v327 = vunpack.c.h.b16 %v146
    %v328 = vunpack.c.l.b16 %v147
    %v329 = vunpack.c.h.b16 %v147
    %v330 = vunpack.c.l.b16 %v148
    %v331 = vunpack.c.h.b16 %v148
    %v332 = vunpack.c.l.b16 %v149
    %v333 = vunpack.c.h.b16 %v149
    %v334 = vunpack.c.l.b16 %v150
    %v335 = vunpack.c.h.b16 %v150
    %v336 = vunpack.c.l.b16 %v151
    %v337 = vunpack.c.h.b16 %v151
    %v338 = vunpack.c.l.b16 %v152
    %v339 = vunpack.c.h.b16 %v152
    %v340 = vunpack.c.l.b16 %v153
    %v341 = vunpack.c.h.b16 %v153
    %v342 = vunpack.c.l.b16 %v154
    %v343 = vunpack.c.h.b16 %v154
    %v344 = vunpack.c.l.b16 %v155
    %v345 = vunpack.c.h.b16 %v155
    %v346 = vunpack.c.l.b16 %v156
    %v347 = vunpack.c.h.b16 %v156
    %v348 = vunpack.c.l.b16 %v157
    %v349 = vunpack.c.h.b16 %v157
    %v350 = vunpack.c.l.b16 %v158
    %v351 = vunpack.c.h.b16 %v158
    %v352 = vunpack.c.l.b16 %v159
    %v353 = vunpack.c.h.b16 %v159
    %v354 = vunpack.c.l.b16 %v160
    %v355 = vunpack.c.h.b16 %v160
    %v356 = vunpack.c.l.b16 %v161
    %v357 = vunpack.c.h.b16 %v161
    %v358 = vunpack.c.l.b16 %v162
    %v359 = vunpack.c.h.b16 %v162
    %v360 = vunpack.c.l.b16 %v163
    %v361 = vunpack.c.h.b16 %v163
    %v362 = vunpack.c.l.b16 %v164
    %v363 = vunpack.c.h.b16 %v164
    %v364 = vunpack.c.l.b16 %v165
    %v365 = vunpack.c.h.b16 %v165
    %v366 = vunpack.c.l.b16 %v166
    %v367 = vunpack.c.h.b16 %v166
    %v368 = vunpack.c.l.b16 %v167
    %v369 = vunpack.c.h.b16 %v167
    %v370 = vunpack.c.l.b16 %v168
    %v371 = vunpack.c.h.b16 %v168
    %v372 = vunpack.c.l.b16 %v169
    %v373 = vunpack.c.h.b16 %v169
    %v374 = vunpack.c.l.b16 %v170
    %v375 = vunpack.c.h.b16 %v170
    %v376 = vunpack.c.l.b16 %v171
    %v377 = vunpack.c.h.b16 %v171
    %v378 = vunpack.c.l.b16 %v172
    %v379 = vunpack.c.h.b16 %v172
    %v380 = vunpack.c.l.b16 %v173
    %v381 = vunpack.c.h.b16 %v173
    %v382 = vunpack.c.l.b16 %v174
    %v383 = vunpack.c.h.b16 %v174
    %v384 = vunpack.c.l.b16 %v175
    %v385 = vunpack.c.h.b16 %v175
    %v386 = vunpack.c.l.b16 %v176
    %v387 = vunpack.c.h.b16 %v176
    %v388 = vunpack.c.l.b16 %v177
    %v389 = vunpack.c.h.b16 %v177
    %v390 = vunpack.c.l.b16 %v178
    %v391 = vunpack.c.h.b16 %v178
    %v392 = vunpack.c.l.b16 %v179
    %v393 = vunpack.c.h.b16 %v179
    %v394 = vunpack.c.l.b16 %v180
    %v395 = vunpack.c.h.b16 %v180
    %v396 = vunpack.c.l.b16 %v181
    %v397 = vunpack.c.h.b16 %v181
    %v398 = vunpack.c.l.b16 %v182
    %v399 = vunpack.c.h.b16 %v182
    %v400 = vunpack.c.l.b16 %v183
    %v401 = vunpack.c.h.b16 %v183
    %v402 = vunpack.c.l.b16 %v184
    %v403 = vunpack.c.h.b16 %v184
    %v404 = vunpack.c.l.b16 %v185
    %v405 = vunpack.c.h.b16 %v185
    %v406 = vunpack.c.l.b16 %v186
    %v407 = vunpack.c.h.b16 %v186
    %v408 = vunpack.c.l.b16 %v187
    %v409 = vunpack.c.h.b16 %v187
    %v410 = vunpack.c.l.b16 %v188
    %v411 = vunpack.c.h.b16 %v188
    %v412 = vunpack.c.l.b16 %v189
    %v413 = vunpack.c.h.b16 %v189
    %v414 = vunpack.c.l.b16 %v190
    %v415 = vunpack.c.h.b16 %v190
    %v416 = vunpack.c.l.b16 %v191
    %v417 = vunpack.c.h.b16 %v191
    %v418 = vunpack.c.l.b16 %v192
    %v419 = vunpack.c.h.b16 %v192
    %v420 = vunpack.c.l.b16 %v193
    %v421 = vunpack.c.h.b16 %v193
    %v422 = vunpack.c.l.b16 %v194
    %v423 = vunpack.c.h.b16 %v194
    %v424 = vunpack.c.l.b16 %v195
    %v425 = vunpack.c.h.b16 %v195
    %v426 = vunpack.c.l.b16 %v196
    %v427 = vunpack.c.h.b16 %v196
    %v428 = vunpack.c.l.b16 %v197
    %v429 = vunpack.c.h.b16 %v197
    %v430 = vunpack.c.l.b16 %v198
    %v431 = vunpack.c.h.b16 %v198
    %v432 = vunpack.c.l.b16 %v199
    %v433 = vunpack.c.h.b16 %v199
    %v434 = vpack.c.b16 %v314, %v306
    %v435 = vpack.c.b16 %v315, %v307
    %v436 = vpack.c.b16 %v316, %v308
    %v437 = vpack.c.b16 %v317, %v309
    %v438 = vpack.c.b16 %v318, %v310
    %v439 = vpack.c.b16 %v319, %v311
    %v440 = vpack.c.b16 %v320, %v312
    %v441 = vpack.c.b16 %v321, %v313
    %v442 = vpack.c.b16 %v330, %v322
    %v443 = vpack.c.b16 %v331, %v323
    %v444 = vpack.c.b16 %v332, %v324
    %v445 = vpack.c.b16 %v333, %v325
    %v446 = vpack.c.b16 %v334, %v326
    %v447 = vpack.c.b16 %v335, %v327
    %v448 = vpack.c.b16 %v336, %v328
    %v449 = vpack.c.b16 %v337, %v329
    %v450 = vpack.c.b16 %v346, %v338
    %v451 = vpack.c.b16 %v347, %v339
    %v452 = vpack.c.b16 %v348, %v340
    %v453 = vpack.c.b16 %v349, %v341
    %v454 = vpack.c.b16 %v350, %v342
    %v455 = vpack.c.b16 %v351, %v343
    %v456 = vpack.c.b16 %v352, %v344
    %v457 = vpack.c.b16 %v353, %v345
    %v458 = vpack.c.b16 %v362, %v354
    %v459 = vpack.c.b16 %v363, %v355
    %v460 = vpack.c.b16 %v364, %v356
    %v461 = vpack.c.b16 %v365, %v357
    %v462 = vpack.c.b16 %v366, %v358
    %v463 = vpack.c.b16 %v367, %v359
    %v464 = vpack.c.b16 %v368, %v360
    %v465 = vpack.c.b16 %v369, %v361
    %v466 = vpack.c.b16 %v378, %v370
    %v467 = vpack.c.b16 %v379, %v371
    %v468 = vpack.c.b16 %v380, %v372
    %v469 = vpack.c.b16 %v381, %v373
    %v470 = vpack.c.b16 %v382, %v374
    %v471 = vpack.c.b16 %v383, %v375
    %v472 = vpack.c.b16 %v384, %v376
    %v473 = vpack.c.b16 %v385, %v377
    %v474 = vpack.c.b16 %v394, %v386
    %v475 = vpack.c.b16 %v395, %v387
    %v476 = vpack.c.b16 %v396, %v388
    %v477 = vpack.c.b16 %v397, %v389
    %v478 = vpack.c.b16 %v398, %v390
    %v479 = vpack.c.b16 %v399, %v391
    %v480 = vpack.c.b16 %v400, %v392
    %v481 = vpack.c.b16 %v401, %v393
    %v482 = vpack.c.b16 %v410, %v402
    %v483 = vpack.c.b16 %v411, %v403
    %v484 = vpack.c.b16 %v412, %v404
    %v485 = vpack.c.b16 %v413, %v405
    %v486 = vpack.c.b16 %v414, %v406
    %v487 = vpack.c.b16 %v415, %v407
    %v488 = vpack.c.b16 %v416, %v408
    %v489 = vpack.c.b16 %v417, %v409
    %v490 = vpack.c.b16 %v426, %v418
    %v491 = vpack.c.b16 %v427, %v419
    %v492 = vpack.c.b16 %v428, %v420
    %v493 = vpack.c.b16 %v429, %v421
    %v494 = vpack.c.b16 %v430, %v422
    %v495 = vpack.c.b16 %v431, %v423
    %v496 = vpack.c.b16 %v432, %v424
    %v497 = vpack.c.b16 %v433, %v425
    %562 = vmatprep.subr.bf16.mxu0 %v435
    %563 = vmatpush1.bf16.msra.mxu0 %v434
    %564 = vmatprep.subr.bf16.mxu0 %v443
    %565 = vmatpush1.bf16.msra.mxu0 %v442
    %566 = vmatprep.subr.bf16.mxu0 %v451
    %567 = vmatpush1.bf16.msra.mxu0 %v450
    %568 = vmatprep.subr.bf16.mxu0 %v459
    %569 = vmatpush1.bf16.msra.mxu0 %v458
    %570 = vmatprep.subr.bf16.mxu0 %v467
    %571 = vmatpush1.bf16.msra.mxu0 %v466
    %572 = vmatprep.subr.bf16.mxu0 %v475
    %573 = vmatpush1.bf16.msra.mxu0 %v474
    %574 = vmatprep.subr.bf16.mxu0 %v483
    %575 = vmatpush1.bf16.msra.mxu0 %v482
    %576 = vmatprep.subr.bf16.mxu0 %v491
    %577 = vmatpush1.bf16.msra.mxu0 %v490
    %578 = vmatprep.subr.bf16.mxu0 0
    %579 = vmatpush1.bf16.msra.mxu0 0
    %580 = vmatprep.subr.bf16.mxu0 0
    %581 = vmatpush1.bf16.msra.mxu0 0
    %582 = vmatprep.subr.bf16.mxu0 0
    %583 = vmatpush1.bf16.msra.mxu0 0
    %584 = vmatprep.subr.bf16.mxu0 0
    %585 = vmatpush1.bf16.msra.mxu0 0
    %586 = vmatprep.subr.bf16.mxu0 0
    %587 = vmatpush1.bf16.msra.mxu0 0
    %588 = vmatprep.subr.bf16.mxu0 0
    %589 = vmatpush1.bf16.msra.mxu0 0
    %590 = vmatprep.subr.bf16.mxu0 0
    %591 = vmatpush1.bf16.msra.mxu0 0
    %592 = vmatprep.subr.bf16.mxu0 0
    %593 = vmatpush1.bf16.msra.mxu0 0
    %594 = vmatprep.mubr.bf16.mxu0 0
    %595 = vmatmul.mubr.bf16.gmra.mrb[0].mxu0 %v135
    %v596 = vpop.f32.mrb[0].mxu0
    %v597 = vadd.f32 %v205, %v596
    %v598 = vpop.f32.mrb[0].mxu0
    %v599 = vadd.f32 %v209, %v598
    %v600 = vpop.f32.mrb[0].mxu0
    %v601 = vpop.f32.mrb[0].mxu0
    %602 = vdwg.mxu0
    %603 = vmatprep.subr.bf16.mxu0 %v437
    %604 = vmatpush1.bf16.msra.mxu0 %v436
    %605 = vmatprep.subr.bf16.mxu0 %v445
    %606 = vmatpush1.bf16.msra.mxu0 %v444
    %607 = vmatprep.subr.bf16.mxu0 %v453
    %608 = vmatpush1.bf16.msra.mxu0 %v452
    %609 = vmatprep.subr.bf16.mxu0 %v461
    %610 = vmatpush1.bf16.msra.mxu0 %v460
    %611 = vmatprep.subr.bf16.mxu0 %v469
    %612 = vmatpush1.bf16.msra.mxu0 %v468
    %613 = vmatprep.subr.bf16.mxu0 %v477
    %614 = vmatpush1.bf16.msra.mxu0 %v476
    %615 = vmatprep.subr.bf16.mxu0 %v485
    %616 = vmatpush1.bf16.msra.mxu0 %v484
    %617 = vmatprep.subr.bf16.mxu0 %v493
    %618 = vmatpush1.bf16.msra.mxu0 %v492
    %619 = vmatprep.subr.bf16.mxu0 0
    %620 = vmatpush1.bf16.msra.mxu0 0
    %621 = vmatprep.subr.bf16.mxu0 0
    %622 = vmatpush1.bf16.msra.mxu0 0
    %623 = vmatprep.subr.bf16.mxu0 0
    %624 = vmatpush1.bf16.msra.mxu0 0
    %625 = vmatprep.subr.bf16.mxu0 0
    %626 = vmatpush1.bf16.msra.mxu0 0
    %627 = vmatprep.subr.bf16.mxu0 0
    %628 = vmatpush1.bf16.msra.mxu0 0
    %629 = vmatprep.subr.bf16.mxu0 0
    %630 = vmatpush1.bf16.msra.mxu0 0
    %631 = vmatprep.subr.bf16.mxu0 0
    %632 = vmatpush1.bf16.msra.mxu0 0
    %633 = vmatprep.subr.bf16.mxu0 0
    %634 = vmatpush1.bf16.msra.mxu0 0
    %635 = vmatprep.mubr.bf16.mxu0 0
    %636 = vmatmul.mubr.bf16.gmra.mrb[0].mxu0 %v135
    %v637 = vpop.f32.mrb[0].mxu0
    %v638 = vadd.f32 %v213, %v637
    %v639 = vpop.f32.mrb[0].mxu0
    %v640 = vadd.f32 %v217, %v639
    %v641 = vpop.f32.mrb[0].mxu0
    %v642 = vpop.f32.mrb[0].mxu0
    %643 = vdwg.mxu0
    %644 = vmatprep.subr.bf16.mxu0 %v439
    %645 = vmatpush1.bf16.msra.mxu0 %v438
    %646 = vmatprep.subr.bf16.mxu0 %v447
    %647 = vmatpush1.bf16.msra.mxu0 %v446
    %648 = vmatprep.subr.bf16.mxu0 %v455
    %649 = vmatpush1.bf16.msra.mxu0 %v454
    %650 = vmatprep.subr.bf16.mxu0 %v463
    %651 = vmatpush1.bf16.msra.mxu0 %v462
    %652 = vmatprep.subr.bf16.mxu0 %v471
    %653 = vmatpush1.bf16.msra.mxu0 %v470
    %654 = vmatprep.subr.bf16.mxu0 %v479
    %655 = vmatpush1.bf16.msra.mxu0 %v478
    %656 = vmatprep.subr.bf16.mxu0 %v487
    %657 = vmatpush1.bf16.msra.mxu0 %v486
    %658 = vmatprep.subr.bf16.mxu0 %v495
    %659 = vmatpush1.bf16.msra.mxu0 %v494
    %660 = vmatprep.subr.bf16.mxu0 0
    %661 = vmatpush1.bf16.msra.mxu0 0
    %662 = vmatprep.subr.bf16.mxu0 0
    %663 = vmatpush1.bf16.msra.mxu0 0
    %664 = vmatprep.subr.bf16.mxu0 0
    %665 = vmatpush1.bf16.msra.mxu0 0
    %666 = vmatprep.subr.bf16.mxu0 0
    %667 = vmatpush1.bf16.msra.mxu0 0
    %668 = vmatprep.subr.bf16.mxu0 0
    %669 = vmatpush1.bf16.msra.mxu0 0
    %670 = vmatprep.subr.bf16.mxu0 0
    %671 = vmatpush1.bf16.msra.mxu0 0
    %672 = vmatprep.subr.bf16.mxu0 0
    %673 = vmatpush1.bf16.msra.mxu0 0
    %674 = vmatprep.subr.bf16.mxu0 0
    %675 = vmatpush1.bf16.msra.mxu0 0
    %676 = vmatprep.mubr.bf16.mxu0 0
    %677 = vmatmul.mubr.bf16.gmra.mrb[0].mxu0 %v135
    %v678 = vpop.f32.mrb[0].mxu0
    %v679 = vadd.f32 %v221, %v678
    %v680 = vpop.f32.mrb[0].mxu0
    %v681 = vadd.f32 %v225, %v680
    %v682 = vpop.f32.mrb[0].mxu0
    %v683 = vpop.f32.mrb[0].mxu0
    %684 = vdwg.mxu0
    %685 = vmatprep.subr.bf16.mxu0 %v441
    %686 = vmatpush1.bf16.msra.mxu0 %v440
    %687 = vmatprep.subr.bf16.mxu0 %v449
    %688 = vmatpush1.bf16.msra.mxu0 %v448
    %689 = vmatprep.subr.bf16.mxu0 %v457
    %690 = vmatpush1.bf16.msra.mxu0 %v456
    %691 = vmatprep.subr.bf16.mxu0 %v465
    %692 = vmatpush1.bf16.msra.mxu0 %v464
    %693 = vmatprep.subr.bf16.mxu0 %v473
    %694 = vmatpush1.bf16.msra.mxu0 %v472
    %695 = vmatprep.subr.bf16.mxu0 %v481
    %696 = vmatpush1.bf16.msra.mxu0 %v480
    %697 = vmatprep.subr.bf16.mxu0 %v489
    %698 = vmatpush1.bf16.msra.mxu0 %v488
    %699 = vmatprep.subr.bf16.mxu0 %v497
    %700 = vmatpush1.bf16.msra.mxu0 %v496
    %701 = vmatprep.subr.bf16.mxu0 0
    %702 = vmatpush1.bf16.msra.mxu0 0
    %703 = vmatprep.subr.bf16.mxu0 0
    %704 = vmatpush1.bf16.msra.mxu0 0
    %705 = vmatprep.subr.bf16.mxu0 0
    %706 = vmatpush1.bf16.msra.mxu0 0
    %707 = vmatprep.subr.bf16.mxu0 0
    %708 = vmatpush1.bf16.msra.mxu0 0
    %709 = vmatprep.subr.bf16.mxu0 0
    %710 = vmatpush1.bf16.msra.mxu0 0
    %711 = vmatprep.subr.bf16.mxu0 0
    %712 = vmatpush1.bf16.msra.mxu0 0
    %713 = vmatprep.subr.bf16.mxu0 0
    %714 = vmatpush1.bf16.msra.mxu0 0
    %715 = vmatprep.subr.bf16.mxu0 0
    %716 = vmatpush1.bf16.msra.mxu0 0
    %717 = vmatprep.mubr.bf16.mxu0 0
    %718 = vmatmul.mubr.bf16.gmra.mrb[0].mxu0 %v135
    %v719 = vpop.f32.mrb[0].mxu0
    %v720 = vadd.f32 %v229, %v719
    %v721 = vpop.f32.mrb[0].mxu0
    %v722 = vadd.f32 %v233, %v721
    %v723 = vpop.f32.mrb[0].mxu0
    %v724 = vpop.f32.mrb[0].mxu0
    %725 = vdwg.mxu0
    %v726 = vcombine.low %v597, %v638
    %v728 = vunpack.c.l.s4 1983009808
    %v729 = vunpack.c.0.s8 %v728
    %v730 = vlaneseq
    %v731 = vshrl.u32 %v730, 7
    %v732 = vsub.s32 %v729, %v731
    %v733 = vrot.slane %v726, %v732
    %v734 = vcombine.low %v599, %v640
    %v736 = vunpack.c.l.s4 1983009808
    %v737 = vunpack.c.0.s8 %v736
    %v738 = vlaneseq
    %v739 = vshrl.u32 %v738, 7
    %v740 = vsub.s32 %v737, %v739
    %v741 = vrot.slane %v734, %v740
    %v742 = vcombine.low %v679, %v720
    %v744 = vunpack.c.l.s4 1983009808
    %v745 = vunpack.c.0.s8 %v744
    %v746 = vlaneseq
    %v747 = vshrl.u32 %v746, 7
    %v748 = vsub.s32 %v745, %v747
    %v749 = vrot.slane %v742, %v748
    %v750 = vcombine.low %v681, %v722
    %v752 = vunpack.c.l.s4 1983009808
    %v753 = vunpack.c.0.s8 %v752
    %v754 = vlaneseq
    %v755 = vshrl.u32 %v754, 7
    %v756 = vsub.s32 %v753, %v755
    %v757 = vrot.slane %v750, %v756
    %v758 = vcombine.low %v733, %v741
    %v760 = vunpack.c.l.s4 1934713408
    %v761 = vunpack.c.0.s8 %v760
    %v762 = vlaneseq
    %v763 = vshrl.u32 %v762, 7
    %v764 = vsub.s32 %v761, %v763
    %v765 = vrot.slane %v758, %v764
    %v766 = vcombine.low %v749, %v757
    %v768 = vunpack.c.l.s4 1934713408
    %v769 = vunpack.c.0.s8 %v768
    %v770 = vlaneseq
    %v771 = vshrl.u32 %v770, 7
    %v772 = vsub.s32 %v769, %v771
    %v773 = vrot.slane %v766, %v772
    %v774 = vcombine.low %v765, %v773
    %v775 = vcombine.high %v765, %v773
    %776 = vst [vmem:[#allocation2] sm:$0x1] 0
    %777 = vst [vmem:[#allocation2 + $0x8] sm:$0x1] 0
    %778 = vst [vmem:[#allocation2 + $0x4] sm:$0x2] 0
    %779 = vst [vmem:[#allocation2 + $0xc] sm:$0x2] 0
    %v780 = vmax.f32 %v774, 0.0
    %v781 = vmax.f32 %v775, 0.0
    %v782 = vpack.c.bf16 %v780, %v780
    %v783 = vpack.c.bf16 %v781, %v781
    %v786 = vunpack.c.l.b16 %v782
    %v787 = vunpack.c.l.b16 %v783
    %v788 = vpack.c.b16 %v786, %v786
    %v789 = vpack.c.b16 %v787, %v787
    %v790 = vrot.slane %v788, 7
    %v791 = vrot.slane %v790, 4
    %v792 = vrot.slane %v789, 7
    %v793 = vrot.slane %v792, 4
    %798 = vst [vmem:[#allocation2] sm:$0xe] %v790
    %799 = vst [vmem:[#allocation2 + $0x4] sm:$0x1] %v791
    %800 = vst [vmem:[#allocation2 + $0x8] sm:$0xe] %v792
    %801 = vst [vmem:[#allocation2 + $0xc] sm:$0x1] %v793
    %v802 = vld [vmem:[#allocation2] sm:$0xf]
    %v803 = vld [vmem:[#allocation2 + $0x4] sm:$0x3]
    %v804 = vld [vmem:[#allocation2 + $0x8] sm:$0xf]
    %v805 = vld [vmem:[#allocation2 + $0xc] sm:$0x3]
    %v810 = vunpack.c.l.b16 %v802
    %v811 = vunpack.c.l.b16 %v803
    %v812 = vunpack.c.l.b16 %v804
    %v813 = vunpack.c.l.b16 %v805
    %v814 = vpack.c.b16 %v811, %v810
    %v815 = vpack.c.b16 %v813, %v812
    %v817 = vshrl.u32 %v814, 16
    %v819 = vshll.u32 %v814, 16
    %v821 = vrot.slane %v819, 1
    %v822 = vor.u32 %v817, %v821
    %v824 = vshrl.u32 %v815, 16
    %v826 = vshll.u32 %v815, 16
    %v828 = vrot.slane %v826, 1
    %v829 = vor.u32 %v824, %v828
    %v830 = vrot.slane %v814, 1
    %v831 = vrot.slane %v815, 1
    %v832 = vrot.slane %v817, 1
    %v833 = vrot.slane %v819, 2
    %v834 = vor.u32 %v832, %v833
    %v835 = vrot.slane %v824, 1
    %v836 = vrot.slane %v826, 2
    %v837 = vor.u32 %v835, %v836
    %v838 = vrot.slane %v814, 2
    %v839 = vrot.slane %v815, 2
    %v840 = vunpack.c.l.b16 %v822
    %v841 = vunpack.c.l.b16 %v830
    %v842 = vunpack.c.l.b16 %v834
    %v843 = vunpack.c.l.b16 %v838
    %v844 = vunpack.c.l.b16 %v829
    %v845 = vunpack.c.l.b16 %v831
    %v846 = vunpack.c.l.b16 %v837
    %v847 = vunpack.c.l.b16 %v839
    %v848 = vld [vmem:[#allocation9] sm:$0xf]
    %v849 = vld [vmem:[#allocation9 + $0x4] sm:$0xf]
    %v850 = vld [vmem:[#allocation9 + $0x8] sm:$0xf]
    %v851 = vld [vmem:[#allocation9 + $0xc] sm:$0xf]
    %v852 = vld [vmem:[#allocation9 + $0x10] sm:$0xf]
    %v853 = vld [vmem:[#allocation9 + $0x14] sm:$0xf]
    %v854 = vld [vmem:[#allocation9 + $0x18] sm:$0xf]
    %v855 = vld [vmem:[#allocation9 + $0x1c] sm:$0xf]
    %v856 = vld [vmem:[#allocation9 + $0x20] sm:$0xf]
    %v857 = vld [vmem:[#allocation9 + $0x24] sm:$0xf]
    %v858 = vld [vmem:[#allocation9 + $0x28] sm:$0xf]
    %v859 = vld [vmem:[#allocation9 + $0x2c] sm:$0xf]
    %v860 = vld [vmem:[#allocation9 + $0x30] sm:$0xf]
    %v861 = vld [vmem:[#allocation9 + $0x34] sm:$0xf]
    %v862 = vld [vmem:[#allocation9 + $0x38] sm:$0xf]
    %v863 = vld [vmem:[#allocation9 + $0x3c] sm:$0xf]
    %v864 = vld [vmem:[#allocation9 + $0x40] sm:$0xf]
    %v865 = vld [vmem:[#allocation9 + $0x44] sm:$0xf]
    %v866 = vld [vmem:[#allocation9 + $0x48] sm:$0xf]
    %v867 = vld [vmem:[#allocation9 + $0x4c] sm:$0xf]
    %v868 = vld [vmem:[#allocation9 + $0x50] sm:$0xf]
    %v869 = vld [vmem:[#allocation9 + $0x54] sm:$0xf]
    %v870 = vld [vmem:[#allocation9 + $0x58] sm:$0xf]
    %v871 = vld [vmem:[#allocation9 + $0x5c] sm:$0xf]
    %v872 = vld [vmem:[#allocation9 + $0x60] sm:$0xf]
    %v873 = vld [vmem:[#allocation9 + $0x64] sm:$0xf]
    %v874 = vld [vmem:[#allocation9 + $0x68] sm:$0xf]
    %v875 = vld [vmem:[#allocation9 + $0x6c] sm:$0xf]
    %v876 = vld [vmem:[#allocation9 + $0x70] sm:$0xf]
    %v877 = vld [vmem:[#allocation9 + $0x74] sm:$0xf]
    %v878 = vld [vmem:[#allocation9 + $0x78] sm:$0xf]
    %v879 = vld [vmem:[#allocation9 + $0x7c] sm:$0xf]
    %v880 = vld [vmem:[#allocation9 + $0x80] sm:$0xf]
    %v881 = vld [vmem:[#allocation9 + $0x84] sm:$0xf]
    %v882 = vld [vmem:[#allocation9 + $0x88] sm:$0xf]
    %v883 = vld [vmem:[#allocation9 + $0x8c] sm:$0xf]
    %v884 = vld [vmem:[#allocation9 + $0x90] sm:$0xf]
    %v885 = vld [vmem:[#allocation9 + $0x94] sm:$0xf]
    %v886 = vld [vmem:[#allocation9 + $0x98] sm:$0xf]
    %v887 = vld [vmem:[#allocation9 + $0x9c] sm:$0xf]
    %v888 = vld [vmem:[#allocation9 + $0xa0] sm:$0xf]
    %v889 = vld [vmem:[#allocation9 + $0xa4] sm:$0xf]
    %v890 = vld [vmem:[#allocation9 + $0xa8] sm:$0xf]
    %v891 = vld [vmem:[#allocation9 + $0xac] sm:$0xf]
    %v892 = vld [vmem:[#allocation9 + $0xb0] sm:$0xf]
    %v893 = vld [vmem:[#allocation9 + $0xb4] sm:$0xf]
    %v894 = vld [vmem:[#allocation9 + $0xb8] sm:$0xf]
    %v895 = vld [vmem:[#allocation9 + $0xbc] sm:$0xf]
    %v896 = vld [vmem:[#allocation9 + $0xc0] sm:$0xf]
    %v897 = vld [vmem:[#allocation9 + $0xc4] sm:$0xf]
    %v898 = vld [vmem:[#allocation9 + $0xc8] sm:$0xf]
    %v899 = vld [vmem:[#allocation9 + $0xcc] sm:$0xf]
    %v900 = vld [vmem:[#allocation9 + $0xd0] sm:$0xf]
    %v901 = vld [vmem:[#allocation9 + $0xd4] sm:$0xf]
    %v902 = vld [vmem:[#allocation9 + $0xd8] sm:$0xf]
    %v903 = vld [vmem:[#allocation9 + $0xdc] sm:$0xf]
    %v904 = vld [vmem:[#allocation9 + $0xe0] sm:$0xf]
    %v905 = vld [vmem:[#allocation9 + $0xe4] sm:$0xf]
    %v906 = vld [vmem:[#allocation9 + $0xe8] sm:$0xf]
    %v907 = vld [vmem:[#allocation9 + $0xec] sm:$0xf]
    %v908 = vld [vmem:[#allocation9 + $0xf0] sm:$0xf]
    %v909 = vld [vmem:[#allocation9 + $0xf4] sm:$0xf]
    %v910 = vld [vmem:[#allocation9 + $0xf8] sm:$0xf]
    %v911 = vld [vmem:[#allocation9 + $0xfc] sm:$0xf]
    %v912 = vld [vmem:[#allocation9 + $0x100] sm:$0xf]
    %v913 = vld [vmem:[#allocation9 + $0x104] sm:$0xf]
    %v914 = vld [vmem:[#allocation9 + $0x108] sm:$0xf]
    %v915 = vld [vmem:[#allocation9 + $0x10c] sm:$0xf]
    %v916 = vld [vmem:[#allocation9 + $0x110] sm:$0xf]
    %v917 = vld [vmem:[#allocation9 + $0x114] sm:$0xf]
    %v918 = vld [vmem:[#allocation9 + $0x118] sm:$0xf]
    %v919 = vld [vmem:[#allocation9 + $0x11c] sm:$0xf]
    %v920 = vld [vmem:[#allocation9 + $0x120] sm:$0xf]
    %v921 = vld [vmem:[#allocation9 + $0x124] sm:$0xf]
    %v922 = vld [vmem:[#allocation9 + $0x128] sm:$0xf]
    %v923 = vld [vmem:[#allocation9 + $0x12c] sm:$0xf]
    %v924 = vld [vmem:[#allocation9 + $0x130] sm:$0xf]
    %v925 = vld [vmem:[#allocation9 + $0x134] sm:$0xf]
    %v926 = vld [vmem:[#allocation9 + $0x138] sm:$0xf]
    %v927 = vld [vmem:[#allocation9 + $0x13c] sm:$0xf]
    %v928 = vpack.c.b16 %v812, %v810
    %v929 = vpack.c.b16 %v844, %v840
    %v930 = vpack.c.b16 %v845, %v841
    %v931 = vpack.c.b16 %v846, %v842
    %v932 = vpack.c.b16 %v847, %v843
    %v1018 = vunpack.c.l.b16 %v848
    %v1019 = vunpack.c.l.b16 %v849
    %v1020 = vunpack.c.l.b16 %v850
    %v1021 = vunpack.c.l.b16 %v851
    %v1022 = vunpack.c.l.b16 %v852
    %v1023 = vunpack.c.l.b16 %v853
    %v1024 = vunpack.c.l.b16 %v854
    %v1025 = vunpack.c.l.b16 %v855
    %v1026 = vunpack.c.l.b16 %v856
    %v1027 = vunpack.c.l.b16 %v857
    %v1028 = vunpack.c.l.b16 %v858
    %v1029 = vunpack.c.l.b16 %v859
    %v1030 = vunpack.c.l.b16 %v860
    %v1031 = vunpack.c.l.b16 %v861
    %v1032 = vunpack.c.l.b16 %v862
    %v1033 = vunpack.c.l.b16 %v863
    %v1034 = vunpack.c.l.b16 %v864
    %v1035 = vunpack.c.l.b16 %v865
    %v1036 = vunpack.c.l.b16 %v866
    %v1037 = vunpack.c.l.b16 %v867
    %v1038 = vunpack.c.l.b16 %v868
    %v1039 = vunpack.c.l.b16 %v869
    %v1040 = vunpack.c.l.b16 %v870
    %v1041 = vunpack.c.l.b16 %v871
    %v1042 = vunpack.c.l.b16 %v872
    %v1043 = vunpack.c.l.b16 %v873
    %v1044 = vunpack.c.l.b16 %v874
    %v1045 = vunpack.c.l.b16 %v875
    %v1046 = vunpack.c.l.b16 %v876
    %v1047 = vunpack.c.l.b16 %v877
    %v1048 = vunpack.c.l.b16 %v878
    %v1049 = vunpack.c.l.b16 %v879
    %v1050 = vunpack.c.l.b16 %v880
    %v1051 = vunpack.c.l.b16 %v881
    %v1052 = vunpack.c.l.b16 %v882
    %v1053 = vunpack.c.l.b16 %v883
    %v1054 = vunpack.c.l.b16 %v884
    %v1055 = vunpack.c.l.b16 %v885
    %v1056 = vunpack.c.l.b16 %v886
    %v1057 = vunpack.c.l.b16 %v887
    %v1058 = vunpack.c.l.b16 %v888
    %v1059 = vunpack.c.l.b16 %v889
    %v1060 = vunpack.c.l.b16 %v890
    %v1061 = vunpack.c.l.b16 %v891
    %v1062 = vunpack.c.l.b16 %v892
    %v1063 = vunpack.c.l.b16 %v893
    %v1064 = vunpack.c.l.b16 %v894
    %v1065 = vunpack.c.l.b16 %v895
    %v1066 = vunpack.c.l.b16 %v896
    %v1067 = vunpack.c.l.b16 %v897
    %v1068 = vunpack.c.l.b16 %v898
    %v1069 = vunpack.c.l.b16 %v899
    %v1070 = vunpack.c.l.b16 %v900
    %v1071 = vunpack.c.l.b16 %v901
    %v1072 = vunpack.c.l.b16 %v902
    %v1073 = vunpack.c.l.b16 %v903
    %v1074 = vunpack.c.l.b16 %v904
    %v1075 = vunpack.c.l.b16 %v905
    %v1076 = vunpack.c.l.b16 %v906
    %v1077 = vunpack.c.l.b16 %v907
    %v1078 = vunpack.c.l.b16 %v908
    %v1079 = vunpack.c.l.b16 %v909
    %v1080 = vunpack.c.l.b16 %v910
    %v1081 = vunpack.c.l.b16 %v911
    %v1082 = vunpack.c.l.b16 %v912
    %v1083 = vunpack.c.l.b16 %v913
    %v1084 = vunpack.c.l.b16 %v914
    %v1085 = vunpack.c.l.b16 %v915
    %v1086 = vunpack.c.l.b16 %v916
    %v1087 = vunpack.c.l.b16 %v917
    %v1088 = vunpack.c.l.b16 %v918
    %v1089 = vunpack.c.l.b16 %v919
    %v1090 = vunpack.c.l.b16 %v920
    %v1091 = vunpack.c.l.b16 %v921
    %v1092 = vunpack.c.l.b16 %v922
    %v1093 = vunpack.c.l.b16 %v923
    %v1094 = vunpack.c.l.b16 %v924
    %v1095 = vunpack.c.l.b16 %v925
    %v1096 = vunpack.c.l.b16 %v926
    %v1097 = vunpack.c.l.b16 %v927
    %v1098 = vpack.c.b16 %v1019, %v1018
    %v1099 = vpack.c.b16 %v1021, %v1020
    %v1100 = vpack.c.b16 %v1023, %v1022
    %v1101 = vpack.c.b16 %v1025, %v1024
    %v1102 = vpack.c.b16 %v1027, %v1026
    %v1103 = vpack.c.b16 %v1029, %v1028
    %v1104 = vpack.c.b16 %v1031, %v1030
    %v1105 = vpack.c.b16 %v1033, %v1032
    %v1106 = vpack.c.b16 %v1035, %v1034
    %v1107 = vpack.c.b16 %v1037, %v1036
    %v1108 = vpack.c.b16 %v1039, %v1038
    %v1109 = vpack.c.b16 %v1041, %v1040
    %v1110 = vpack.c.b16 %v1043, %v1042
    %v1111 = vpack.c.b16 %v1045, %v1044
    %v1112 = vpack.c.b16 %v1047, %v1046
    %v1113 = vpack.c.b16 %v1049, %v1048
    %v1114 = vpack.c.b16 %v1051, %v1050
    %v1115 = vpack.c.b16 %v1053, %v1052
    %v1116 = vpack.c.b16 %v1055, %v1054
    %v1117 = vpack.c.b16 %v1057, %v1056
    %v1118 = vpack.c.b16 %v1059, %v1058
    %v1119 = vpack.c.b16 %v1061, %v1060
    %v1120 = vpack.c.b16 %v1063, %v1062
    %v1121 = vpack.c.b16 %v1065, %v1064
    %v1122 = vpack.c.b16 %v1067, %v1066
    %v1123 = vpack.c.b16 %v1069, %v1068
    %v1124 = vpack.c.b16 %v1071, %v1070
    %v1125 = vpack.c.b16 %v1073, %v1072
    %v1126 = vpack.c.b16 %v1075, %v1074
    %v1127 = vpack.c.b16 %v1077, %v1076
    %v1128 = vpack.c.b16 %v1079, %v1078
    %v1129 = vpack.c.b16 %v1081, %v1080
    %v1130 = vpack.c.b16 %v1083, %v1082
    %v1131 = vpack.c.b16 %v1085, %v1084
    %v1132 = vpack.c.b16 %v1087, %v1086
    %v1133 = vpack.c.b16 %v1089, %v1088
    %v1134 = vpack.c.b16 %v1091, %v1090
    %v1135 = vpack.c.b16 %v1093, %v1092
    %v1136 = vpack.c.b16 %v1095, %v1094
    %v1137 = vpack.c.b16 %v1097, %v1096
    %1178 = vmatprep.subr.bf16.mxu0 0
    %1179 = vmatpush1.bf16.msra.mxu0 %v1098
    %1180 = vmatprep.subr.bf16.mxu0 0
    %1181 = vmatpush1.bf16.msra.mxu0 %v1099
    %1182 = vmatprep.subr.bf16.mxu0 0
    %1183 = vmatpush1.bf16.msra.mxu0 %v1100
    %1184 = vmatprep.subr.bf16.mxu0 0
    %1185 = vmatpush1.bf16.msra.mxu0 %v1101
    %1186 = vmatprep.subr.bf16.mxu0 0
    %1187 = vmatpush1.bf16.msra.mxu0 %v1102
    %1188 = vmatprep.subr.bf16.mxu0 0
    %1189 = vmatpush1.bf16.msra.mxu0 %v1103
    %1190 = vmatprep.subr.bf16.mxu0 0
    %1191 = vmatpush1.bf16.msra.mxu0 %v1104
    %1192 = vmatprep.subr.bf16.mxu0 0
    %1193 = vmatpush1.bf16.msra.mxu0 %v1105
    %1194 = vmatprep.subr.bf16.mxu0 0
    %1195 = vmatpush1.bf16.msra.mxu0 %v1106
    %1196 = vmatprep.subr.bf16.mxu0 0
    %1197 = vmatpush1.bf16.msra.mxu0 %v1107
    %1198 = vmatprep.subr.bf16.mxu0 0
    %1199 = vmatpush1.bf16.msra.mxu0 %v1108
    %1200 = vmatprep.subr.bf16.mxu0 0
    %1201 = vmatpush1.bf16.msra.mxu0 %v1109
    %1202 = vmatprep.subr.bf16.mxu0 0
    %1203 = vmatpush1.bf16.msra.mxu0 %v1110
    %1204 = vmatprep.subr.bf16.mxu0 0
    %1205 = vmatpush1.bf16.msra.mxu0 %v1111
    %1206 = vmatprep.subr.bf16.mxu0 0
    %1207 = vmatpush1.bf16.msra.mxu0 %v1112
    %1208 = vmatprep.subr.bf16.mxu0 0
    %1209 = vmatpush1.bf16.msra.mxu0 %v1113
    %1210 = vmatprep.mubr.bf16.mxu0 %v929
    %1211 = vmatmul.mubr.bf16.gmra.mrb[0].mxu0 %v928
    %v1212 = vpop.f32.mrb[0].mxu0
    %v1213 = vadd.f32 0.0, %v1212
    %v1214 = vpop.f32.mrb[0].mxu0
    %v1215 = vpop.f32.mrb[0].mxu0
    %v1216 = vadd.f32 0.0, %v1215
    %v1217 = vpop.f32.mrb[0].mxu0
    %1218 = vdwg.mxu0
    %1219 = vmatprep.subr.bf16.mxu0 0
    %1220 = vmatpush1.bf16.msra.mxu0 %v1114
    %1221 = vmatprep.subr.bf16.mxu0 0
    %1222 = vmatpush1.bf16.msra.mxu0 %v1115
    %1223 = vmatprep.subr.bf16.mxu0 0
    %1224 = vmatpush1.bf16.msra.mxu0 %v1116
    %1225 = vmatprep.subr.bf16.mxu0 0
    %1226 = vmatpush1.bf16.msra.mxu0 %v1117
    %1227 = vmatprep.subr.bf16.mxu0 0
    %1228 = vmatpush1.bf16.msra.mxu0 %v1118
    %1229 = vmatprep.subr.bf16.mxu0 0
    %1230 = vmatpush1.bf16.msra.mxu0 %v1119
    %1231 = vmatprep.subr.bf16.mxu0 0
    %1232 = vmatpush1.bf16.msra.mxu0 %v1120
    %1233 = vmatprep.subr.bf16.mxu0 0
    %1234 = vmatpush1.bf16.msra.mxu0 %v1121
    %1235 = vmatprep.subr.bf16.mxu0 0
    %1236 = vmatpush1.bf16.msra.mxu0 %v1122
    %1237 = vmatprep.subr.bf16.mxu0 0
    %1238 = vmatpush1.bf16.msra.mxu0 %v1123
    %1239 = vmatprep.subr.bf16.mxu0 0
    %1240 = vmatpush1.bf16.msra.mxu0 %v1124
    %1241 = vmatprep.subr.bf16.mxu0 0
    %1242 = vmatpush1.bf16.msra.mxu0 %v1125
    %1243 = vmatprep.subr.bf16.mxu0 0
    %1244 = vmatpush1.bf16.msra.mxu0 %v1126
    %1245 = vmatprep.subr.bf16.mxu0 0
    %1246 = vmatpush1.bf16.msra.mxu0 %v1127
    %1247 = vmatprep.subr.bf16.mxu0 0
    %1248 = vmatpush1.bf16.msra.mxu0 %v1128
    %1249 = vmatprep.subr.bf16.mxu0 0
    %1250 = vmatpush1.bf16.msra.mxu0 %v1129
    %1251 = vmatprep.mubr.bf16.mxu0 %v931
    %1252 = vmatmul.mubr.bf16.gmra.mrb[0].mxu0 %v930
    %v1253 = vpop.f32.mrb[0].mxu0
    %v1254 = vadd.f32 %v1213, %v1253
    %v1255 = vpop.f32.mrb[0].mxu0
    %v1256 = vpop.f32.mrb[0].mxu0
    %v1257 = vadd.f32 %v1216, %v1256
    %v1258 = vpop.f32.mrb[0].mxu0
    %1259 = vdwg.mxu0
    %1260 = vmatprep.subr.bf16.mxu0 0
    %1261 = vmatpush1.bf16.msra.mxu0 %v1130
    %1262 = vmatprep.subr.bf16.mxu0 0
    %1263 = vmatpush1.bf16.msra.mxu0 %v1131
    %1264 = vmatprep.subr.bf16.mxu0 0
    %1265 = vmatpush1.bf16.msra.mxu0 %v1132
    %1266 = vmatprep.subr.bf16.mxu0 0
    %1267 = vmatpush1.bf16.msra.mxu0 %v1133
    %1268 = vmatprep.subr.bf16.mxu0 0
    %1269 = vmatpush1.bf16.msra.mxu0 %v1134
    %1270 = vmatprep.subr.bf16.mxu0 0
    %1271 = vmatpush1.bf16.msra.mxu0 %v1135
    %1272 = vmatprep.subr.bf16.mxu0 0
    %1273 = vmatpush1.bf16.msra.mxu0 %v1136
    %1274 = vmatprep.subr.bf16.mxu0 0
    %1275 = vmatpush1.bf16.msra.mxu0 %v1137
    %1276 = vmatprep.subr.bf16.mxu0 0
    %1277 = vmatpush1.bf16.msra.mxu0 0
    %1278 = vmatprep.subr.bf16.mxu0 0
    %1279 = vmatpush1.bf16.msra.mxu0 0
    %1280 = vmatprep.subr.bf16.mxu0 0
    %1281 = vmatpush1.bf16.msra.mxu0 0
    %1282 = vmatprep.subr.bf16.mxu0 0
    %1283 = vmatpush1.bf16.msra.mxu0 0
    %1284 = vmatprep.subr.bf16.mxu0 0
    %1285 = vmatpush1.bf16.msra.mxu0 0
    %1286 = vmatprep.subr.bf16.mxu0 0
    %1287 = vmatpush1.bf16.msra.mxu0 0
    %1288 = vmatprep.subr.bf16.mxu0 0
    %1289 = vmatpush1.bf16.msra.mxu0 0
    %1290 = vmatprep.subr.bf16.mxu0 0
    %1291 = vmatpush1.bf16.msra.mxu0 0
    %1292 = vmatprep.mubr.bf16.mxu0 0
    %1293 = vmatmul.mubr.bf16.gmra.mrb[0].mxu0 %v932
    %v1294 = vpop.f32.mrb[0].mxu0
    %v1295 = vadd.f32 %v1254, %v1294
    %v1296 = vpop.f32.mrb[0].mxu0
    %v1297 = vpop.f32.mrb[0].mxu0
    %v1298 = vadd.f32 %v1257, %v1297
    %v1299 = vpop.f32.mrb[0].mxu0
    %1300 = vdwg.mxu0
    %v1301 = vld [vmem:[#allocation11] sm:$0x1]
    %v1303 = vlaneseq
    %v1304 = vshrl.u32 %v1303, 7
    %v1305 = vsub.s32 0, %v1304
    %v1306 = vrot.slane %v1301, %v1305
    %v1308 = vadd.f32 %v1295, %v1306
    %v1309 = vadd.f32 %v1298, %v1306
    %v1310 = vmax.f32 %v1308, 0.0
    %v1311 = vmax.f32 %v1309, 0.0
    %v1312 = vpack.c.bf16 %v1310, %v1310
    %v1313 = vpack.c.bf16 %v1311, %v1311
    %v1316 = vunpack.c.l.b16 %v1312
    %v1317 = vunpack.c.l.b16 %v1313
    %v1318 = vpack.c.b16 %v1316, %v1316
    %v1319 = vpack.c.b16 %v1317, %v1317
    %v1320 = vrot.slane %v1318, 7
    %v1321 = vrot.slane %v1320, 4
    %v1322 = vrot.slane %v1319, 7
    %v1323 = vrot.slane %v1322, 4
    %1328 = vst [vmem:[#allocation2] sm:$0xe] %v1320
    %1329 = vst [vmem:[#allocation2 + $0x4] sm:$0x1] %v1321
    %1330 = vst [vmem:[#allocation2 + $0x8] sm:$0xe] %v1322
    %1331 = vst [vmem:[#allocation2 + $0xc] sm:$0x1] %v1323
    %v1332 = vld [vmem:[#allocation2] sm:$0xf]
    %v1333 = vld [vmem:[#allocation2 + $0x4] sm:$0x3]
    %v1334 = vld [vmem:[#allocation2 + $0x8] sm:$0xf]
    %v1335 = vld [vmem:[#allocation2 + $0xc] sm:$0x3]
    %v1340 = vunpack.c.l.b16 %v1332
    %v1341 = vunpack.c.l.b16 %v1333
    %v1342 = vunpack.c.l.b16 %v1334
    %v1343 = vunpack.c.l.b16 %v1335
    %v1344 = vpack.c.b16 %v1341, %v1340
    %v1345 = vpack.c.b16 %v1343, %v1342
    %v1347 = vshrl.u32 %v1344, 16
    %v1349 = vshll.u32 %v1344, 16
    %v1351 = vrot.slane %v1349, 1
    %v1352 = vor.u32 %v1347, %v1351
    %v1354 = vshrl.u32 %v1345, 16
    %v1356 = vshll.u32 %v1345, 16
    %v1358 = vrot.slane %v1356, 1
    %v1359 = vor.u32 %v1354, %v1358
    %v1360 = vrot.slane %v1344, 1
    %v1361 = vrot.slane %v1345, 1
    %v1362 = vrot.slane %v1347, 1
    %v1363 = vrot.slane %v1349, 2
    %v1364 = vor.u32 %v1362, %v1363
    %v1365 = vrot.slane %v1354, 1
    %v1366 = vrot.slane %v1356, 2
    %v1367 = vor.u32 %v1365, %v1366
    %v1368 = vrot.slane %v1344, 2
    %v1369 = vrot.slane %v1345, 2
    %v1370 = vunpack.c.l.b16 %v1352
    %v1371 = vunpack.c.l.b16 %v1360
    %v1372 = vunpack.c.l.b16 %v1364
    %v1373 = vunpack.c.l.b16 %v1368
    %v1374 = vunpack.c.l.b16 %v1359
    %v1375 = vunpack.c.l.b16 %v1361
    %v1376 = vunpack.c.l.b16 %v1367
    %v1377 = vunpack.c.l.b16 %v1369
    %s1378 = scalar_lea.vmem [#allocation9], 320
    %v1379 = vld [vmem:[%s1378] sm:$0xf]
    %v1380 = vld [vmem:[%s1378 + $0x4] sm:$0xf]
    %v1381 = vld [vmem:[%s1378 + $0x8] sm:$0xf]
    %v1382 = vld [vmem:[%s1378 + $0xc] sm:$0xf]
    %v1383 = vld [vmem:[%s1378 + $0x10] sm:$0xf]
    %v1384 = vld [vmem:[%s1378 + $0x14] sm:$0xf]
    %v1385 = vld [vmem:[%s1378 + $0x18] sm:$0xf]
    %v1386 = vld [vmem:[%s1378 + $0x1c] sm:$0xf]
    %v1387 = vld [vmem:[%s1378 + $0x20] sm:$0xf]
    %v1388 = vld [vmem:[%s1378 + $0x24] sm:$0xf]
    %v1389 = vld [vmem:[%s1378 + $0x28] sm:$0xf]
    %v1390 = vld [vmem:[%s1378 + $0x2c] sm:$0xf]
    %v1391 = vld [vmem:[%s1378 + $0x30] sm:$0xf]
    %v1392 = vld [vmem:[%s1378 + $0x34] sm:$0xf]
    %v1393 = vld [vmem:[%s1378 + $0x38] sm:$0xf]
    %v1394 = vld [vmem:[%s1378 + $0x3c] sm:$0xf]
    %v1395 = vld [vmem:[%s1378 + $0x40] sm:$0xf]
    %v1396 = vld [vmem:[%s1378 + $0x44] sm:$0xf]
    %v1397 = vld [vmem:[%s1378 + $0x48] sm:$0xf]
    %v1398 = vld [vmem:[%s1378 + $0x4c] sm:$0xf]
    %v1399 = vld [vmem:[%s1378 + $0x50] sm:$0xf]
    %v1400 = vld [vmem:[%s1378 + $0x54] sm:$0xf]
    %v1401 = vld [vmem:[%s1378 + $0x58] sm:$0xf]
    %v1402 = vld [vmem:[%s1378 + $0x5c] sm:$0xf]
    %v1403 = vld [vmem:[%s1378 + $0x60] sm:$0xf]
    %v1404 = vld [vmem:[%s1378 + $0x64] sm:$0xf]
    %v1405 = vld [vmem:[%s1378 + $0x68] sm:$0xf]
    %v1406 = vld [vmem:[%s1378 + $0x6c] sm:$0xf]
    %v1407 = vld [vmem:[%s1378 + $0x70] sm:$0xf]
    %v1408 = vld [vmem:[%s1378 + $0x74] sm:$0xf]
    %v1409 = vld [vmem:[%s1378 + $0x78] sm:$0xf]
    %v1410 = vld [vmem:[%s1378 + $0x7c] sm:$0xf]
    %v1411 = vld [vmem:[%s1378 + $0x80] sm:$0xf]
    %v1412 = vld [vmem:[%s1378 + $0x84] sm:$0xf]
    %v1413 = vld [vmem:[%s1378 + $0x88] sm:$0xf]
    %v1414 = vld [vmem:[%s1378 + $0x8c] sm:$0xf]
    %v1415 = vld [vmem:[%s1378 + $0x90] sm:$0xf]
    %v1416 = vld [vmem:[%s1378 + $0x94] sm:$0xf]
    %v1417 = vld [vmem:[%s1378 + $0x98] sm:$0xf]
    %v1418 = vld [vmem:[%s1378 + $0x9c] sm:$0xf]
    %v1419 = vld [vmem:[%s1378 + $0xa0] sm:$0xf]
    %v1420 = vld [vmem:[%s1378 + $0xa4] sm:$0xf]
    %v1421 = vld [vmem:[%s1378 + $0xa8] sm:$0xf]
    %v1422 = vld [vmem:[%s1378 + $0xac] sm:$0xf]
    %v1423 = vld [vmem:[%s1378 + $0xb0] sm:$0xf]
    %v1424 = vld [vmem:[%s1378 + $0xb4] sm:$0xf]
    %v1425 = vld [vmem:[%s1378 + $0xb8] sm:$0xf]
    %v1426 = vld [vmem:[%s1378 + $0xbc] sm:$0xf]
    %v1427 = vld [vmem:[%s1378 + $0xc0] sm:$0xf]
    %v1428 = vld [vmem:[%s1378 + $0xc4] sm:$0xf]
    %v1429 = vld [vmem:[%s1378 + $0xc8] sm:$0xf]
    %v1430 = vld [vmem:[%s1378 + $0xcc] sm:$0xf]
    %v1431 = vld [vmem:[%s1378 + $0xd0] sm:$0xf]
    %v1432 = vld [vmem:[%s1378 + $0xd4] sm:$0xf]
    %v1433 = vld [vmem:[%s1378 + $0xd8] sm:$0xf]
    %v1434 = vld [vmem:[%s1378 + $0xdc] sm:$0xf]
    %v1435 = vld [vmem:[%s1378 + $0xe0] sm:$0xf]
    %v1436 = vld [vmem:[%s1378 + $0xe4] sm:$0xf]
    %v1437 = vld [vmem:[%s1378 + $0xe8] sm:$0xf]
    %v1438 = vld [vmem:[%s1378 + $0xec] sm:$0xf]
    %v1439 = vld [vmem:[%s1378 + $0xf0] sm:$0xf]
    %v1440 = vld [vmem:[%s1378 + $0xf4] sm:$0xf]
    %v1441 = vld [vmem:[%s1378 + $0xf8] sm:$0xf]
    %v1442 = vld [vmem:[%s1378 + $0xfc] sm:$0xf]
    %v1443 = vld [vmem:[%s1378 + $0x100] sm:$0xf]
    %v1444 = vld [vmem:[%s1378 + $0x104] sm:$0xf]
    %v1445 = vld [vmem:[%s1378 + $0x108] sm:$0xf]
    %v1446 = vld [vmem:[%s1378 + $0x10c] sm:$0xf]
    %v1447 = vld [vmem:[%s1378 + $0x110] sm:$0xf]
    %v1448 = vld [vmem:[%s1378 + $0x114] sm:$0xf]
    %v1449 = vld [vmem:[%s1378 + $0x118] sm:$0xf]
    %v1450 = vld [vmem:[%s1378 + $0x11c] sm:$0xf]
    %v1451 = vld [vmem:[%s1378 + $0x120] sm:$0xf]
    %v1452 = vld [vmem:[%s1378 + $0x124] sm:$0xf]
    %v1453 = vld [vmem:[%s1378 + $0x128] sm:$0xf]
    %v1454 = vld [vmem:[%s1378 + $0x12c] sm:$0xf]
    %v1455 = vld [vmem:[%s1378 + $0x130] sm:$0xf]
    %v1456 = vld [vmem:[%s1378 + $0x134] sm:$0xf]
    %v1457 = vld [vmem:[%s1378 + $0x138] sm:$0xf]
    %v1458 = vld [vmem:[%s1378 + $0x13c] sm:$0xf]
    %v1459 = vpack.c.b16 %v1342, %v1340
    %v1460 = vpack.c.b16 %v1374, %v1370
    %v1461 = vpack.c.b16 %v1375, %v1371
    %v1462 = vpack.c.b16 %v1376, %v1372
    %v1463 = vpack.c.b16 %v1377, %v1373
    %v1549 = vunpack.c.l.b16 %v1379
    %v1550 = vunpack.c.l.b16 %v1380
    %v1551 = vunpack.c.l.b16 %v1381
    %v1552 = vunpack.c.l.b16 %v1382
    %v1553 = vunpack.c.l.b16 %v1383
    %v1554 = vunpack.c.l.b16 %v1384
    %v1555 = vunpack.c.l.b16 %v1385
    %v1556 = vunpack.c.l.b16 %v1386
    %v1557 = vunpack.c.l.b16 %v1387
    %v1558 = vunpack.c.l.b16 %v1388
    %v1559 = vunpack.c.l.b16 %v1389
    %v1560 = vunpack.c.l.b16 %v1390
    %v1561 = vunpack.c.l.b16 %v1391
    %v1562 = vunpack.c.l.b16 %v1392
    %v1563 = vunpack.c.l.b16 %v1393
    %v1564 = vunpack.c.l.b16 %v1394
    %v1565 = vunpack.c.l.b16 %v1395
    %v1566 = vunpack.c.l.b16 %v1396
    %v1567 = vunpack.c.l.b16 %v1397
    %v1568 = vunpack.c.l.b16 %v1398
    %v1569 = vunpack.c.l.b16 %v1399
    %v1570 = vunpack.c.l.b16 %v1400
    %v1571 = vunpack.c.l.b16 %v1401
    %v1572 = vunpack.c.l.b16 %v1402
    %v1573 = vunpack.c.l.b16 %v1403
    %v1574 = vunpack.c.l.b16 %v1404
    %v1575 = vunpack.c.l.b16 %v1405
    %v1576 = vunpack.c.l.b16 %v1406
    %v1577 = vunpack.c.l.b16 %v1407
    %v1578 = vunpack.c.l.b16 %v1408
    %v1579 = vunpack.c.l.b16 %v1409
    %v1580 = vunpack.c.l.b16 %v1410
    %v1581 = vunpack.c.l.b16 %v1411
    %v1582 = vunpack.c.l.b16 %v1412
    %v1583 = vunpack.c.l.b16 %v1413
    %v1584 = vunpack.c.l.b16 %v1414
    %v1585 = vunpack.c.l.b16 %v1415
    %v1586 = vunpack.c.l.b16 %v1416
    %v1587 = vunpack.c.l.b16 %v1417
    %v1588 = vunpack.c.l.b16 %v1418
    %v1589 = vunpack.c.l.b16 %v1419
    %v1590 = vunpack.c.l.b16 %v1420
    %v1591 = vunpack.c.l.b16 %v1421
    %v1592 = vunpack.c.l.b16 %v1422
    %v1593 = vunpack.c.l.b16 %v1423
    %v1594 = vunpack.c.l.b16 %v1424
    %v1595 = vunpack.c.l.b16 %v1425
    %v1596 = vunpack.c.l.b16 %v1426
    %v1597 = vunpack.c.l.b16 %v1427
    %v1598 = vunpack.c.l.b16 %v1428
    %v1599 = vunpack.c.l.b16 %v1429
    %v1600 = vunpack.c.l.b16 %v1430
    %v1601 = vunpack.c.l.b16 %v1431
    %v1602 = vunpack.c.l.b16 %v1432
    %v1603 = vunpack.c.l.b16 %v1433
    %v1604 = vunpack.c.l.b16 %v1434
    %v1605 = vunpack.c.l.b16 %v1435
    %v1606 = vunpack.c.l.b16 %v1436
    %v1607 = vunpack.c.l.b16 %v1437
    %v1608 = vunpack.c.l.b16 %v1438
    %v1609 = vunpack.c.l.b16 %v1439
    %v1610 = vunpack.c.l.b16 %v1440
    %v1611 = vunpack.c.l.b16 %v1441
    %v1612 = vunpack.c.l.b16 %v1442
    %v1613 = vunpack.c.l.b16 %v1443
    %v1614 = vunpack.c.l.b16 %v1444
    %v1615 = vunpack.c.l.b16 %v1445
    %v1616 = vunpack.c.l.b16 %v1446
    %v1617 = vunpack.c.l.b16 %v1447
    %v1618 = vunpack.c.l.b16 %v1448
    %v1619 = vunpack.c.l.b16 %v1449
    %v1620 = vunpack.c.l.b16 %v1450
    %v1621 = vunpack.c.l.b16 %v1451
    %v1622 = vunpack.c.l.b16 %v1452
    %v1623 = vunpack.c.l.b16 %v1453
    %v1624 = vunpack.c.l.b16 %v1454
    %v1625 = vunpack.c.l.b16 %v1455
    %v1626 = vunpack.c.l.b16 %v1456
    %v1627 = vunpack.c.l.b16 %v1457
    %v1628 = vunpack.c.l.b16 %v1458
    %v1629 = vpack.c.b16 %v1550, %v1549
    %v1630 = vpack.c.b16 %v1552, %v1551
    %v1631 = vpack.c.b16 %v1554, %v1553
    %v1632 = vpack.c.b16 %v1556, %v1555
    %v1633 = vpack.c.b16 %v1558, %v1557
    %v1634 = vpack.c.b16 %v1560, %v1559
    %v1635 = vpack.c.b16 %v1562, %v1561
    %v1636 = vpack.c.b16 %v1564, %v1563
    %v1637 = vpack.c.b16 %v1566, %v1565
    %v1638 = vpack.c.b16 %v1568, %v1567
    %v1639 = vpack.c.b16 %v1570, %v1569
    %v1640 = vpack.c.b16 %v1572, %v1571
    %v1641 = vpack.c.b16 %v1574, %v1573
    %v1642 = vpack.c.b16 %v1576, %v1575
    %v1643 = vpack.c.b16 %v1578, %v1577
    %v1644 = vpack.c.b16 %v1580, %v1579
    %v1645 = vpack.c.b16 %v1582, %v1581
    %v1646 = vpack.c.b16 %v1584, %v1583
    %v1647 = vpack.c.b16 %v1586, %v1585
    %v1648 = vpack.c.b16 %v1588, %v1587
    %v1649 = vpack.c.b16 %v1590, %v1589
    %v1650 = vpack.c.b16 %v1592, %v1591
    %v1651 = vpack.c.b16 %v1594, %v1593
    %v1652 = vpack.c.b16 %v1596, %v1595
    %v1653 = vpack.c.b16 %v1598, %v1597
    %v1654 = vpack.c.b16 %v1600, %v1599
    %v1655 = vpack.c.b16 %v1602, %v1601
    %v1656 = vpack.c.b16 %v1604, %v1603
    %v1657 = vpack.c.b16 %v1606, %v1605
    %v1658 = vpack.c.b16 %v1608, %v1607
    %v1659 = vpack.c.b16 %v1610, %v1609
    %v1660 = vpack.c.b16 %v1612, %v1611
    %v1661 = vpack.c.b16 %v1614, %v1613
    %v1662 = vpack.c.b16 %v1616, %v1615
    %v1663 = vpack.c.b16 %v1618, %v1617
    %v1664 = vpack.c.b16 %v1620, %v1619
    %v1665 = vpack.c.b16 %v1622, %v1621
    %v1666 = vpack.c.b16 %v1624, %v1623
    %v1667 = vpack.c.b16 %v1626, %v1625
    %v1668 = vpack.c.b16 %v1628, %v1627
    %1709 = vmatprep.subr.bf16.mxu0 0
    %1710 = vmatpush1.bf16.msra.mxu0 %v1629
    %1711 = vmatprep.subr.bf16.mxu0 0
    %1712 = vmatpush1.bf16.msra.mxu0 %v1630
    %1713 = vmatprep.subr.bf16.mxu0 0
    %1714 = vmatpush1.bf16.msra.mxu0 %v1631
    %1715 = vmatprep.subr.bf16.mxu0 0
    %1716 = vmatpush1.bf16.msra.mxu0 %v1632
    %1717 = vmatprep.subr.bf16.mxu0 0
    %1718 = vmatpush1.bf16.msra.mxu0 %v1633
    %1719 = vmatprep.subr.bf16.mxu0 0
    %1720 = vmatpush1.bf16.msra.mxu0 %v1634
    %1721 = vmatprep.subr.bf16.mxu0 0
    %1722 = vmatpush1.bf16.msra.mxu0 %v1635
    %1723 = vmatprep.subr.bf16.mxu0 0
    %1724 = vmatpush1.bf16.msra.mxu0 %v1636
    %1725 = vmatprep.subr.bf16.mxu0 0
    %1726 = vmatpush1.bf16.msra.mxu0 %v1637
    %1727 = vmatprep.subr.bf16.mxu0 0
    %1728 = vmatpush1.bf16.msra.mxu0 %v1638
    %1729 = vmatprep.subr.bf16.mxu0 0
    %1730 = vmatpush1.bf16.msra.mxu0 %v1639
    %1731 = vmatprep.subr.bf16.mxu0 0
    %1732 = vmatpush1.bf16.msra.mxu0 %v1640
    %1733 = vmatprep.subr.bf16.mxu0 0
    %1734 = vmatpush1.bf16.msra.mxu0 %v1641
    %1735 = vmatprep.subr.bf16.mxu0 0
    %1736 = vmatpush1.bf16.msra.mxu0 %v1642
    %1737 = vmatprep.subr.bf16.mxu0 0
    %1738 = vmatpush1.bf16.msra.mxu0 %v1643
    %1739 = vmatprep.subr.bf16.mxu0 0
    %1740 = vmatpush1.bf16.msra.mxu0 %v1644
    %1741 = vmatprep.mubr.bf16.mxu0 %v1460
    %1742 = vmatmul.mubr.bf16.gmra.mrb[0].mxu0 %v1459
    %v1743 = vpop.f32.mrb[0].mxu0
    %v1744 = vadd.f32 0.0, %v1743
    %v1745 = vpop.f32.mrb[0].mxu0
    %v1746 = vpop.f32.mrb[0].mxu0
    %v1747 = vadd.f32 0.0, %v1746
    %v1748 = vpop.f32.mrb[0].mxu0
    %1749 = vdwg.mxu0
    %1750 = vmatprep.subr.bf16.mxu0 0
    %1751 = vmatpush1.bf16.msra.mxu0 %v1645
    %1752 = vmatprep.subr.bf16.mxu0 0
    %1753 = vmatpush1.bf16.msra.mxu0 %v1646
    %1754 = vmatprep.subr.bf16.mxu0 0
    %1755 = vmatpush1.bf16.msra.mxu0 %v1647
    %1756 = vmatprep.subr.bf16.mxu0 0
    %1757 = vmatpush1.bf16.msra.mxu0 %v1648
    %1758 = vmatprep.subr.bf16.mxu0 0
    %1759 = vmatpush1.bf16.msra.mxu0 %v1649
    %1760 = vmatprep.subr.bf16.mxu0 0
    %1761 = vmatpush1.bf16.msra.mxu0 %v1650
    %1762 = vmatprep.subr.bf16.mxu0 0
    %1763 = vmatpush1.bf16.msra.mxu0 %v1651
    %1764 = vmatprep.subr.bf16.mxu0 0
    %1765 = vmatpush1.bf16.msra.mxu0 %v1652
    %1766 = vmatprep.subr.bf16.mxu0 0
    %1767 = vmatpush1.bf16.msra.mxu0 %v1653
    %1768 = vmatprep.subr.bf16.mxu0 0
    %1769 = vmatpush1.bf16.msra.mxu0 %v1654
    %1770 = vmatprep.subr.bf16.mxu0 0
    %1771 = vmatpush1.bf16.msra.mxu0 %v1655
    %1772 = vmatprep.subr.bf16.mxu0 0
    %1773 = vmatpush1.bf16.msra.mxu0 %v1656
    %1774 = vmatprep.subr.bf16.mxu0 0
    %1775 = vmatpush1.bf16.msra.mxu0 %v1657
    %1776 = vmatprep.subr.bf16.mxu0 0
    %1777 = vmatpush1.bf16.msra.mxu0 %v1658
    %1778 = vmatprep.subr.bf16.mxu0 0
    %1779 = vmatpush1.bf16.msra.mxu0 %v1659
    %1780 = vmatprep.subr.bf16.mxu0 0
    %1781 = vmatpush1.bf16.msra.mxu0 %v1660
    %1782 = vmatprep.mubr.bf16.mxu0 %v1462
    %1783 = vmatmul.mubr.bf16.gmra.mrb[0].mxu0 %v1461
    %v1784 = vpop.f32.mrb[0].mxu0
    %v1785 = vadd.f32 %v1744, %v1784
    %v1786 = vpop.f32.mrb[0].mxu0
    %v1787 = vpop.f32.mrb[0].mxu0
    %v1788 = vadd.f32 %v1747, %v1787
    %v1789 = vpop.f32.mrb[0].mxu0
    %1790 = vdwg.mxu0
    %1791 = vmatprep.subr.bf16.mxu0 0
    %1792 = vmatpush1.bf16.msra.mxu0 %v1661
    %1793 = vmatprep.subr.bf16.mxu0 0
    %1794 = vmatpush1.bf16.msra.mxu0 %v1662
    %1795 = vmatprep.subr.bf16.mxu0 0
    %1796 = vmatpush1.bf16.msra.mxu0 %v1663
    %1797 = vmatprep.subr.bf16.mxu0 0
    %1798 = vmatpush1.bf16.msra.mxu0 %v1664
    %1799 = vmatprep.subr.bf16.mxu0 0
    %1800 = vmatpush1.bf16.msra.mxu0 %v1665
    %1801 = vmatprep.subr.bf16.mxu0 0
    %1802 = vmatpush1.bf16.msra.mxu0 %v1666
    %1803 = vmatprep.subr.bf16.mxu0 0
    %1804 = vmatpush1.bf16.msra.mxu0 %v1667
    %1805 = vmatprep.subr.bf16.mxu0 0
    %1806 = vmatpush1.bf16.msra.mxu0 %v1668
    %1807 = vmatprep.subr.bf16.mxu0 0
    %1808 = vmatpush1.bf16.msra.mxu0 0
    %1809 = vmatprep.subr.bf16.mxu0 0
    %1810 = vmatpush1.bf16.msra.mxu0 0
    %1811 = vmatprep.subr.bf16.mxu0 0
    %1812 = vmatpush1.bf16.msra.mxu0 0
    %1813 = vmatprep.subr.bf16.mxu0 0
    %1814 = vmatpush1.bf16.msra.mxu0 0
    %1815 = vmatprep.subr.bf16.mxu0 0
    %1816 = vmatpush1.bf16.msra.mxu0 0
    %1817 = vmatprep.subr.bf16.mxu0 0
    %1818 = vmatpush1.bf16.msra.mxu0 0
    %1819 = vmatprep.subr.bf16.mxu0 0
    %1820 = vmatpush1.bf16.msra.mxu0 0
    %1821 = vmatprep.subr.bf16.mxu0 0
    %1822 = vmatpush1.bf16.msra.mxu0 0
    %1823 = vmatprep.mubr.bf16.mxu0 0
    %1824 = vmatmul.mubr.bf16.gmra.mrb[0].mxu0 %v1463
    %v1825 = vpop.f32.mrb[0].mxu0
    %v1826 = vadd.f32 %v1785, %v1825
    %v1827 = vpop.f32.mrb[0].mxu0
    %v1828 = vpop.f32.mrb[0].mxu0
    %v1829 = vadd.f32 %v1788, %v1828
    %v1830 = vpop.f32.mrb[0].mxu0
    %1831 = vdwg.mxu0
    %s1832 = scalar_lea.vmem [#allocation11], 1
    %v1833 = vld [vmem:[%s1832] sm:$0x1]
    %v1835 = vlaneseq
    %v1836 = vshrl.u32 %v1835, 7
    %v1837 = vsub.s32 0, %v1836
    %v1838 = vrot.slane %v1833, %v1837
    %v1840 = vadd.f32 %v1826, %v1838
    %v1841 = vadd.f32 %v1829, %v1838
    %v1842 = vadd.f32 %v774, %v1840
    %v1843 = vadd.f32 %v775, %v1841
    %v1844 = vmax.f32 %v1842, 0.0
    %v1845 = vmax.f32 %v1843, 0.0
    %v1846 = vpack.c.bf16 %v1844, %v1844
    %v1847 = vpack.c.bf16 %v1845, %v1845
    %v1850 = vunpack.c.l.b16 %v1846
    %v1851 = vunpack.c.l.b16 %v1847
    %v1852 = vpack.c.b16 %v1850, %v1850
    %v1853 = vpack.c.b16 %v1851, %v1851
    %v1854 = vrot.slane %v1852, 7
    %v1855 = vrot.slane %v1854, 4
    %v1856 = vrot.slane %v1853, 7
    %v1857 = vrot.slane %v1856, 4
    %1862 = vst [vmem:[#allocation2] sm:$0xe] %v1854
    %1863 = vst [vmem:[#allocation2 + $0x4] sm:$0x1] %v1855
    %1864 = vst [vmem:[#allocation2 + $0x8] sm:$0xe] %v1856
    %1865 = vst [vmem:[#allocation2 + $0xc] sm:$0x1] %v1857
    %v1866 = vld [vmem:[#allocation2] sm:$0xf]
    %v1867 = vld [vmem:[#allocation2 + $0x4] sm:$0x3]
    %v1868 = vld [vmem:[#allocation2 + $0x8] sm:$0xf]
    %v1869 = vld [vmem:[#allocation2 + $0xc] sm:$0x3]
    %v1874 = vunpack.c.l.b16 %v1866
    %v1875 = vunpack.c.l.b16 %v1867
    %v1876 = vunpack.c.l.b16 %v1868
    %v1877 = vunpack.c.l.b16 %v1869
    %v1878 = vpack.c.b16 %v1875, %v1874
    %v1879 = vpack.c.b16 %v1877, %v1876
    %v1881 = vshrl.u32 %v1878, 16
    %v1883 = vshll.u32 %v1878, 16
    %v1885 = vrot.slane %v1883, 1
    %v1886 = vor.u32 %v1881, %v1885
    %v1888 = vshrl.u32 %v1879, 16
    %v1890 = vshll.u32 %v1879, 16
    %v1892 = vrot.slane %v1890, 1
    %v1893 = vor.u32 %v1888, %v1892
    %v1894 = vrot.slane %v1878, 1
    %v1895 = vrot.slane %v1879, 1
    %v1896 = vrot.slane %v1881, 1
    %v1897 = vrot.slane %v1883, 2
    %v1898 = vor.u32 %v1896, %v1897
    %v1899 = vrot.slane %v1888, 1
    %v1900 = vrot.slane %v1890, 2
    %v1901 = vor.u32 %v1899, %v1900
    %v1902 = vrot.slane %v1878, 2
    %v1903 = vrot.slane %v1879, 2
    %v1904 = vunpack.c.l.b16 %v1886
    %v1905 = vunpack.c.l.b16 %v1894
    %v1906 = vunpack.c.l.b16 %v1898
    %v1907 = vunpack.c.l.b16 %v1902
    %v1908 = vunpack.c.l.b16 %v1893
    %v1909 = vunpack.c.l.b16 %v1895
    %v1910 = vunpack.c.l.b16 %v1901
    %v1911 = vunpack.c.l.b16 %v1903
    %s1912 = scalar_lea.vmem [#allocation9], 640
    %v1913 = vld [vmem:[%s1912] sm:$0xf]
    %v1914 = vld [vmem:[%s1912 + $0x4] sm:$0xf]
    %v1915 = vld [vmem:[%s1912 + $0x8] sm:$0xf]
    %v1916 = vld [vmem:[%s1912 + $0xc] sm:$0xf]
    %v1917 = vld [vmem:[%s1912 + $0x10] sm:$0xf]
    %v1918 = vld [vmem:[%s1912 + $0x14] sm:$0xf]
    %v1919 = vld [vmem:[%s1912 + $0x18] sm:$0xf]
    %v1920 = vld [vmem:[%s1912 + $0x1c] sm:$0xf]
    %v1921 = vld [vmem:[%s1912 + $0x20] sm:$0xf]
    %v1922 = vld [vmem:[%s1912 + $0x24] sm:$0xf]
    %v1923 = vld [vmem:[%s1912 + $0x28] sm:$0xf]
    %v1924 = vld [vmem:[%s1912 + $0x2c] sm:$0xf]
    %v1925 = vld [vmem:[%s1912 + $0x30] sm:$0xf]
    %v1926 = vld [vmem:[%s1912 + $0x34] sm:$0xf]
    %v1927 = vld [vmem:[%s1912 + $0x38] sm:$0xf]
    %v1928 = vld [vmem:[%s1912 + $0x3c] sm:$0xf]
    %v1929 = vld [vmem:[%s1912 + $0x40] sm:$0xf]
    %v1930 = vld [vmem:[%s1912 + $0x44] sm:$0xf]
    %v1931 = vld [vmem:[%s1912 + $0x48] sm:$0xf]
    %v1932 = vld [vmem:[%s1912 + $0x4c] sm:$0xf]
    %v1933 = vld [vmem:[%s1912 + $0x50] sm:$0xf]
    %v1934 = vld [vmem:[%s1912 + $0x54] sm:$0xf]
    %v1935 = vld [vmem:[%s1912 + $0x58] sm:$0xf]
    %v1936 = vld [vmem:[%s1912 + $0x5c] sm:$0xf]
    %v1937 = vld [vmem:[%s1912 + $0x60] sm:$0xf]
    %v1938 = vld [vmem:[%s1912 + $0x64] sm:$0xf]
    %v1939 = vld [vmem:[%s1912 + $0x68] sm:$0xf]
    %v1940 = vld [vmem:[%s1912 + $0x6c] sm:$0xf]
    %v1941 = vld [vmem:[%s1912 + $0x70] sm:$0xf]
    %v1942 = vld [vmem:[%s1912 + $0x74] sm:$0xf]
    %v1943 = vld [vmem:[%s1912 + $0x78] sm:$0xf]
    %v1944 = vld [vmem:[%s1912 + $0x7c] sm:$0xf]
    %v1945 = vld [vmem:[%s1912 + $0x80] sm:$0xf]
    %v1946 = vld [vmem:[%s1912 + $0x84] sm:$0xf]
    %v1947 = vld [vmem:[%s1912 + $0x88] sm:$0xf]
    %v1948 = vld [vmem:[%s1912 + $0x8c] sm:$0xf]
    %v1949 = vld [vmem:[%s1912 + $0x90] sm:$0xf]
    %v1950 = vld [vmem:[%s1912 + $0x94] sm:$0xf]
    %v1951 = vld [vmem:[%s1912 + $0x98] sm:$0xf]
    %v1952 = vld [vmem:[%s1912 + $0x9c] sm:$0xf]
    %v1953 = vld [vmem:[%s1912 + $0xa0] sm:$0xf]
    %v1954 = vld [vmem:[%s1912 + $0xa4] sm:$0xf]
    %v1955 = vld [vmem:[%s1912 + $0xa8] sm:$0xf]
    %v1956 = vld [vmem:[%s1912 + $0xac] sm:$0xf]
    %v1957 = vld [vmem:[%s1912 + $0xb0] sm:$0xf]
    %v1958 = vld [vmem:[%s1912 + $0xb4] sm:$0xf]
    %v1959 = vld [vmem:[%s1912 + $0xb8] sm:$0xf]
    %v1960 = vld [vmem:[%s1912 + $0xbc] sm:$0xf]
    %v1961 = vld [vmem:[%s1912 + $0xc0] sm:$0xf]
    %v1962 = vld [vmem:[%s1912 + $0xc4] sm:$0xf]
    %v1963 = vld [vmem:[%s1912 + $0xc8] sm:$0xf]
    %v1964 = vld [vmem:[%s1912 + $0xcc] sm:$0xf]
    %v1965 = vld [vmem:[%s1912 + $0xd0] sm:$0xf]
    %v1966 = vld [vmem:[%s1912 + $0xd4] sm:$0xf]
    %v1967 = vld [vmem:[%s1912 + $0xd8] sm:$0xf]
    %v1968 = vld [vmem:[%s1912 + $0xdc] sm:$0xf]
    %v1969 = vld [vmem:[%s1912 + $0xe0] sm:$0xf]
    %v1970 = vld [vmem:[%s1912 + $0xe4] sm:$0xf]
    %v1971 = vld [vmem:[%s1912 + $0xe8] sm:$0xf]
    %v1972 = vld [vmem:[%s1912 + $0xec] sm:$0xf]
    %v1973 = vld [vmem:[%s1912 + $0xf0] sm:$0xf]
    %v1974 = vld [vmem:[%s1912 + $0xf4] sm:$0xf]
    %v1975 = vld [vmem:[%s1912 + $0xf8] sm:$0xf]
    %v1976 = vld [vmem:[%s1912 + $0xfc] sm:$0xf]
    %v1977 = vld [vmem:[%s1912 + $0x100] sm:$0xf]
    %v1978 = vld [vmem:[%s1912 + $0x104] sm:$0xf]
    %v1979 = vld [vmem:[%s1912 + $0x108] sm:$0xf]
    %v1980 = vld [vmem:[%s1912 + $0x10c] sm:$0xf]
    %v1981 = vld [vmem:[%s1912 + $0x110] sm:$0xf]
    %v1982 = vld [vmem:[%s1912 + $0x114] sm:$0xf]
    %v1983 = vld [vmem:[%s1912 + $0x118] sm:$0xf]
    %v1984 = vld [vmem:[%s1912 + $0x11c] sm:$0xf]
    %v1985 = vld [vmem:[%s1912 + $0x120] sm:$0xf]
    %v1986 = vld [vmem:[%s1912 + $0x124] sm:$0xf]
    %v1987 = vld [vmem:[%s1912 + $0x128] sm:$0xf]
    %v1988 = vld [vmem:[%s1912 + $0x12c] sm:$0xf]
    %v1989 = vld [vmem:[%s1912 + $0x130] sm:$0xf]
    %v1990 = vld [vmem:[%s1912 + $0x134] sm:$0xf]
    %v1991 = vld [vmem:[%s1912 + $0x138] sm:$0xf]
    %v1992 = vld [vmem:[%s1912 + $0x13c] sm:$0xf]
    %v1993 = vpack.c.b16 %v1876, %v1874
    %v1994 = vpack.c.b16 %v1908, %v1904
    %v1995 = vpack.c.b16 %v1909, %v1905
    %v1996 = vpack.c.b16 %v1910, %v1906
    %v1997 = vpack.c.b16 %v1911, %v1907
    %v2083 = vunpack.c.l.b16 %v1913
    %v2084 = vunpack.c.l.b16 %v1914
    %v2085 = vunpack.c.l.b16 %v1915
    %v2086 = vunpack.c.l.b16 %v1916
    %v2087 = vunpack.c.l.b16 %v1917
    %v2088 = vunpack.c.l.b16 %v1918
    %v2089 = vunpack.c.l.b16 %v1919
    %v2090 = vunpack.c.l.b16 %v1920
    %v2091 = vunpack.c.l.b16 %v1921
    %v2092 = vunpack.c.l.b16 %v1922
    %v2093 = vunpack.c.l.b16 %v1923
    %v2094 = vunpack.c.l.b16 %v1924
    %v2095 = vunpack.c.l.b16 %v1925
    %v2096 = vunpack.c.l.b16 %v1926
    %v2097 = vunpack.c.l.b16 %v1927
    %v2098 = vunpack.c.l.b16 %v1928
    %v2099 = vunpack.c.l.b16 %v1929
    %v2100 = vunpack.c.l.b16 %v1930
    %v2101 = vunpack.c.l.b16 %v1931
    %v2102 = vunpack.c.l.b16 %v1932
    %v2103 = vunpack.c.l.b16 %v1933
    %v2104 = vunpack.c.l.b16 %v1934
    %v2105 = vunpack.c.l.b16 %v1935
    %v2106 = vunpack.c.l.b16 %v1936
    %v2107 = vunpack.c.l.b16 %v1937
    %v2108 = vunpack.c.l.b16 %v1938
    %v2109 = vunpack.c.l.b16 %v1939
    %v2110 = vunpack.c.l.b16 %v1940
    %v2111 = vunpack.c.l.b16 %v1941
    %v2112 = vunpack.c.l.b16 %v1942
    %v2113 = vunpack.c.l.b16 %v1943
    %v2114 = vunpack.c.l.b16 %v1944
    %v2115 = vunpack.c.l.b16 %v1945
    %v2116 = vunpack.c.l.b16 %v1946
    %v2117 = vunpack.c.l.b16 %v1947
    %v2118 = vunpack.c.l.b16 %v1948
    %v2119 = vunpack.c.l.b16 %v1949
    %v2120 = vunpack.c.l.b16 %v1950
    %v2121 = vunpack.c.l.b16 %v1951
    %v2122 = vunpack.c.l.b16 %v1952
    %v2123 = vunpack.c.l.b16 %v1953
    %v2124 = vunpack.c.l.b16 %v1954
    %v2125 = vunpack.c.l.b16 %v1955
    %v2126 = vunpack.c.l.b16 %v1956
    %v2127 = vunpack.c.l.b16 %v1957
    %v2128 = vunpack.c.l.b16 %v1958
    %v2129 = vunpack.c.l.b16 %v1959
    %v2130 = vunpack.c.l.b16 %v1960
    %v2131 = vunpack.c.l.b16 %v1961
    %v2132 = vunpack.c.l.b16 %v1962
    %v2133 = vunpack.c.l.b16 %v1963
    %v2134 = vunpack.c.l.b16 %v1964
    %v2135 = vunpack.c.l.b16 %v1965
    %v2136 = vunpack.c.l.b16 %v1966
    %v2137 = vunpack.c.l.b16 %v1967
    %v2138 = vunpack.c.l.b16 %v1968
    %v2139 = vunpack.c.l.b16 %v1969
    %v2140 = vunpack.c.l.b16 %v1970
    %v2141 = vunpack.c.l.b16 %v1971
    %v2142 = vunpack.c.l.b16 %v1972
    %v2143 = vunpack.c.l.b16 %v1973
    %v2144 = vunpack.c.l.b16 %v1974
    %v2145 = vunpack.c.l.b16 %v1975
    %v2146 = vunpack.c.l.b16 %v1976
    %v2147 = vunpack.c.l.b16 %v1977
    %v2148 = vunpack.c.l.b16 %v1978
    %v2149 = vunpack.c.l.b16 %v1979
    %v2150 = vunpack.c.l.b16 %v1980
    %v2151 = vunpack.c.l.b16 %v1981
    %v2152 = vunpack.c.l.b16 %v1982
    %v2153 = vunpack.c.l.b16 %v1983
    %v2154 = vunpack.c.l.b16 %v1984
    %v2155 = vunpack.c.l.b16 %v1985
    %v2156 = vunpack.c.l.b16 %v1986
    %v2157 = vunpack.c.l.b16 %v1987
    %v2158 = vunpack.c.l.b16 %v1988
    %v2159 = vunpack.c.l.b16 %v1989
    %v2160 = vunpack.c.l.b16 %v1990
    %v2161 = vunpack.c.l.b16 %v1991
    %v2162 = vunpack.c.l.b16 %v1992
    %v2163 = vpack.c.b16 %v2084, %v2083
    %v2164 = vpack.c.b16 %v2086, %v2085
    %v2165 = vpack.c.b16 %v2088, %v2087
    %v2166 = vpack.c.b16 %v2090, %v2089
    %v2167 = vpack.c.b16 %v2092, %v2091
    %v2168 = vpack.c.b16 %v2094, %v2093
    %v2169 = vpack.c.b16 %v2096, %v2095
    %v2170 = vpack.c.b16 %v2098, %v2097
    %v2171 = vpack.c.b16 %v2100, %v2099
    %v2172 = vpack.c.b16 %v2102, %v2101
    %v2173 = vpack.c.b16 %v2104, %v2103
    %v2174 = vpack.c.b16 %v2106, %v2105
    %v2175 = vpack.c.b16 %v2108, %v2107
    %v2176 = vpack.c.b16 %v2110, %v2109
    %v2177 = vpack.c.b16 %v2112, %v2111
    %v2178 = vpack.c.b16 %v2114, %v2113
    %v2179 = vpack.c.b16 %v2116, %v2115
    %v2180 = vpack.c.b16 %v2118, %v2117
    %v2181 = vpack.c.b16 %v2120, %v2119
    %v2182 = vpack.c.b16 %v2122, %v2121
    %v2183 = vpack.c.b16 %v2124, %v2123
    %v2184 = vpack.c.b16 %v2126, %v2125
    %v2185 = vpack.c.b16 %v2128, %v2127
    %v2186 = vpack.c.b16 %v2130, %v2129
    %v2187 = vpack.c.b16 %v2132, %v2131
    %v2188 = vpack.c.b16 %v2134, %v2133
    %v2189 = vpack.c.b16 %v2136, %v2135
    %v2190 = vpack.c.b16 %v2138, %v2137
    %v2191 = vpack.c.b16 %v2140, %v2139
    %v2192 = vpack.c.b16 %v2142, %v2141
    %v2193 = vpack.c.b16 %v2144, %v2143
    %v2194 = vpack.c.b16 %v2146, %v2145
    %v2195 = vpack.c.b16 %v2148, %v2147
    %v2196 = vpack.c.b16 %v2150, %v2149
    %v2197 = vpack.c.b16 %v2152, %v2151
    %v2198 = vpack.c.b16 %v2154, %v2153
    %v2199 = vpack.c.b16 %v2156, %v2155
    %v2200 = vpack.c.b16 %v2158, %v2157
    %v2201 = vpack.c.b16 %v2160, %v2159
    %v2202 = vpack.c.b16 %v2162, %v2161
    %2243 = vmatprep.subr.bf16.mxu0 0
    %2244 = vmatpush1.bf16.msra.mxu0 %v2163
    %2245 = vmatprep.subr.bf16.mxu0 0
    %2246 = vmatpush1.bf16.msra.mxu0 %v2164
    %2247 = vmatprep.subr.bf16.mxu0 0
    %2248 = vmatpush1.bf16.msra.mxu0 %v2165
    %2249 = vmatprep.subr.bf16.mxu0 0
    %2250 = vmatpush1.bf16.msra.mxu0 %v2166
    %2251 = vmatprep.subr.bf16.mxu0 0
    %2252 = vmatpush1.bf16.msra.mxu0 %v2167
    %2253 = vmatprep.subr.bf16.mxu0 0
    %2254 = vmatpush1.bf16.msra.mxu0 %v2168
    %2255 = vmatprep.subr.bf16.mxu0 0
    %2256 = vmatpush1.bf16.msra.mxu0 %v2169
    %2257 = vmatprep.subr.bf16.mxu0 0
    %2258 = vmatpush1.bf16.msra.mxu0 %v2170
    %2259 = vmatprep.subr.bf16.mxu0 0
    %2260 = vmatpush1.bf16.msra.mxu0 %v2171
    %2261 = vmatprep.subr.bf16.mxu0 0
    %2262 = vmatpush1.bf16.msra.mxu0 %v2172
    %2263 = vmatprep.subr.bf16.mxu0 0
    %2264 = vmatpush1.bf16.msra.mxu0 %v2173
    %2265 = vmatprep.subr.bf16.mxu0 0
    %2266 = vmatpush1.bf16.msra.mxu0 %v2174
    %2267 = vmatprep.subr.bf16.mxu0 0
    %2268 = vmatpush1.bf16.msra.mxu0 %v2175
    %2269 = vmatprep.subr.bf16.mxu0 0
    %2270 = vmatpush1.bf16.msra.mxu0 %v2176
    %2271 = vmatprep.subr.bf16.mxu0 0
    %2272 = vmatpush1.bf16.msra.mxu0 %v2177
    %2273 = vmatprep.subr.bf16.mxu0 0
    %2274 = vmatpush1.bf16.msra.mxu0 %v2178
    %2275 = vmatprep.mubr.bf16.mxu0 %v1994
    %2276 = vmatmul.mubr.bf16.gmra.mrb[0].mxu0 %v1993
    %v2277 = vpop.f32.mrb[0].mxu0
    %v2278 = vadd.f32 0.0, %v2277
    %v2279 = vpop.f32.mrb[0].mxu0
    %v2280 = vpop.f32.mrb[0].mxu0
    %v2281 = vadd.f32 0.0, %v2280
    %v2282 = vpop.f32.mrb[0].mxu0
    %2283 = vdwg.mxu0
    %2284 = vmatprep.subr.bf16.mxu0 0
    %2285 = vmatpush1.bf16.msra.mxu0 %v2179
    %2286 = vmatprep.subr.bf16.mxu0 0
    %2287 = vmatpush1.bf16.msra.mxu0 %v2180
    %2288 = vmatprep.subr.bf16.mxu0 0
    %2289 = vmatpush1.bf16.msra.mxu0 %v2181
    %2290 = vmatprep.subr.bf16.mxu0 0
    %2291 = vmatpush1.bf16.msra.mxu0 %v2182
    %2292 = vmatprep.subr.bf16.mxu0 0
    %2293 = vmatpush1.bf16.msra.mxu0 %v2183
    %2294 = vmatprep.subr.bf16.mxu0 0
    %2295 = vmatpush1.bf16.msra.mxu0 %v2184
    %2296 = vmatprep.subr.bf16.mxu0 0
    %2297 = vmatpush1.bf16.msra.mxu0 %v2185
    %2298 = vmatprep.subr.bf16.mxu0 0
    %2299 = vmatpush1.bf16.msra.mxu0 %v2186
    %2300 = vmatprep.subr.bf16.mxu0 0
    %2301 = vmatpush1.bf16.msra.mxu0 %v2187
    %2302 = vmatprep.subr.bf16.mxu0 0
    %2303 = vmatpush1.bf16.msra.mxu0 %v2188
    %2304 = vmatprep.subr.bf16.mxu0 0
    %2305 = vmatpush1.bf16.msra.mxu0 %v2189
    %2306 = vmatprep.subr.bf16.mxu0 0
    %2307 = vmatpush1.bf16.msra.mxu0 %v2190
    %2308 = vmatprep.subr.bf16.mxu0 0
    %2309 = vmatpush1.bf16.msra.mxu0 %v2191
    %2310 = vmatprep.subr.bf16.mxu0 0
    %2311 = vmatpush1.bf16.msra.mxu0 %v2192
    %2312 = vmatprep.subr.bf16.mxu0 0
    %2313 = vmatpush1.bf16.msra.mxu0 %v2193
    %2314 = vmatprep.subr.bf16.mxu0 0
    %2315 = vmatpush1.bf16.msra.mxu0 %v2194
    %2316 = vmatprep.mubr.bf16.mxu0 %v1996
    %2317 = vmatmul.mubr.bf16.gmra.mrb[0].mxu0 %v1995
    %v2318 = vpop.f32.mrb[0].mxu0
    %v2319 = vadd.f32 %v2278, %v2318
    %v2320 = vpop.f32.mrb[0].mxu0
    %v2321 = vpop.f32.mrb[0].mxu0
    %v2322 = vadd.f32 %v2281, %v2321
    %v2323 = vpop.f32.mrb[0].mxu0
    %2324 = vdwg.mxu0
    %2325 = vmatprep.subr.bf16.mxu0 0
    %2326 = vmatpush1.bf16.msra.mxu0 %v2195
    %2327 = vmatprep.subr.bf16.mxu0 0
    %2328 = vmatpush1.bf16.msra.mxu0 %v2196
    %2329 = vmatprep.subr.bf16.mxu0 0
    %2330 = vmatpush1.bf16.msra.mxu0 %v2197
    %2331 = vmatprep.subr.bf16.mxu0 0
    %2332 = vmatpush1.bf16.msra.mxu0 %v2198
    %2333 = vmatprep.subr.bf16.mxu0 0
    %2334 = vmatpush1.bf16.msra.mxu0 %v2199
    %2335 = vmatprep.subr.bf16.mxu0 0
    %2336 = vmatpush1.bf16.msra.mxu0 %v2200
    %2337 = vmatprep.subr.bf16.mxu0 0
    %2338 = vmatpush1.bf16.msra.mxu0 %v2201
    %2339 = vmatprep.subr.bf16.mxu0 0
    %2340 = vmatpush1.bf16.msra.mxu0 %v2202
    %2341 = vmatprep.subr.bf16.mxu0 0
    %2342 = vmatpush1.bf16.msra.mxu0 0
    %2343 = vmatprep.subr.bf16.mxu0 0
    %2344 = vmatpush1.bf16.msra.mxu0 0
    %2345 = vmatprep.subr.bf16.mxu0 0
    %2346 = vmatpush1.bf16.msra.mxu0 0
    %2347 = vmatprep.subr.bf16.mxu0 0
    %2348 = vmatpush1.bf16.msra.mxu0 0
    %2349 = vmatprep.subr.bf16.mxu0 0
    %2350 = vmatpush1.bf16.msra.mxu0 0
    %2351 = vmatprep.subr.bf16.mxu0 0
    %2352 = vmatpush1.bf16.msra.mxu0 0
    %2353 = vmatprep.subr.bf16.mxu0 0
    %2354 = vmatpush1.bf16.msra.mxu0 0
    %2355 = vmatprep.subr.bf16.mxu0 0
    %2356 = vmatpush1.bf16.msra.mxu0 0
    %2357 = vmatprep.mubr.bf16.mxu0 0
    %2358 = vmatmul.mubr.bf16.gmra.mrb[0].mxu0 %v1997
    %v2359 = vpop.f32.mrb[0].mxu0
    %v2360 = vadd.f32 %v2319, %v2359
    %v2361 = vpop.f32.mrb[0].mxu0
    %v2362 = vpop.f32.mrb[0].mxu0
    %v2363 = vadd.f32 %v2322, %v2362
    %v2364 = vpop.f32.mrb[0].mxu0
    %2365 = vdwg.mxu0
    %s2366 = scalar_lea.vmem [#allocation11], 2
    %v2367 = vld [vmem:[%s2366] sm:$0x1]
    %v2369 = vlaneseq
    %v2370 = vshrl.u32 %v2369, 7
    %v2371 = vsub.s32 0, %v2370
    %v2372 = vrot.slane %v2367, %v2371
    %v2374 = vadd.f32 %v2360, %v2372
    %v2375 = vadd.f32 %v2363, %v2372
    %v2376 = vmax.f32 %v2374, 0.0
    %v2377 = vmax.f32 %v2375, 0.0
    %v2378 = vpack.c.bf16 %v2376, %v2376
    %v2379 = vpack.c.bf16 %v2377, %v2377
    %v2382 = vunpack.c.l.b16 %v2378
    %v2383 = vunpack.c.l.b16 %v2379
    %v2384 = vpack.c.b16 %v2382, %v2382
    %v2385 = vpack.c.b16 %v2383, %v2383
    %v2386 = vrot.slane %v2384, 7
    %v2387 = vrot.slane %v2386, 4
    %v2388 = vrot.slane %v2385, 7
    %v2389 = vrot.slane %v2388, 4
    %2394 = vst [vmem:[#allocation2] sm:$0xe] %v2386
    %2395 = vst [vmem:[#allocation2 + $0x4] sm:$0x1] %v2387
    %2396 = vst [vmem:[#allocation2 + $0x8] sm:$0xe] %v2388
    %2397 = vst [vmem:[#allocation2 + $0xc] sm:$0x1] %v2389
    %v2398 = vld [vmem:[#allocation2] sm:$0xf]
    %v2399 = vld [vmem:[#allocation2 + $0x4] sm:$0x3]
    %v2400 = vld [vmem:[#allocation2 + $0x8] sm:$0xf]
    %v2401 = vld [vmem:[#allocation2 + $0xc] sm:$0x3]
    %v2406 = vunpack.c.l.b16 %v2398
    %v2407 = vunpack.c.l.b16 %v2399
    %v2408 = vunpack.c.l.b16 %v2400
    %v2409 = vunpack.c.l.b16 %v2401
    %v2410 = vpack.c.b16 %v2407, %v2406
    %v2411 = vpack.c.b16 %v2409, %v2408
    %v2413 = vshrl.u32 %v2410, 16
    %v2415 = vshll.u32 %v2410, 16
    %v2417 = vrot.slane %v2415, 1
    %v2418 = vor.u32 %v2413, %v2417
    %v2420 = vshrl.u32 %v2411, 16
    %v2422 = vshll.u32 %v2411, 16
    %v2424 = vrot.slane %v2422, 1
    %v2425 = vor.u32 %v2420, %v2424
    %v2426 = vrot.slane %v2410, 1
    %v2427 = vrot.slane %v2411, 1
    %v2428 = vrot.slane %v2413, 1
    %v2429 = vrot.slane %v2415, 2
    %v2430 = vor.u32 %v2428, %v2429
    %v2431 = vrot.slane %v2420, 1
    %v2432 = vrot.slane %v2422, 2
    %v2433 = vor.u32 %v2431, %v2432
    %v2434 = vrot.slane %v2410, 2
    %v2435 = vrot.slane %v2411, 2
    %v2436 = vunpack.c.l.b16 %v2418
    %v2437 = vunpack.c.l.b16 %v2426
    %v2438 = vunpack.c.l.b16 %v2430
    %v2439 = vunpack.c.l.b16 %v2434
    %v2440 = vunpack.c.l.b16 %v2425
    %v2441 = vunpack.c.l.b16 %v2427
    %v2442 = vunpack.c.l.b16 %v2433
    %v2443 = vunpack.c.l.b16 %v2435
    %s2444 = scalar_lea.vmem [#allocation9], 960
    %v2445 = vld [vmem:[%s2444] sm:$0xf]
    %v2446 = vld [vmem:[%s2444 + $0x4] sm:$0xf]
    %v2447 = vld [vmem:[%s2444 + $0x8] sm:$0xf]
    %v2448 = vld [vmem:[%s2444 + $0xc] sm:$0xf]
    %v2449 = vld [vmem:[%s2444 + $0x10] sm:$0xf]
    %v2450 = vld [vmem:[%s2444 + $0x14] sm:$0xf]
    %v2451 = vld [vmem:[%s2444 + $0x18] sm:$0xf]
    %v2452 = vld [vmem:[%s2444 + $0x1c] sm:$0xf]
    %v2453 = vld [vmem:[%s2444 + $0x20] sm:$0xf]
    %v2454 = vld [vmem:[%s2444 + $0x24] sm:$0xf]
    %v2455 = vld [vmem:[%s2444 + $0x28] sm:$0xf]
    %v2456 = vld [vmem:[%s2444 + $0x2c] sm:$0xf]
    %v2457 = vld [vmem:[%s2444 + $0x30] sm:$0xf]
    %v2458 = vld [vmem:[%s2444 + $0x34] sm:$0xf]
    %v2459 = vld [vmem:[%s2444 + $0x38] sm:$0xf]
    %v2460 = vld [vmem:[%s2444 + $0x3c] sm:$0xf]
    %v2461 = vld [vmem:[%s2444 + $0x40] sm:$0xf]
    %v2462 = vld [vmem:[%s2444 + $0x44] sm:$0xf]
    %v2463 = vld [vmem:[%s2444 + $0x48] sm:$0xf]
    %v2464 = vld [vmem:[%s2444 + $0x4c] sm:$0xf]
    %v2465 = vld [vmem:[%s2444 + $0x50] sm:$0xf]
    %v2466 = vld [vmem:[%s2444 + $0x54] sm:$0xf]
    %v2467 = vld [vmem:[%s2444 + $0x58] sm:$0xf]
    %v2468 = vld [vmem:[%s2444 + $0x5c] sm:$0xf]
    %v2469 = vld [vmem:[%s2444 + $0x60] sm:$0xf]
    %v2470 = vld [vmem:[%s2444 + $0x64] sm:$0xf]
    %v2471 = vld [vmem:[%s2444 + $0x68] sm:$0xf]
    %v2472 = vld [vmem:[%s2444 + $0x6c] sm:$0xf]
    %v2473 = vld [vmem:[%s2444 + $0x70] sm:$0xf]
    %v2474 = vld [vmem:[%s2444 + $0x74] sm:$0xf]
    %v2475 = vld [vmem:[%s2444 + $0x78] sm:$0xf]
    %v2476 = vld [vmem:[%s2444 + $0x7c] sm:$0xf]
    %v2477 = vld [vmem:[%s2444 + $0x80] sm:$0xf]
    %v2478 = vld [vmem:[%s2444 + $0x84] sm:$0xf]
    %v2479 = vld [vmem:[%s2444 + $0x88] sm:$0xf]
    %v2480 = vld [vmem:[%s2444 + $0x8c] sm:$0xf]
    %v2481 = vld [vmem:[%s2444 + $0x90] sm:$0xf]
    %v2482 = vld [vmem:[%s2444 + $0x94] sm:$0xf]
    %v2483 = vld [vmem:[%s2444 + $0x98] sm:$0xf]
    %v2484 = vld [vmem:[%s2444 + $0x9c] sm:$0xf]
    %v2485 = vld [vmem:[%s2444 + $0xa0] sm:$0xf]
    %v2486 = vld [vmem:[%s2444 + $0xa4] sm:$0xf]
    %v2487 = vld [vmem:[%s2444 + $0xa8] sm:$0xf]
    %v2488 = vld [vmem:[%s2444 + $0xac] sm:$0xf]
    %v2489 = vld [vmem:[%s2444 + $0xb0] sm:$0xf]
    %v2490 = vld [vmem:[%s2444 + $0xb4] sm:$0xf]
    %v2491 = vld [vmem:[%s2444 + $0xb8] sm:$0xf]
    %v2492 = vld [vmem:[%s2444 + $0xbc] sm:$0xf]
    %v2493 = vld [vmem:[%s2444 + $0xc0] sm:$0xf]
    %v2494 = vld [vmem:[%s2444 + $0xc4] sm:$0xf]
    %v2495 = vld [vmem:[%s2444 + $0xc8] sm:$0xf]
    %v2496 = vld [vmem:[%s2444 + $0xcc] sm:$0xf]
    %v2497 = vld [vmem:[%s2444 + $0xd0] sm:$0xf]
    %v2498 = vld [vmem:[%s2444 + $0xd4] sm:$0xf]
    %v2499 = vld [vmem:[%s2444 + $0xd8] sm:$0xf]
    %v2500 = vld [vmem:[%s2444 + $0xdc] sm:$0xf]
    %v2501 = vld [vmem:[%s2444 + $0xe0] sm:$0xf]
    %v2502 = vld [vmem:[%s2444 + $0xe4] sm:$0xf]
    %v2503 = vld [vmem:[%s2444 + $0xe8] sm:$0xf]
    %v2504 = vld [vmem:[%s2444 + $0xec] sm:$0xf]
    %v2505 = vld [vmem:[%s2444 + $0xf0] sm:$0xf]
    %v2506 = vld [vmem:[%s2444 + $0xf4] sm:$0xf]
    %v2507 = vld [vmem:[%s2444 + $0xf8] sm:$0xf]
    %v2508 = vld [vmem:[%s2444 + $0xfc] sm:$0xf]
    %v2509 = vld [vmem:[%s2444 + $0x100] sm:$0xf]
    %v2510 = vld [vmem:[%s2444 + $0x104] sm:$0xf]
    %v2511 = vld [vmem:[%s2444 + $0x108] sm:$0xf]
    %v2512 = vld [vmem:[%s2444 + $0x10c] sm:$0xf]
    %v2513 = vld [vmem:[%s2444 + $0x110] sm:$0xf]
    %v2514 = vld [vmem:[%s2444 + $0x114] sm:$0xf]
    %v2515 = vld [vmem:[%s2444 + $0x118] sm:$0xf]
    %v2516 = vld [vmem:[%s2444 + $0x11c] sm:$0xf]
    %v2517 = vld [vmem:[%s2444 + $0x120] sm:$0xf]
    %v2518 = vld [vmem:[%s2444 + $0x124] sm:$0xf]
    %v2519 = vld [vmem:[%s2444 + $0x128] sm:$0xf]
    %v2520 = vld [vmem:[%s2444 + $0x12c] sm:$0xf]
    %v2521 = vld [vmem:[%s2444 + $0x130] sm:$0xf]
    %v2522 = vld [vmem:[%s2444 + $0x134] sm:$0xf]
    %v2523 = vld [vmem:[%s2444 + $0x138] sm:$0xf]
    %v2524 = vld [vmem:[%s2444 + $0x13c] sm:$0xf]
    %v2525 = vpack.c.b16 %v2408, %v2406
    %v2526 = vpack.c.b16 %v2440, %v2436
    %v2527 = vpack.c.b16 %v2441, %v2437
    %v2528 = vpack.c.b16 %v2442, %v2438
    %v2529 = vpack.c.b16 %v2443, %v2439
    %v2615 = vunpack.c.l.b16 %v2445
    %v2616 = vunpack.c.l.b16 %v2446
    %v2617 = vunpack.c.l.b16 %v2447
    %v2618 = vunpack.c.l.b16 %v2448
    %v2619 = vunpack.c.l.b16 %v2449
    %v2620 = vunpack.c.l.b16 %v2450
    %v2621 = vunpack.c.l.b16 %v2451
    %v2622 = vunpack.c.l.b16 %v2452
    %v2623 = vunpack.c.l.b16 %v2453
    %v2624 = vunpack.c.l.b16 %v2454
    %v2625 = vunpack.c.l.b16 %v2455
    %v2626 = vunpack.c.l.b16 %v2456
    %v2627 = vunpack.c.l.b16 %v2457
    %v2628 = vunpack.c.l.b16 %v2458
    %v2629 = vunpack.c.l.b16 %v2459
    %v2630 = vunpack.c.l.b16 %v2460
    %v2631 = vunpack.c.l.b16 %v2461
    %v2632 = vunpack.c.l.b16 %v2462
    %v2633 = vunpack.c.l.b16 %v2463
    %v2634 = vunpack.c.l.b16 %v2464
    %v2635 = vunpack.c.l.b16 %v2465
    %v2636 = vunpack.c.l.b16 %v2466
    %v2637 = vunpack.c.l.b16 %v2467
    %v2638 = vunpack.c.l.b16 %v2468
    %v2639 = vunpack.c.l.b16 %v2469
    %v2640 = vunpack.c.l.b16 %v2470
    %v2641 = vunpack.c.l.b16 %v2471
    %v2642 = vunpack.c.l.b16 %v2472
    %v2643 = vunpack.c.l.b16 %v2473
    %v2644 = vunpack.c.l.b16 %v2474
    %v2645 = vunpack.c.l.b16 %v2475
    %v2646 = vunpack.c.l.b16 %v2476
    %v2647 = vunpack.c.l.b16 %v2477
    %v2648 = vunpack.c.l.b16 %v2478
    %v2649 = vunpack.c.l.b16 %v2479
    %v2650 = vunpack.c.l.b16 %v2480
    %v2651 = vunpack.c.l.b16 %v2481
    %v2652 = vunpack.c.l.b16 %v2482
    %v2653 = vunpack.c.l.b16 %v2483
    %v2654 = vunpack.c.l.b16 %v2484
    %v2655 = vunpack.c.l.b16 %v2485
    %v2656 = vunpack.c.l.b16 %v2486
    %v2657 = vunpack.c.l.b16 %v2487
    %v2658 = vunpack.c.l.b16 %v2488
    %v2659 = vunpack.c.l.b16 %v2489
    %v2660 = vunpack.c.l.b16 %v2490
    %v2661 = vunpack.c.l.b16 %v2491
    %v2662 = vunpack.c.l.b16 %v2492
    %v2663 = vunpack.c.l.b16 %v2493
    %v2664 = vunpack.c.l.b16 %v2494
    %v2665 = vunpack.c.l.b16 %v2495
    %v2666 = vunpack.c.l.b16 %v2496
    %v2667 = vunpack.c.l.b16 %v2497
    %v2668 = vunpack.c.l.b16 %v2498
    %v2669 = vunpack.c.l.b16 %v2499
    %v2670 = vunpack.c.l.b16 %v2500
    %v2671 = vunpack.c.l.b16 %v2501
    %v2672 = vunpack.c.l.b16 %v2502
    %v2673 = vunpack.c.l.b16 %v2503
    %v2674 = vunpack.c.l.b16 %v2504
    %v2675 = vunpack.c.l.b16 %v2505
    %v2676 = vunpack.c.l.b16 %v2506
    %v2677 = vunpack.c.l.b16 %v2507
    %v2678 = vunpack.c.l.b16 %v2508
    %v2679 = vunpack.c.l.b16 %v2509
    %v2680 = vunpack.c.l.b16 %v2510
    %v2681 = vunpack.c.l.b16 %v2511
    %v2682 = vunpack.c.l.b16 %v2512
    %v2683 = vunpack.c.l.b16 %v2513
    %v2684 = vunpack.c.l.b16 %v2514
    %v2685 = vunpack.c.l.b16 %v2515
    %v2686 = vunpack.c.l.b16 %v2516
    %v2687 = vunpack.c.l.b16 %v2517
    %v2688 = vunpack.c.l.b16 %v2518
    %v2689 = vunpack.c.l.b16 %v2519
    %v2690 = vunpack.c.l.b16 %v2520
    %v2691 = vunpack.c.l.b16 %v2521
    %v2692 = vunpack.c.l.b16 %v2522
    %v2693 = vunpack.c.l.b16 %v2523
    %v2694 = vunpack.c.l.b16 %v2524
    %v2695 = vpack.c.b16 %v2616, %v2615
    %v2696 = vpack.c.b16 %v2618, %v2617
    %v2697 = vpack.c.b16 %v2620, %v2619
    %v2698 = vpack.c.b16 %v2622, %v2621
    %v2699 = vpack.c.b16 %v2624, %v2623
    %v2700 = vpack.c.b16 %v2626, %v2625
    %v2701 = vpack.c.b16 %v2628, %v2627
    %v2702 = vpack.c.b16 %v2630, %v2629
    %v2703 = vpack.c.b16 %v2632, %v2631
    %v2704 = vpack.c.b16 %v2634, %v2633
    %v2705 = vpack.c.b16 %v2636, %v2635
    %v2706 = vpack.c.b16 %v2638, %v2637
    %v2707 = vpack.c.b16 %v2640, %v2639
    %v2708 = vpack.c.b16 %v2642, %v2641
    %v2709 = vpack.c.b16 %v2644, %v2643
    %v2710 = vpack.c.b16 %v2646, %v2645
    %v2711 = vpack.c.b16 %v2648, %v2647
    %v2712 = vpack.c.b16 %v2650, %v2649
    %v2713 = vpack.c.b16 %v2652, %v2651
    %v2714 = vpack.c.b16 %v2654, %v2653
    %v2715 = vpack.c.b16 %v2656, %v2655
    %v2716 = vpack.c.b16 %v2658, %v2657
    %v2717 = vpack.c.b16 %v2660, %v2659
    %v2718 = vpack.c.b16 %v2662, %v2661
    %v2719 = vpack.c.b16 %v2664, %v2663
    %v2720 = vpack.c.b16 %v2666, %v2665
    %v2721 = vpack.c.b16 %v2668, %v2667
    %v2722 = vpack.c.b16 %v2670, %v2669
    %v2723 = vpack.c.b16 %v2672, %v2671
    %v2724 = vpack.c.b16 %v2674, %v2673
    %v2725 = vpack.c.b16 %v2676, %v2675
    %v2726 = vpack.c.b16 %v2678, %v2677
    %v2727 = vpack.c.b16 %v2680, %v2679
    %v2728 = vpack.c.b16 %v2682, %v2681
    %v2729 = vpack.c.b16 %v2684, %v2683
    %v2730 = vpack.c.b16 %v2686, %v2685
    %v2731 = vpack.c.b16 %v2688, %v2687
    %v2732 = vpack.c.b16 %v2690, %v2689
    %v2733 = vpack.c.b16 %v2692, %v2691
    %v2734 = vpack.c.b16 %v2694, %v2693
    %2775 = vmatprep.subr.bf16.mxu0 0
    %2776 = vmatpush1.bf16.msra.mxu0 %v2695
    %2777 = vmatprep.subr.bf16.mxu0 0
    %2778 = vmatpush1.bf16.msra.mxu0 %v2696
    %2779 = vmatprep.subr.bf16.mxu0 0
    %2780 = vmatpush1.bf16.msra.mxu0 %v2697
    %2781 = vmatprep.subr.bf16.mxu0 0
    %2782 = vmatpush1.bf16.msra.mxu0 %v2698
    %2783 = vmatprep.subr.bf16.mxu0 0
    %2784 = vmatpush1.bf16.msra.mxu0 %v2699
    %2785 = vmatprep.subr.bf16.mxu0 0
    %2786 = vmatpush1.bf16.msra.mxu0 %v2700
    %2787 = vmatprep.subr.bf16.mxu0 0
    %2788 = vmatpush1.bf16.msra.mxu0 %v2701
    %2789 = vmatprep.subr.bf16.mxu0 0
    %2790 = vmatpush1.bf16.msra.mxu0 %v2702
    %2791 = vmatprep.subr.bf16.mxu0 0
    %2792 = vmatpush1.bf16.msra.mxu0 %v2703
    %2793 = vmatprep.subr.bf16.mxu0 0
    %2794 = vmatpush1.bf16.msra.mxu0 %v2704
    %2795 = vmatprep.subr.bf16.mxu0 0
    %2796 = vmatpush1.bf16.msra.mxu0 %v2705
    %2797 = vmatprep.subr.bf16.mxu0 0
    %2798 = vmatpush1.bf16.msra.mxu0 %v2706
    %2799 = vmatprep.subr.bf16.mxu0 0
    %2800 = vmatpush1.bf16.msra.mxu0 %v2707
    %2801 = vmatprep.subr.bf16.mxu0 0
    %2802 = vmatpush1.bf16.msra.mxu0 %v2708
    %2803 = vmatprep.subr.bf16.mxu0 0
    %2804 = vmatpush1.bf16.msra.mxu0 %v2709
    %2805 = vmatprep.subr.bf16.mxu0 0
    %2806 = vmatpush1.bf16.msra.mxu0 %v2710
    %2807 = vmatprep.mubr.bf16.mxu0 %v2526
    %2808 = vmatmul.mubr.bf16.gmra.mrb[0].mxu0 %v2525
    %v2809 = vpop.f32.mrb[0].mxu0
    %v2810 = vadd.f32 0.0, %v2809
    %v2811 = vpop.f32.mrb[0].mxu0
    %v2812 = vpop.f32.mrb[0].mxu0
    %v2813 = vadd.f32 0.0, %v2812
    %v2814 = vpop.f32.mrb[0].mxu0
    %2815 = vdwg.mxu0
    %2816 = vmatprep.subr.bf16.mxu0 0
    %2817 = vmatpush1.bf16.msra.mxu0 %v2711
    %2818 = vmatprep.subr.bf16.mxu0 0
    %2819 = vmatpush1.bf16.msra.mxu0 %v2712
    %2820 = vmatprep.subr.bf16.mxu0 0
    %2821 = vmatpush1.bf16.msra.mxu0 %v2713
    %2822 = vmatprep.subr.bf16.mxu0 0
    %2823 = vmatpush1.bf16.msra.mxu0 %v2714
    %2824 = vmatprep.subr.bf16.mxu0 0
    %2825 = vmatpush1.bf16.msra.mxu0 %v2715
    %2826 = vmatprep.subr.bf16.mxu0 0
    %2827 = vmatpush1.bf16.msra.mxu0 %v2716
    %2828 = vmatprep.subr.bf16.mxu0 0
    %2829 = vmatpush1.bf16.msra.mxu0 %v2717
    %2830 = vmatprep.subr.bf16.mxu0 0
    %2831 = vmatpush1.bf16.msra.mxu0 %v2718
    %2832 = vmatprep.subr.bf16.mxu0 0
    %2833 = vmatpush1.bf16.msra.mxu0 %v2719
    %2834 = vmatprep.subr.bf16.mxu0 0
    %2835 = vmatpush1.bf16.msra.mxu0 %v2720
    %2836 = vmatprep.subr.bf16.mxu0 0
    %2837 = vmatpush1.bf16.msra.mxu0 %v2721
    %2838 = vmatprep.subr.bf16.mxu0 0
    %2839 = vmatpush1.bf16.msra.mxu0 %v2722
    %2840 = vmatprep.subr.bf16.mxu0 0
    %2841 = vmatpush1.bf16.msra.mxu0 %v2723
    %2842 = vmatprep.subr.bf16.mxu0 0
    %2843 = vmatpush1.bf16.msra.mxu0 %v2724
    %2844 = vmatprep.subr.bf16.mxu0 0
    %2845 = vmatpush1.bf16.msra.mxu0 %v2725
    %2846 = vmatprep.subr.bf16.mxu0 0
    %2847 = vmatpush1.bf16.msra.mxu0 %v2726
    %2848 = vmatprep.mubr.bf16.mxu0 %v2528
    %2849 = vmatmul.mubr.bf16.gmra.mrb[0].mxu0 %v2527
    %v2850 = vpop.f32.mrb[0].mxu0
    %v2851 = vadd.f32 %v2810, %v2850
    %v2852 = vpop.f32.mrb[0].mxu0
    %v2853 = vpop.f32.mrb[0].mxu0
    %v2854 = vadd.f32 %v2813, %v2853
    %v2855 = vpop.f32.mrb[0].mxu0
    %2856 = vdwg.mxu0
    %2857 = vmatprep.subr.bf16.mxu0 0
    %2858 = vmatpush1.bf16.msra.mxu0 %v2727
    %2859 = vmatprep.subr.bf16.mxu0 0
    %2860 = vmatpush1.bf16.msra.mxu0 %v2728
    %2861 = vmatprep.subr.bf16.mxu0 0
    %2862 = vmatpush1.bf16.msra.mxu0 %v2729
    %2863 = vmatprep.subr.bf16.mxu0 0
    %2864 = vmatpush1.bf16.msra.mxu0 %v2730
    %2865 = vmatprep.subr.bf16.mxu0 0
    %2866 = vmatpush1.bf16.msra.mxu0 %v2731
    %2867 = vmatprep.subr.bf16.mxu0 0
    %2868 = vmatpush1.bf16.msra.mxu0 %v2732
    %2869 = vmatprep.subr.bf16.mxu0 0
    %2870 = vmatpush1.bf16.msra.mxu0 %v2733
    %2871 = vmatprep.subr.bf16.mxu0 0
    %2872 = vmatpush1.bf16.msra.mxu0 %v2734
    %2873 = vmatprep.subr.bf16.mxu0 0
    %2874 = vmatpush1.bf16.msra.mxu0 0
    %2875 = vmatprep.subr.bf16.mxu0 0
    %2876 = vmatpush1.bf16.msra.mxu0 0
    %2877 = vmatprep.subr.bf16.mxu0 0
    %2878 = vmatpush1.bf16.msra.mxu0 0
    %2879 = vmatprep.subr.bf16.mxu0 0
    %2880 = vmatpush1.bf16.msra.mxu0 0
    %2881 = vmatprep.subr.bf16.mxu0 0
    %2882 = vmatpush1.bf16.msra.mxu0 0
    %2883 = vmatprep.subr.bf16.mxu0 0
    %2884 = vmatpush1.bf16.msra.mxu0 0
    %2885 = vmatprep.subr.bf16.mxu0 0
    %2886 = vmatpush1.bf16.msra.mxu0 0
    %2887 = vmatprep.subr.bf16.mxu0 0
    %2888 = vmatpush1.bf16.msra.mxu0 0
    %2889 = vmatprep.mubr.bf16.mxu0 0
    %2890 = vmatmul.mubr.bf16.gmra.mrb[0].mxu0 %v2529
    %v2891 = vpop.f32.mrb[0].mxu0
    %v2892 = vadd.f32 %v2851, %v2891
    %v2893 = vpop.f32.mrb[0].mxu0
    %v2894 = vpop.f32.mrb[0].mxu0
    %v2895 = vadd.f32 %v2854, %v2894
    %v2896 = vpop.f32.mrb[0].mxu0
    %2897 = vdwg.mxu0
    %s2898 = scalar_lea.vmem [#allocation11], 3
    %v2899 = vld [vmem:[%s2898] sm:$0x1]
    %v2901 = vlaneseq
    %v2902 = vshrl.u32 %v2901, 7
    %v2903 = vsub.s32 0, %v2902
    %v2904 = vrot.slane %v2899, %v2903
    %v2906 = vadd.f32 %v2892, %v2904
    %v2907 = vadd.f32 %v2895, %v2904
    %v2908 = vadd.f32 %v1842, %v2906
    %v2909 = vadd.f32 %v1843, %v2907
    %v2910 = vmax.f32 %v2908, 0.0
    %v2911 = vmax.f32 %v2909, 0.0
    %v2912 = vpack.c.bf16 %v2910, %v2910
    %v2913 = vpack.c.bf16 %v2911, %v2911
    %v2916 = vunpack.c.l.b16 %v2912
    %v2917 = vunpack.c.l.b16 %v2913
    %v2918 = vpack.c.b16 %v2916, %v2916
    %v2919 = vpack.c.b16 %v2917, %v2917
    %v2920 = vrot.slane %v2918, 7
    %v2921 = vrot.slane %v2920, 4
    %v2922 = vrot.slane %v2919, 7
    %v2923 = vrot.slane %v2922, 4
    %2928 = vst [vmem:[#allocation2] sm:$0xe] %v2920
    %2929 = vst [vmem:[#allocation2 + $0x4] sm:$0x1] %v2921
    %2930 = vst [vmem:[#allocation2 + $0x8] sm:$0xe] %v2922
    %2931 = vst [vmem:[#allocation2 + $0xc] sm:$0x1] %v2923
    %v2932 = vld [vmem:[#allocation2] sm:$0xf]
    %v2933 = vld [vmem:[#allocation2 + $0x4] sm:$0x3]
    %v2934 = vld [vmem:[#allocation2 + $0x8] sm:$0xf]
    %v2935 = vld [vmem:[#allocation2 + $0xc] sm:$0x3]
    %v2940 = vunpack.c.l.b16 %v2932
    %v2941 = vunpack.c.l.b16 %v2933
    %v2942 = vunpack.c.l.b16 %v2934
    %v2943 = vunpack.c.l.b16 %v2935
    %v2944 = vpack.c.b16 %v2941, %v2940
    %v2945 = vpack.c.b16 %v2943, %v2942
    %v2947 = vshrl.u32 %v2944, 16
    %v2949 = vshll.u32 %v2944, 16
    %v2951 = vrot.slane %v2949, 1
    %v2952 = vor.u32 %v2947, %v2951
    %v2954 = vshrl.u32 %v2945, 16
    %v2956 = vshll.u32 %v2945, 16
    %v2958 = vrot.slane %v2956, 1
    %v2959 = vor.u32 %v2954, %v2958
    %v2960 = vrot.slane %v2944, 1
    %v2961 = vrot.slane %v2945, 1
    %v2962 = vrot.slane %v2947, 1
    %v2963 = vrot.slane %v2949, 2
    %v2964 = vor.u32 %v2962, %v2963
    %v2965 = vrot.slane %v2954, 1
    %v2966 = vrot.slane %v2956, 2
    %v2967 = vor.u32 %v2965, %v2966
    %v2968 = vrot.slane %v2944, 2
    %v2969 = vrot.slane %v2945, 2
    %v2970 = vunpack.c.l.b16 %v2952
    %v2971 = vunpack.c.l.b16 %v2960
    %v2972 = vunpack.c.l.b16 %v2964
    %v2973 = vunpack.c.l.b16 %v2968
    %v2974 = vunpack.c.l.b16 %v2959
    %v2975 = vunpack.c.l.b16 %v2961
    %v2976 = vunpack.c.l.b16 %v2967
    %v2977 = vunpack.c.l.b16 %v2969
    %s2978 = scalar_lea.vmem [#allocation9], 1280
    %v2979 = vld [vmem:[%s2978] sm:$0xf]
    %v2980 = vld [vmem:[%s2978 + $0x4] sm:$0xf]
    %v2981 = vld [vmem:[%s2978 + $0x8] sm:$0xf]
    %v2982 = vld [vmem:[%s2978 + $0xc] sm:$0xf]
    %v2983 = vld [vmem:[%s2978 + $0x10] sm:$0xf]
    %v2984 = vld [vmem:[%s2978 + $0x14] sm:$0xf]
    %v2985 = vld [vmem:[%s2978 + $0x18] sm:$0xf]
    %v2986 = vld [vmem:[%s2978 + $0x1c] sm:$0xf]
    %v2987 = vld [vmem:[%s2978 + $0x20] sm:$0xf]
    %v2988 = vld [vmem:[%s2978 + $0x24] sm:$0xf]
    %v2989 = vld [vmem:[%s2978 + $0x28] sm:$0xf]
    %v2990 = vld [vmem:[%s2978 + $0x2c] sm:$0xf]
    %v2991 = vld [vmem:[%s2978 + $0x30] sm:$0xf]
    %v2992 = vld [vmem:[%s2978 + $0x34] sm:$0xf]
    %v2993 = vld [vmem:[%s2978 + $0x38] sm:$0xf]
    %v2994 = vld [vmem:[%s2978 + $0x3c] sm:$0xf]
    %v2995 = vld [vmem:[%s2978 + $0x40] sm:$0xf]
    %v2996 = vld [vmem:[%s2978 + $0x44] sm:$0xf]
    %v2997 = vld [vmem:[%s2978 + $0x48] sm:$0xf]
    %v2998 = vld [vmem:[%s2978 + $0x4c] sm:$0xf]
    %v2999 = vld [vmem:[%s2978 + $0x50] sm:$0xf]
    %v3000 = vld [vmem:[%s2978 + $0x54] sm:$0xf]
    %v3001 = vld [vmem:[%s2978 + $0x58] sm:$0xf]
    %v3002 = vld [vmem:[%s2978 + $0x5c] sm:$0xf]
    %v3003 = vld [vmem:[%s2978 + $0x60] sm:$0xf]
    %v3004 = vld [vmem:[%s2978 + $0x64] sm:$0xf]
    %v3005 = vld [vmem:[%s2978 + $0x68] sm:$0xf]
    %v3006 = vld [vmem:[%s2978 + $0x6c] sm:$0xf]
    %v3007 = vld [vmem:[%s2978 + $0x70] sm:$0xf]
    %v3008 = vld [vmem:[%s2978 + $0x74] sm:$0xf]
    %v3009 = vld [vmem:[%s2978 + $0x78] sm:$0xf]
    %v3010 = vld [vmem:[%s2978 + $0x7c] sm:$0xf]
    %v3011 = vld [vmem:[%s2978 + $0x80] sm:$0xf]
    %v3012 = vld [vmem:[%s2978 + $0x84] sm:$0xf]
    %v3013 = vld [vmem:[%s2978 + $0x88] sm:$0xf]
    %v3014 = vld [vmem:[%s2978 + $0x8c] sm:$0xf]
    %v3015 = vld [vmem:[%s2978 + $0x90] sm:$0xf]
    %v3016 = vld [vmem:[%s2978 + $0x94] sm:$0xf]
    %v3017 = vld [vmem:[%s2978 + $0x98] sm:$0xf]
    %v3018 = vld [vmem:[%s2978 + $0x9c] sm:$0xf]
    %v3019 = vld [vmem:[%s2978 + $0xa0] sm:$0xf]
    %v3020 = vld [vmem:[%s2978 + $0xa4] sm:$0xf]
    %v3021 = vld [vmem:[%s2978 + $0xa8] sm:$0xf]
    %v3022 = vld [vmem:[%s2978 + $0xac] sm:$0xf]
    %v3023 = vld [vmem:[%s2978 + $0xb0] sm:$0xf]
    %v3024 = vld [vmem:[%s2978 + $0xb4] sm:$0xf]
    %v3025 = vld [vmem:[%s2978 + $0xb8] sm:$0xf]
    %v3026 = vld [vmem:[%s2978 + $0xbc] sm:$0xf]
    %v3027 = vld [vmem:[%s2978 + $0xc0] sm:$0xf]
    %v3028 = vld [vmem:[%s2978 + $0xc4] sm:$0xf]
    %v3029 = vld [vmem:[%s2978 + $0xc8] sm:$0xf]
    %v3030 = vld [vmem:[%s2978 + $0xcc] sm:$0xf]
    %v3031 = vld [vmem:[%s2978 + $0xd0] sm:$0xf]
    %v3032 = vld [vmem:[%s2978 + $0xd4] sm:$0xf]
    %v3033 = vld [vmem:[%s2978 + $0xd8] sm:$0xf]
    %v3034 = vld [vmem:[%s2978 + $0xdc] sm:$0xf]
    %v3035 = vld [vmem:[%s2978 + $0xe0] sm:$0xf]
    %v3036 = vld [vmem:[%s2978 + $0xe4] sm:$0xf]
    %v3037 = vld [vmem:[%s2978 + $0xe8] sm:$0xf]
    %v3038 = vld [vmem:[%s2978 + $0xec] sm:$0xf]
    %v3039 = vld [vmem:[%s2978 + $0xf0] sm:$0xf]
    %v3040 = vld [vmem:[%s2978 + $0xf4] sm:$0xf]
    %v3041 = vld [vmem:[%s2978 + $0xf8] sm:$0xf]
    %v3042 = vld [vmem:[%s2978 + $0xfc] sm:$0xf]
    %v3043 = vld [vmem:[%s2978 + $0x100] sm:$0xf]
    %v3044 = vld [vmem:[%s2978 + $0x104] sm:$0xf]
    %v3045 = vld [vmem:[%s2978 + $0x108] sm:$0xf]
    %v3046 = vld [vmem:[%s2978 + $0x10c] sm:$0xf]
    %v3047 = vld [vmem:[%s2978 + $0x110] sm:$0xf]
    %v3048 = vld [vmem:[%s2978 + $0x114] sm:$0xf]
    %v3049 = vld [vmem:[%s2978 + $0x118] sm:$0xf]
    %v3050 = vld [vmem:[%s2978 + $0x11c] sm:$0xf]
    %v3051 = vld [vmem:[%s2978 + $0x120] sm:$0xf]
    %v3052 = vld [vmem:[%s2978 + $0x124] sm:$0xf]
    %v3053 = vld [vmem:[%s2978 + $0x128] sm:$0xf]
    %v3054 = vld [vmem:[%s2978 + $0x12c] sm:$0xf]
    %v3055 = vld [vmem:[%s2978 + $0x130] sm:$0xf]
    %v3056 = vld [vmem:[%s2978 + $0x134] sm:$0xf]
    %v3057 = vld [vmem:[%s2978 + $0x138] sm:$0xf]
    %v3058 = vld [vmem:[%s2978 + $0x13c] sm:$0xf]
    %v3059 = vpack.c.b16 %v2942, %v2940
    %v3060 = vpack.c.b16 %v2974, %v2970
    %v3061 = vpack.c.b16 %v2975, %v2971
    %v3062 = vpack.c.b16 %v2976, %v2972
    %v3063 = vpack.c.b16 %v2977, %v2973
    %v3149 = vunpack.c.l.b16 %v2979
    %v3150 = vunpack.c.l.b16 %v2980
    %v3151 = vunpack.c.l.b16 %v2981
    %v3152 = vunpack.c.l.b16 %v2982
    %v3153 = vunpack.c.l.b16 %v2983
    %v3154 = vunpack.c.l.b16 %v2984
    %v3155 = vunpack.c.l.b16 %v2985
    %v3156 = vunpack.c.l.b16 %v2986
    %v3157 = vunpack.c.l.b16 %v2987
    %v3158 = vunpack.c.l.b16 %v2988
    %v3159 = vunpack.c.l.b16 %v2989
    %v3160 = vunpack.c.l.b16 %v2990
    %v3161 = vunpack.c.l.b16 %v2991
    %v3162 = vunpack.c.l.b16 %v2992
    %v3163 = vunpack.c.l.b16 %v2993
    %v3164 = vunpack.c.l.b16 %v2994
    %v3165 = vunpack.c.l.b16 %v2995
    %v3166 = vunpack.c.l.b16 %v2996
    %v3167 = vunpack.c.l.b16 %v2997
    %v3168 = vunpack.c.l.b16 %v2998
    %v3169 = vunpack.c.l.b16 %v2999
    %v3170 = vunpack.c.l.b16 %v3000
    %v3171 = vunpack.c.l.b16 %v3001
    %v3172 = vunpack.c.l.b16 %v3002
    %v3173 = vunpack.c.l.b16 %v3003
    %v3174 = vunpack.c.l.b16 %v3004
    %v3175 = vunpack.c.l.b16 %v3005
    %v3176 = vunpack.c.l.b16 %v3006
    %v3177 = vunpack.c.l.b16 %v3007
    %v3178 = vunpack.c.l.b16 %v3008
    %v3179 = vunpack.c.l.b16 %v3009
    %v3180 = vunpack.c.l.b16 %v3010
    %v3181 = vunpack.c.l.b16 %v3011
    %v3182 = vunpack.c.l.b16 %v3012
    %v3183 = vunpack.c.l.b16 %v3013
    %v3184 = vunpack.c.l.b16 %v3014
    %v3185 = vunpack.c.l.b16 %v3015
    %v3186 = vunpack.c.l.b16 %v3016
    %v3187 = vunpack.c.l.b16 %v3017
    %v3188 = vunpack.c.l.b16 %v3018
    %v3189 = vunpack.c.l.b16 %v3019
    %v3190 = vunpack.c.l.b16 %v3020
    %v3191 = vunpack.c.l.b16 %v3021
    %v3192 = vunpack.c.l.b16 %v3022
    %v3193 = vunpack.c.l.b16 %v3023
    %v3194 = vunpack.c.l.b16 %v3024
    %v3195 = vunpack.c.l.b16 %v3025
    %v3196 = vunpack.c.l.b16 %v3026
    %v3197 = vunpack.c.l.b16 %v3027
    %v3198 = vunpack.c.l.b16 %v3028
    %v3199 = vunpack.c.l.b16 %v3029
    %v3200 = vunpack.c.l.b16 %v3030
    %v3201 = vunpack.c.l.b16 %v3031
    %v3202 = vunpack.c.l.b16 %v3032
    %v3203 = vunpack.c.l.b16 %v3033
    %v3204 = vunpack.c.l.b16 %v3034
    %v3205 = vunpack.c.l.b16 %v3035
    %v3206 = vunpack.c.l.b16 %v3036
    %v3207 = vunpack.c.l.b16 %v3037
    %v3208 = vunpack.c.l.b16 %v3038
    %v3209 = vunpack.c.l.b16 %v3039
    %v3210 = vunpack.c.l.b16 %v3040
    %v3211 = vunpack.c.l.b16 %v3041
    %v3212 = vunpack.c.l.b16 %v3042
    %v3213 = vunpack.c.l.b16 %v3043
    %v3214 = vunpack.c.l.b16 %v3044
    %v3215 = vunpack.c.l.b16 %v3045
    %v3216 = vunpack.c.l.b16 %v3046
    %v3217 = vunpack.c.l.b16 %v3047
    %v3218 = vunpack.c.l.b16 %v3048
    %v3219 = vunpack.c.l.b16 %v3049
    %v3220 = vunpack.c.l.b16 %v3050
    %v3221 = vunpack.c.l.b16 %v3051
    %v3222 = vunpack.c.l.b16 %v3052
    %v3223 = vunpack.c.l.b16 %v3053
    %v3224 = vunpack.c.l.b16 %v3054
    %v3225 = vunpack.c.l.b16 %v3055
    %v3226 = vunpack.c.l.b16 %v3056
    %v3227 = vunpack.c.l.b16 %v3057
    %v3228 = vunpack.c.l.b16 %v3058
    %v3229 = vpack.c.b16 %v3150, %v3149
    %v3230 = vpack.c.b16 %v3152, %v3151
    %v3231 = vpack.c.b16 %v3154, %v3153
    %v3232 = vpack.c.b16 %v3156, %v3155
    %v3233 = vpack.c.b16 %v3158, %v3157
    %v3234 = vpack.c.b16 %v3160, %v3159
    %v3235 = vpack.c.b16 %v3162, %v3161
    %v3236 = vpack.c.b16 %v3164, %v3163
    %v3237 = vpack.c.b16 %v3166, %v3165
    %v3238 = vpack.c.b16 %v3168, %v3167
    %v3239 = vpack.c.b16 %v3170, %v3169
    %v3240 = vpack.c.b16 %v3172, %v3171
    %v3241 = vpack.c.b16 %v3174, %v3173
    %v3242 = vpack.c.b16 %v3176, %v3175
    %v3243 = vpack.c.b16 %v3178, %v3177
    %v3244 = vpack.c.b16 %v3180, %v3179
    %v3245 = vpack.c.b16 %v3182, %v3181
    %v3246 = vpack.c.b16 %v3184, %v3183
    %v3247 = vpack.c.b16 %v3186, %v3185
    %v3248 = vpack.c.b16 %v3188, %v3187
    %v3249 = vpack.c.b16 %v3190, %v3189
    %v3250 = vpack.c.b16 %v3192, %v3191
    %v3251 = vpack.c.b16 %v3194, %v3193
    %v3252 = vpack.c.b16 %v3196, %v3195
    %v3253 = vpack.c.b16 %v3198, %v3197
    %v3254 = vpack.c.b16 %v3200, %v3199
    %v3255 = vpack.c.b16 %v3202, %v3201
    %v3256 = vpack.c.b16 %v3204, %v3203
    %v3257 = vpack.c.b16 %v3206, %v3205
    %v3258 = vpack.c.b16 %v3208, %v3207
    %v3259 = vpack.c.b16 %v3210, %v3209
    %v3260 = vpack.c.b16 %v3212, %v3211
    %v3261 = vpack.c.b16 %v3214, %v3213
    %v3262 = vpack.c.b16 %v3216, %v3215
    %v3263 = vpack.c.b16 %v3218, %v3217
    %v3264 = vpack.c.b16 %v3220, %v3219
    %v3265 = vpack.c.b16 %v3222, %v3221
    %v3266 = vpack.c.b16 %v3224, %v3223
    %v3267 = vpack.c.b16 %v3226, %v3225
    %v3268 = vpack.c.b16 %v3228, %v3227
    %3309 = vmatprep.subr.bf16.mxu0 0
    %3310 = vmatpush1.bf16.msra.mxu0 %v3229
    %3311 = vmatprep.subr.bf16.mxu0 0
    %3312 = vmatpush1.bf16.msra.mxu0 %v3230
    %3313 = vmatprep.subr.bf16.mxu0 0
    %3314 = vmatpush1.bf16.msra.mxu0 %v3231
    %3315 = vmatprep.subr.bf16.mxu0 0
    %3316 = vmatpush1.bf16.msra.mxu0 %v3232
    %3317 = vmatprep.subr.bf16.mxu0 0
    %3318 = vmatpush1.bf16.msra.mxu0 %v3233
    %3319 = vmatprep.subr.bf16.mxu0 0
    %3320 = vmatpush1.bf16.msra.mxu0 %v3234
    %3321 = vmatprep.subr.bf16.mxu0 0
    %3322 = vmatpush1.bf16.msra.mxu0 %v3235
    %3323 = vmatprep.subr.bf16.mxu0 0
    %3324 = vmatpush1.bf16.msra.mxu0 %v3236
    %3325 = vmatprep.subr.bf16.mxu0 0
    %3326 = vmatpush1.bf16.msra.mxu0 %v3237
    %3327 = vmatprep.subr.bf16.mxu0 0
    %3328 = vmatpush1.bf16.msra.mxu0 %v3238
    %3329 = vmatprep.subr.bf16.mxu0 0
    %3330 = vmatpush1.bf16.msra.mxu0 %v3239
    %3331 = vmatprep.subr.bf16.mxu0 0
    %3332 = vmatpush1.bf16.msra.mxu0 %v3240
    %3333 = vmatprep.subr.bf16.mxu0 0
    %3334 = vmatpush1.bf16.msra.mxu0 %v3241
    %3335 = vmatprep.subr.bf16.mxu0 0
    %3336 = vmatpush1.bf16.msra.mxu0 %v3242
    %3337 = vmatprep.subr.bf16.mxu0 0
    %3338 = vmatpush1.bf16.msra.mxu0 %v3243
    %3339 = vmatprep.subr.bf16.mxu0 0
    %3340 = vmatpush1.bf16.msra.mxu0 %v3244
    %3341 = vmatprep.mubr.bf16.mxu0 %v3060
    %3342 = vmatmul.mubr.bf16.gmra.mrb[0].mxu0 %v3059
    %v3343 = vpop.f32.mrb[0].mxu0
    %v3344 = vadd.f32 0.0, %v3343
    %v3345 = vpop.f32.mrb[0].mxu0
    %v3346 = vpop.f32.mrb[0].mxu0
    %v3347 = vadd.f32 0.0, %v3346
    %v3348 = vpop.f32.mrb[0].mxu0
    %3349 = vdwg.mxu0
    %3350 = vmatprep.subr.bf16.mxu0 0
    %3351 = vmatpush1.bf16.msra.mxu0 %v3245
    %3352 = vmatprep.subr.bf16.mxu0 0
    %3353 = vmatpush1.bf16.msra.mxu0 %v3246
    %3354 = vmatprep.subr.bf16.mxu0 0
    %3355 = vmatpush1.bf16.msra.mxu0 %v3247
    %3356 = vmatprep.subr.bf16.mxu0 0
    %3357 = vmatpush1.bf16.msra.mxu0 %v3248
    %3358 = vmatprep.subr.bf16.mxu0 0
    %3359 = vmatpush1.bf16.msra.mxu0 %v3249
    %3360 = vmatprep.subr.bf16.mxu0 0
    %3361 = vmatpush1.bf16.msra.mxu0 %v3250
    %3362 = vmatprep.subr.bf16.mxu0 0
    %3363 = vmatpush1.bf16.msra.mxu0 %v3251
    %3364 = vmatprep.subr.bf16.mxu0 0
    %3365 = vmatpush1.bf16.msra.mxu0 %v3252
    %3366 = vmatprep.subr.bf16.mxu0 0
    %3367 = vmatpush1.bf16.msra.mxu0 %v3253
    %3368 = vmatprep.subr.bf16.mxu0 0
    %3369 = vmatpush1.bf16.msra.mxu0 %v3254
    %3370 = vmatprep.subr.bf16.mxu0 0
    %3371 = vmatpush1.bf16.msra.mxu0 %v3255
    %3372 = vmatprep.subr.bf16.mxu0 0
    %3373 = vmatpush1.bf16.msra.mxu0 %v3256
    %3374 = vmatprep.subr.bf16.mxu0 0
    %3375 = vmatpush1.bf16.msra.mxu0 %v3257
    %3376 = vmatprep.subr.bf16.mxu0 0
    %3377 = vmatpush1.bf16.msra.mxu0 %v3258
    %3378 = vmatprep.subr.bf16.mxu0 0
    %3379 = vmatpush1.bf16.msra.mxu0 %v3259
    %3380 = vmatprep.subr.bf16.mxu0 0
    %3381 = vmatpush1.bf16.msra.mxu0 %v3260
    %3382 = vmatprep.mubr.bf16.mxu0 %v3062
    %3383 = vmatmul.mubr.bf16.gmra.mrb[0].mxu0 %v3061
    %v3384 = vpop.f32.mrb[0].mxu0
    %v3385 = vadd.f32 %v3344, %v3384
    %v3386 = vpop.f32.mrb[0].mxu0
    %v3387 = vpop.f32.mrb[0].mxu0
    %v3388 = vadd.f32 %v3347, %v3387
    %v3389 = vpop.f32.mrb[0].mxu0
    %3390 = vdwg.mxu0
    %3391 = vmatprep.subr.bf16.mxu0 0
    %3392 = vmatpush1.bf16.msra.mxu0 %v3261
    %3393 = vmatprep.subr.bf16.mxu0 0
    %3394 = vmatpush1.bf16.msra.mxu0 %v3262
    %3395 = vmatprep.subr.bf16.mxu0 0
    %3396 = vmatpush1.bf16.msra.mxu0 %v3263
    %3397 = vmatprep.subr.bf16.mxu0 0
    %3398 = vmatpush1.bf16.msra.mxu0 %v3264
    %3399 = vmatprep.subr.bf16.mxu0 0
    %3400 = vmatpush1.bf16.msra.mxu0 %v3265
    %3401 = vmatprep.subr.bf16.mxu0 0
    %3402 = vmatpush1.bf16.msra.mxu0 %v3266
    %3403 = vmatprep.subr.bf16.mxu0 0
    %3404 = vmatpush1.bf16.msra.mxu0 %v3267
    %3405 = vmatprep.subr.bf16.mxu0 0
    %3406 = vmatpush1.bf16.msra.mxu0 %v3268
    %3407 = vmatprep.subr.bf16.mxu0 0
    %3408 = vmatpush1.bf16.msra.mxu0 0
    %3409 = vmatprep.subr.bf16.mxu0 0
    %3410 = vmatpush1.bf16.msra.mxu0 0
    %3411 = vmatprep.subr.bf16.mxu0 0
    %3412 = vmatpush1.bf16.msra.mxu0 0
    %3413 = vmatprep.subr.bf16.mxu0 0
    %3414 = vmatpush1.bf16.msra.mxu0 0
    %3415 = vmatprep.subr.bf16.mxu0 0
    %3416 = vmatpush1.bf16.msra.mxu0 0
    %3417 = vmatprep.subr.bf16.mxu0 0
    %3418 = vmatpush1.bf16.msra.mxu0 0
    %3419 = vmatprep.subr.bf16.mxu0 0
    %3420 = vmatpush1.bf16.msra.mxu0 0
    %3421 = vmatprep.subr.bf16.mxu0 0
    %3422 = vmatpush1.bf16.msra.mxu0 0
    %3423 = vmatprep.mubr.bf16.mxu0 0
    %3424 = vmatmul.mubr.bf16.gmra.mrb[0].mxu0 %v3063
    %v3425 = vpop.f32.mrb[0].mxu0
    %v3426 = vadd.f32 %v3385, %v3425
    %v3427 = vpop.f32.mrb[0].mxu0
    %v3428 = vpop.f32.mrb[0].mxu0
    %v3429 = vadd.f32 %v3388, %v3428
    %v3430 = vpop.f32.mrb[0].mxu0
    %3431 = vdwg.mxu0
    %s3432 = scalar_lea.vmem [#allocation11], 4
    %v3433 = vld [vmem:[%s3432] sm:$0x1]
    %v3435 = vlaneseq
    %v3436 = vshrl.u32 %v3435, 7
    %v3437 = vsub.s32 0, %v3436
    %v3438 = vrot.slane %v3433, %v3437
    %v3440 = vadd.f32 %v3426, %v3438
    %v3441 = vadd.f32 %v3429, %v3438
    %v3442 = vmax.f32 %v3440, 0.0
    %v3443 = vmax.f32 %v3441, 0.0
    %v3444 = vpack.c.bf16 %v3442, %v3442
    %v3445 = vpack.c.bf16 %v3443, %v3443
    %v3448 = vunpack.c.l.b16 %v3444
    %v3449 = vunpack.c.l.b16 %v3445
    %v3450 = vpack.c.b16 %v3448, %v3448
    %v3451 = vpack.c.b16 %v3449, %v3449
    %v3452 = vrot.slane %v3450, 7
    %v3453 = vrot.slane %v3452, 4
    %v3454 = vrot.slane %v3451, 7
    %v3455 = vrot.slane %v3454, 4
    %3460 = vst [vmem:[#allocation2] sm:$0xe] %v3452
    %3461 = vst [vmem:[#allocation2 + $0x4] sm:$0x1] %v3453
    %3462 = vst [vmem:[#allocation2 + $0x8] sm:$0xe] %v3454
    %3463 = vst [vmem:[#allocation2 + $0xc] sm:$0x1] %v3455
    %v3464 = vld [vmem:[#allocation2] sm:$0xf]
    %v3465 = vld [vmem:[#allocation2 + $0x4] sm:$0x3]
    %v3466 = vld [vmem:[#allocation2 + $0x8] sm:$0xf]
    %v3467 = vld [vmem:[#allocation2 + $0xc] sm:$0x3]
    %v3472 = vunpack.c.l.b16 %v3464
    %v3473 = vunpack.c.l.b16 %v3465
    %v3474 = vunpack.c.l.b16 %v3466
    %v3475 = vunpack.c.l.b16 %v3467
    %v3476 = vpack.c.b16 %v3473, %v3472
    %v3477 = vpack.c.b16 %v3475, %v3474
    %v3479 = vshrl.u32 %v3476, 16
    %v3481 = vshll.u32 %v3476, 16
    %v3483 = vrot.slane %v3481, 1
    %v3484 = vor.u32 %v3479, %v3483
    %v3486 = vshrl.u32 %v3477, 16
    %v3488 = vshll.u32 %v3477, 16
    %v3490 = vrot.slane %v3488, 1
    %v3491 = vor.u32 %v3486, %v3490
    %v3492 = vrot.slane %v3476, 1
    %v3493 = vrot.slane %v3477, 1
    %v3494 = vrot.slane %v3479, 1
    %v3495 = vrot.slane %v3481, 2
    %v3496 = vor.u32 %v3494, %v3495
    %v3497 = vrot.slane %v3486, 1
    %v3498 = vrot.slane %v3488, 2
    %v3499 = vor.u32 %v3497, %v3498
    %v3500 = vrot.slane %v3476, 2
    %v3501 = vrot.slane %v3477, 2
    %v3502 = vunpack.c.l.b16 %v3484
    %v3503 = vunpack.c.l.b16 %v3492
    %v3504 = vunpack.c.l.b16 %v3496
    %v3505 = vunpack.c.l.b16 %v3500
    %v3506 = vunpack.c.l.b16 %v3491
    %v3507 = vunpack.c.l.b16 %v3493
    %v3508 = vunpack.c.l.b16 %v3499
    %v3509 = vunpack.c.l.b16 %v3501
    %s3510 = scalar_lea.vmem [#allocation9], 1600
    %v3511 = vld [vmem:[%s3510] sm:$0xf]
    %v3512 = vld [vmem:[%s3510 + $0x4] sm:$0xf]
    %v3513 = vld [vmem:[%s3510 + $0x8] sm:$0xf]
    %v3514 = vld [vmem:[%s3510 + $0xc] sm:$0xf]
    %v3515 = vld [vmem:[%s3510 + $0x10] sm:$0xf]
    %v3516 = vld [vmem:[%s3510 + $0x14] sm:$0xf]
    %v3517 = vld [vmem:[%s3510 + $0x18] sm:$0xf]
    %v3518 = vld [vmem:[%s3510 + $0x1c] sm:$0xf]
    %v3519 = vld [vmem:[%s3510 + $0x20] sm:$0xf]
    %v3520 = vld [vmem:[%s3510 + $0x24] sm:$0xf]
    %v3521 = vld [vmem:[%s3510 + $0x28] sm:$0xf]
    %v3522 = vld [vmem:[%s3510 + $0x2c] sm:$0xf]
    %v3523 = vld [vmem:[%s3510 + $0x30] sm:$0xf]
    %v3524 = vld [vmem:[%s3510 + $0x34] sm:$0xf]
    %v3525 = vld [vmem:[%s3510 + $0x38] sm:$0xf]
    %v3526 = vld [vmem:[%s3510 + $0x3c] sm:$0xf]
    %v3527 = vld [vmem:[%s3510 + $0x40] sm:$0xf]
    %v3528 = vld [vmem:[%s3510 + $0x44] sm:$0xf]
    %v3529 = vld [vmem:[%s3510 + $0x48] sm:$0xf]
    %v3530 = vld [vmem:[%s3510 + $0x4c] sm:$0xf]
    %v3531 = vld [vmem:[%s3510 + $0x50] sm:$0xf]
    %v3532 = vld [vmem:[%s3510 + $0x54] sm:$0xf]
    %v3533 = vld [vmem:[%s3510 + $0x58] sm:$0xf]
    %v3534 = vld [vmem:[%s3510 + $0x5c] sm:$0xf]
    %v3535 = vld [vmem:[%s3510 + $0x60] sm:$0xf]
    %v3536 = vld [vmem:[%s3510 + $0x64] sm:$0xf]
    %v3537 = vld [vmem:[%s3510 + $0x68] sm:$0xf]
    %v3538 = vld [vmem:[%s3510 + $0x6c] sm:$0xf]
    %v3539 = vld [vmem:[%s3510 + $0x70] sm:$0xf]
    %v3540 = vld [vmem:[%s3510 + $0x74] sm:$0xf]
    %v3541 = vld [vmem:[%s3510 + $0x78] sm:$0xf]
    %v3542 = vld [vmem:[%s3510 + $0x7c] sm:$0xf]
    %v3543 = vld [vmem:[%s3510 + $0x80] sm:$0xf]
    %v3544 = vld [vmem:[%s3510 + $0x84] sm:$0xf]
    %v3545 = vld [vmem:[%s3510 + $0x88] sm:$0xf]
    %v3546 = vld [vmem:[%s3510 + $0x8c] sm:$0xf]
    %v3547 = vld [vmem:[%s3510 + $0x90] sm:$0xf]
    %v3548 = vld [vmem:[%s3510 + $0x94] sm:$0xf]
    %v3549 = vld [vmem:[%s3510 + $0x98] sm:$0xf]
    %v3550 = vld [vmem:[%s3510 + $0x9c] sm:$0xf]
    %v3551 = vld [vmem:[%s3510 + $0xa0] sm:$0xf]
    %v3552 = vld [vmem:[%s3510 + $0xa4] sm:$0xf]
    %v3553 = vld [vmem:[%s3510 + $0xa8] sm:$0xf]
    %v3554 = vld [vmem:[%s3510 + $0xac] sm:$0xf]
    %v3555 = vld [vmem:[%s3510 + $0xb0] sm:$0xf]
    %v3556 = vld [vmem:[%s3510 + $0xb4] sm:$0xf]
    %v3557 = vld [vmem:[%s3510 + $0xb8] sm:$0xf]
    %v3558 = vld [vmem:[%s3510 + $0xbc] sm:$0xf]
    %v3559 = vld [vmem:[%s3510 + $0xc0] sm:$0xf]
    %v3560 = vld [vmem:[%s3510 + $0xc4] sm:$0xf]
    %v3561 = vld [vmem:[%s3510 + $0xc8] sm:$0xf]
    %v3562 = vld [vmem:[%s3510 + $0xcc] sm:$0xf]
    %v3563 = vld [vmem:[%s3510 + $0xd0] sm:$0xf]
    %v3564 = vld [vmem:[%s3510 + $0xd4] sm:$0xf]
    %v3565 = vld [vmem:[%s3510 + $0xd8] sm:$0xf]
    %v3566 = vld [vmem:[%s3510 + $0xdc] sm:$0xf]
    %v3567 = vld [vmem:[%s3510 + $0xe0] sm:$0xf]
    %v3568 = vld [vmem:[%s3510 + $0xe4] sm:$0xf]
    %v3569 = vld [vmem:[%s3510 + $0xe8] sm:$0xf]
    %v3570 = vld [vmem:[%s3510 + $0xec] sm:$0xf]
    %v3571 = vld [vmem:[%s3510 + $0xf0] sm:$0xf]
    %v3572 = vld [vmem:[%s3510 + $0xf4] sm:$0xf]
    %v3573 = vld [vmem:[%s3510 + $0xf8] sm:$0xf]
    %v3574 = vld [vmem:[%s3510 + $0xfc] sm:$0xf]
    %v3575 = vld [vmem:[%s3510 + $0x100] sm:$0xf]
    %v3576 = vld [vmem:[%s3510 + $0x104] sm:$0xf]
    %v3577 = vld [vmem:[%s3510 + $0x108] sm:$0xf]
    %v3578 = vld [vmem:[%s3510 + $0x10c] sm:$0xf]
    %v3579 = vld [vmem:[%s3510 + $0x110] sm:$0xf]
    %v3580 = vld [vmem:[%s3510 + $0x114] sm:$0xf]
    %v3581 = vld [vmem:[%s3510 + $0x118] sm:$0xf]
    %v3582 = vld [vmem:[%s3510 + $0x11c] sm:$0xf]
    %v3583 = vld [vmem:[%s3510 + $0x120] sm:$0xf]
    %v3584 = vld [vmem:[%s3510 + $0x124] sm:$0xf]
    %v3585 = vld [vmem:[%s3510 + $0x128] sm:$0xf]
    %v3586 = vld [vmem:[%s3510 + $0x12c] sm:$0xf]
    %v3587 = vld [vmem:[%s3510 + $0x130] sm:$0xf]
    %v3588 = vld [vmem:[%s3510 + $0x134] sm:$0xf]
    %v3589 = vld [vmem:[%s3510 + $0x138] sm:$0xf]
    %v3590 = vld [vmem:[%s3510 + $0x13c] sm:$0xf]
    %v3591 = vpack.c.b16 %v3474, %v3472
    %v3592 = vpack.c.b16 %v3506, %v3502
    %v3593 = vpack.c.b16 %v3507, %v3503
    %v3594 = vpack.c.b16 %v3508, %v3504
    %v3595 = vpack.c.b16 %v3509, %v3505
    %v3681 = vunpack.c.l.b16 %v3511
    %v3682 = vunpack.c.l.b16 %v3512
    %v3683 = vunpack.c.l.b16 %v3513
    %v3684 = vunpack.c.l.b16 %v3514
    %v3685 = vunpack.c.l.b16 %v3515
    %v3686 = vunpack.c.l.b16 %v3516
    %v3687 = vunpack.c.l.b16 %v3517
    %v3688 = vunpack.c.l.b16 %v3518
    %v3689 = vunpack.c.l.b16 %v3519
    %v3690 = vunpack.c.l.b16 %v3520
    %v3691 = vunpack.c.l.b16 %v3521
    %v3692 = vunpack.c.l.b16 %v3522
    %v3693 = vunpack.c.l.b16 %v3523
    %v3694 = vunpack.c.l.b16 %v3524
    %v3695 = vunpack.c.l.b16 %v3525
    %v3696 = vunpack.c.l.b16 %v3526
    %v3697 = vunpack.c.l.b16 %v3527
    %v3698 = vunpack.c.l.b16 %v3528
    %v3699 = vunpack.c.l.b16 %v3529
    %v3700 = vunpack.c.l.b16 %v3530
    %v3701 = vunpack.c.l.b16 %v3531
    %v3702 = vunpack.c.l.b16 %v3532
    %v3703 = vunpack.c.l.b16 %v3533
    %v3704 = vunpack.c.l.b16 %v3534
    %v3705 = vunpack.c.l.b16 %v3535
    %v3706 = vunpack.c.l.b16 %v3536
    %v3707 = vunpack.c.l.b16 %v3537
    %v3708 = vunpack.c.l.b16 %v3538
    %v3709 = vunpack.c.l.b16 %v3539
    %v3710 = vunpack.c.l.b16 %v3540
    %v3711 = vunpack.c.l.b16 %v3541
    %v3712 = vunpack.c.l.b16 %v3542
    %v3713 = vunpack.c.l.b16 %v3543
    %v3714 = vunpack.c.l.b16 %v3544
    %v3715 = vunpack.c.l.b16 %v3545
    %v3716 = vunpack.c.l.b16 %v3546
    %v3717 = vunpack.c.l.b16 %v3547
    %v3718 = vunpack.c.l.b16 %v3548
    %v3719 = vunpack.c.l.b16 %v3549
    %v3720 = vunpack.c.l.b16 %v3550
    %v3721 = vunpack.c.l.b16 %v3551
    %v3722 = vunpack.c.l.b16 %v3552
    %v3723 = vunpack.c.l.b16 %v3553
    %v3724 = vunpack.c.l.b16 %v3554
    %v3725 = vunpack.c.l.b16 %v3555
    %v3726 = vunpack.c.l.b16 %v3556
    %v3727 = vunpack.c.l.b16 %v3557
    %v3728 = vunpack.c.l.b16 %v3558
    %v3729 = vunpack.c.l.b16 %v3559
    %v3730 = vunpack.c.l.b16 %v3560
    %v3731 = vunpack.c.l.b16 %v3561
    %v3732 = vunpack.c.l.b16 %v3562
    %v3733 = vunpack.c.l.b16 %v3563
    %v3734 = vunpack.c.l.b16 %v3564
    %v3735 = vunpack.c.l.b16 %v3565
    %v3736 = vunpack.c.l.b16 %v3566
    %v3737 = vunpack.c.l.b16 %v3567
    %v3738 = vunpack.c.l.b16 %v3568
    %v3739 = vunpack.c.l.b16 %v3569
    %v3740 = vunpack.c.l.b16 %v3570
    %v3741 = vunpack.c.l.b16 %v3571
    %v3742 = vunpack.c.l.b16 %v3572
    %v3743 = vunpack.c.l.b16 %v3573
    %v3744 = vunpack.c.l.b16 %v3574
    %v3745 = vunpack.c.l.b16 %v3575
    %v3746 = vunpack.c.l.b16 %v3576
    %v3747 = vunpack.c.l.b16 %v3577
    %v3748 = vunpack.c.l.b16 %v3578
    %v3749 = vunpack.c.l.b16 %v3579
    %v3750 = vunpack.c.l.b16 %v3580
    %v3751 = vunpack.c.l.b16 %v3581
    %v3752 = vunpack.c.l.b16 %v3582
    %v3753 = vunpack.c.l.b16 %v3583
    %v3754 = vunpack.c.l.b16 %v3584
    %v3755 = vunpack.c.l.b16 %v3585
    %v3756 = vunpack.c.l.b16 %v3586
    %v3757 = vunpack.c.l.b16 %v3587
    %v3758 = vunpack.c.l.b16 %v3588
    %v3759 = vunpack.c.l.b16 %v3589
    %v3760 = vunpack.c.l.b16 %v3590
    %v3761 = vpack.c.b16 %v3682, %v3681
    %v3762 = vpack.c.b16 %v3684, %v3683
    %v3763 = vpack.c.b16 %v3686, %v3685
    %v3764 = vpack.c.b16 %v3688, %v3687
    %v3765 = vpack.c.b16 %v3690, %v3689
    %v3766 = vpack.c.b16 %v3692, %v3691
    %v3767 = vpack.c.b16 %v3694, %v3693
    %v3768 = vpack.c.b16 %v3696, %v3695
    %v3769 = vpack.c.b16 %v3698, %v3697
    %v3770 = vpack.c.b16 %v3700, %v3699
    %v3771 = vpack.c.b16 %v3702, %v3701
    %v3772 = vpack.c.b16 %v3704, %v3703
    %v3773 = vpack.c.b16 %v3706, %v3705
    %v3774 = vpack.c.b16 %v3708, %v3707
    %v3775 = vpack.c.b16 %v3710, %v3709
    %v3776 = vpack.c.b16 %v3712, %v3711
    %v3777 = vpack.c.b16 %v3714, %v3713
    %v3778 = vpack.c.b16 %v3716, %v3715
    %v3779 = vpack.c.b16 %v3718, %v3717
    %v3780 = vpack.c.b16 %v3720, %v3719
    %v3781 = vpack.c.b16 %v3722, %v3721
    %v3782 = vpack.c.b16 %v3724, %v3723
    %v3783 = vpack.c.b16 %v3726, %v3725
    %v3784 = vpack.c.b16 %v3728, %v3727
    %v3785 = vpack.c.b16 %v3730, %v3729
    %v3786 = vpack.c.b16 %v3732, %v3731
    %v3787 = vpack.c.b16 %v3734, %v3733
    %v3788 = vpack.c.b16 %v3736, %v3735
    %v3789 = vpack.c.b16 %v3738, %v3737
    %v3790 = vpack.c.b16 %v3740, %v3739
    %v3791 = vpack.c.b16 %v3742, %v3741
    %v3792 = vpack.c.b16 %v3744, %v3743
    %v3793 = vpack.c.b16 %v3746, %v3745
    %v3794 = vpack.c.b16 %v3748, %v3747
    %v3795 = vpack.c.b16 %v3750, %v3749
    %v3796 = vpack.c.b16 %v3752, %v3751
    %v3797 = vpack.c.b16 %v3754, %v3753
    %v3798 = vpack.c.b16 %v3756, %v3755
    %v3799 = vpack.c.b16 %v3758, %v3757
    %v3800 = vpack.c.b16 %v3760, %v3759
    %3841 = vmatprep.subr.bf16.mxu0 0
    %3842 = vmatpush1.bf16.msra.mxu0 %v3761
    %3843 = vmatprep.subr.bf16.mxu0 0
    %3844 = vmatpush1.bf16.msra.mxu0 %v3762
    %3845 = vmatprep.subr.bf16.mxu0 0
    %3846 = vmatpush1.bf16.msra.mxu0 %v3763
    %3847 = vmatprep.subr.bf16.mxu0 0
    %3848 = vmatpush1.bf16.msra.mxu0 %v3764
    %3849 = vmatprep.subr.bf16.mxu0 0
    %3850 = vmatpush1.bf16.msra.mxu0 %v3765
    %3851 = vmatprep.subr.bf16.mxu0 0
    %3852 = vmatpush1.bf16.msra.mxu0 %v3766
    %3853 = vmatprep.subr.bf16.mxu0 0
    %3854 = vmatpush1.bf16.msra.mxu0 %v3767
    %3855 = vmatprep.subr.bf16.mxu0 0
    %3856 = vmatpush1.bf16.msra.mxu0 %v3768
    %3857 = vmatprep.subr.bf16.mxu0 0
    %3858 = vmatpush1.bf16.msra.mxu0 %v3769
    %3859 = vmatprep.subr.bf16.mxu0 0
    %3860 = vmatpush1.bf16.msra.mxu0 %v3770
    %3861 = vmatprep.subr.bf16.mxu0 0
    %3862 = vmatpush1.bf16.msra.mxu0 %v3771
    %3863 = vmatprep.subr.bf16.mxu0 0
    %3864 = vmatpush1.bf16.msra.mxu0 %v3772
    %3865 = vmatprep.subr.bf16.mxu0 0
    %3866 = vmatpush1.bf16.msra.mxu0 %v3773
    %3867 = vmatprep.subr.bf16.mxu0 0
    %3868 = vmatpush1.bf16.msra.mxu0 %v3774
    %3869 = vmatprep.subr.bf16.mxu0 0
    %3870 = vmatpush1.bf16.msra.mxu0 %v3775
    %3871 = vmatprep.subr.bf16.mxu0 0
    %3872 = vmatpush1.bf16.msra.mxu0 %v3776
    %3873 = vmatprep.mubr.bf16.mxu0 %v3592
    %3874 = vmatmul.mubr.bf16.gmra.mrb[0].mxu0 %v3591
    %v3875 = vpop.f32.mrb[0].mxu0
    %v3876 = vadd.f32 0.0, %v3875
    %v3877 = vpop.f32.mrb[0].mxu0
    %v3878 = vpop.f32.mrb[0].mxu0
    %v3879 = vadd.f32 0.0, %v3878
    %v3880 = vpop.f32.mrb[0].mxu0
    %3881 = vdwg.mxu0
    %3882 = vmatprep.subr.bf16.mxu0 0
    %3883 = vmatpush1.bf16.msra.mxu0 %v3777
    %3884 = vmatprep.subr.bf16.mxu0 0
    %3885 = vmatpush1.bf16.msra.mxu0 %v3778
    %3886 = vmatprep.subr.bf16.mxu0 0
    %3887 = vmatpush1.bf16.msra.mxu0 %v3779
    %3888 = vmatprep.subr.bf16.mxu0 0
    %3889 = vmatpush1.bf16.msra.mxu0 %v3780
    %3890 = vmatprep.subr.bf16.mxu0 0
    %3891 = vmatpush1.bf16.msra.mxu0 %v3781
    %3892 = vmatprep.subr.bf16.mxu0 0
    %3893 = vmatpush1.bf16.msra.mxu0 %v3782
    %3894 = vmatprep.subr.bf16.mxu0 0
    %3895 = vmatpush1.bf16.msra.mxu0 %v3783
    %3896 = vmatprep.subr.bf16.mxu0 0
    %3897 = vmatpush1.bf16.msra.mxu0 %v3784
    %3898 = vmatprep.subr.bf16.mxu0 0
    %3899 = vmatpush1.bf16.msra.mxu0 %v3785
    %3900 = vmatprep.subr.bf16.mxu0 0
    %3901 = vmatpush1.bf16.msra.mxu0 %v3786
    %3902 = vmatprep.subr.bf16.mxu0 0
    %3903 = vmatpush1.bf16.msra.mxu0 %v3787
    %3904 = vmatprep.subr.bf16.mxu0 0
    %3905 = vmatpush1.bf16.msra.mxu0 %v3788
    %3906 = vmatprep.subr.bf16.mxu0 0
    %3907 = vmatpush1.bf16.msra.mxu0 %v3789
    %3908 = vmatprep.subr.bf16.mxu0 0
    %3909 = vmatpush1.bf16.msra.mxu0 %v3790
    %3910 = vmatprep.subr.bf16.mxu0 0
    %3911 = vmatpush1.bf16.msra.mxu0 %v3791
    %3912 = vmatprep.subr.bf16.mxu0 0
    %3913 = vmatpush1.bf16.msra.mxu0 %v3792
    %3914 = vmatprep.mubr.bf16.mxu0 %v3594
    %3915 = vmatmul.mubr.bf16.gmra.mrb[0].mxu0 %v3593
    %v3916 = vpop.f32.mrb[0].mxu0
    %v3917 = vadd.f32 %v3876, %v3916
    %v3918 = vpop.f32.mrb[0].mxu0
    %v3919 = vpop.f32.mrb[0].mxu0
    %v3920 = vadd.f32 %v3879, %v3919
    %v3921 = vpop.f32.mrb[0].mxu0
    %3922 = vdwg.mxu0
    %3923 = vmatprep.subr.bf16.mxu0 0
    %3924 = vmatpush1.bf16.msra.mxu0 %v3793
    %3925 = vmatprep.subr.bf16.mxu0 0
    %3926 = vmatpush1.bf16.msra.mxu0 %v3794
    %3927 = vmatprep.subr.bf16.mxu0 0
    %3928 = vmatpush1.bf16.msra.mxu0 %v3795
    %3929 = vmatprep.subr.bf16.mxu0 0
    %3930 = vmatpush1.bf16.msra.mxu0 %v3796
    %3931 = vmatprep.subr.bf16.mxu0 0
    %3932 = vmatpush1.bf16.msra.mxu0 %v3797
    %3933 = vmatprep.subr.bf16.mxu0 0
    %3934 = vmatpush1.bf16.msra.mxu0 %v3798
    %3935 = vmatprep.subr.bf16.mxu0 0
    %3936 = vmatpush1.bf16.msra.mxu0 %v3799
    %3937 = vmatprep.subr.bf16.mxu0 0
    %3938 = vmatpush1.bf16.msra.mxu0 %v3800
    %3939 = vmatprep.subr.bf16.mxu0 0
    %3940 = vmatpush1.bf16.msra.mxu0 0
    %3941 = vmatprep.subr.bf16.mxu0 0
    %3942 = vmatpush1.bf16.msra.mxu0 0
    %3943 = vmatprep.subr.bf16.mxu0 0
    %3944 = vmatpush1.bf16.msra.mxu0 0
    %3945 = vmatprep.subr.bf16.mxu0 0
    %3946 = vmatpush1.bf16.msra.mxu0 0
    %3947 = vmatprep.subr.bf16.mxu0 0
    %3948 = vmatpush1.bf16.msra.mxu0 0
    %3949 = vmatprep.subr.bf16.mxu0 0
    %3950 = vmatpush1.bf16.msra.mxu0 0
    %3951 = vmatprep.subr.bf16.mxu0 0
    %3952 = vmatpush1.bf16.msra.mxu0 0
    %3953 = vmatprep.subr.bf16.mxu0 0
    %3954 = vmatpush1.bf16.msra.mxu0 0
    %3955 = vmatprep.mubr.bf16.mxu0 0
    %3956 = vmatmul.mubr.bf16.gmra.mrb[0].mxu0 %v3595
    %v3957 = vpop.f32.mrb[0].mxu0
    %v3958 = vadd.f32 %v3917, %v3957
    %v3959 = vpop.f32.mrb[0].mxu0
    %v3960 = vpop.f32.mrb[0].mxu0
    %v3961 = vadd.f32 %v3920, %v3960
    %v3962 = vpop.f32.mrb[0].mxu0
    %3963 = vdwg.mxu0
    %s3964 = scalar_lea.vmem [#allocation11], 5
    %v3965 = vld [vmem:[%s3964] sm:$0x1]
    %v3967 = vlaneseq
    %v3968 = vshrl.u32 %v3967, 7
    %v3969 = vsub.s32 0, %v3968
    %v3970 = vrot.slane %v3965, %v3969
    %v3972 = vadd.f32 %v3958, %v3970
    %v3973 = vadd.f32 %v3961, %v3970
    %v3974 = vadd.f32 %v2908, %v3972
    %v3975 = vadd.f32 %v2909, %v3973
    %v3976 = vmax.f32 %v3974, 0.0
    %v3977 = vmax.f32 %v3975, 0.0
    %v3978 = vpack.c.bf16 %v3976, %v3976
    %v3979 = vpack.c.bf16 %v3977, %v3977
    %v3982 = vunpack.c.l.b16 %v3978
    %v3983 = vunpack.c.l.b16 %v3979
    %v3984 = vpack.c.b16 %v3982, %v3982
    %v3985 = vpack.c.b16 %v3983, %v3983
    %v3986 = vrot.slane %v3984, 7
    %v3987 = vrot.slane %v3986, 4
    %v3988 = vrot.slane %v3985, 7
    %v3989 = vrot.slane %v3988, 4
    %3994 = vst [vmem:[#allocation2] sm:$0xe] %v3986
    %3995 = vst [vmem:[#allocation2 + $0x4] sm:$0x1] %v3987
    %3996 = vst [vmem:[#allocation2 + $0x8] sm:$0xe] %v3988
    %3997 = vst [vmem:[#allocation2 + $0xc] sm:$0x1] %v3989
    %v3998 = vld [vmem:[#allocation2] sm:$0xf]
    %v3999 = vld [vmem:[#allocation2 + $0x4] sm:$0x3]
    %v4000 = vld [vmem:[#allocation2 + $0x8] sm:$0xf]
    %v4001 = vld [vmem:[#allocation2 + $0xc] sm:$0x3]
    %v4006 = vunpack.c.l.b16 %v3998
    %v4007 = vunpack.c.l.b16 %v3999
    %v4008 = vunpack.c.l.b16 %v4000
    %v4009 = vunpack.c.l.b16 %v4001
    %v4010 = vpack.c.b16 %v4007, %v4006
    %v4011 = vpack.c.b16 %v4009, %v4008
    %v4013 = vshrl.u32 %v4010, 16
    %v4015 = vshll.u32 %v4010, 16
    %v4017 = vrot.slane %v4015, 1
    %v4018 = vor.u32 %v4013, %v4017
    %v4020 = vshrl.u32 %v4011, 16
    %v4022 = vshll.u32 %v4011, 16
    %v4024 = vrot.slane %v4022, 1
    %v4025 = vor.u32 %v4020, %v4024
    %v4026 = vrot.slane %v4010, 1
    %v4027 = vrot.slane %v4011, 1
    %v4028 = vrot.slane %v4013, 1
    %v4029 = vrot.slane %v4015, 2
    %v4030 = vor.u32 %v4028, %v4029
    %v4031 = vrot.slane %v4020, 1
    %v4032 = vrot.slane %v4022, 2
    %v4033 = vor.u32 %v4031, %v4032
    %v4034 = vrot.slane %v4010, 2
    %v4035 = vrot.slane %v4011, 2
    %v4036 = vunpack.c.l.b16 %v4018
    %v4037 = vunpack.c.l.b16 %v4026
    %v4038 = vunpack.c.l.b16 %v4030
    %v4039 = vunpack.c.l.b16 %v4034
    %v4040 = vunpack.c.l.b16 %v4025
    %v4041 = vunpack.c.l.b16 %v4027
    %v4042 = vunpack.c.l.b16 %v4033
    %v4043 = vunpack.c.l.b16 %v4035
    %s4044 = scalar_lea.vmem [#allocation9], 1920
    %v4045 = vld [vmem:[%s4044] sm:$0xf]
    %v4046 = vld [vmem:[%s4044 + $0x4] sm:$0xf]
    %v4047 = vld [vmem:[%s4044 + $0x8] sm:$0xf]
    %v4048 = vld [vmem:[%s4044 + $0xc] sm:$0xf]
    %v4049 = vld [vmem:[%s4044 + $0x10] sm:$0xf]
    %v4050 = vld [vmem:[%s4044 + $0x14] sm:$0xf]
    %v4051 = vld [vmem:[%s4044 + $0x18] sm:$0xf]
    %v4052 = vld [vmem:[%s4044 + $0x1c] sm:$0xf]
    %v4053 = vld [vmem:[%s4044 + $0x20] sm:$0xf]
    %v4054 = vld [vmem:[%s4044 + $0x24] sm:$0xf]
    %v4055 = vld [vmem:[%s4044 + $0x28] sm:$0xf]
    %v4056 = vld [vmem:[%s4044 + $0x2c] sm:$0xf]
    %v4057 = vld [vmem:[%s4044 + $0x30] sm:$0xf]
    %v4058 = vld [vmem:[%s4044 + $0x34] sm:$0xf]
    %v4059 = vld [vmem:[%s4044 + $0x38] sm:$0xf]
    %v4060 = vld [vmem:[%s4044 + $0x3c] sm:$0xf]
    %v4061 = vld [vmem:[%s4044 + $0x40] sm:$0xf]
    %v4062 = vld [vmem:[%s4044 + $0x44] sm:$0xf]
    %v4063 = vld [vmem:[%s4044 + $0x48] sm:$0xf]
    %v4064 = vld [vmem:[%s4044 + $0x4c] sm:$0xf]
    %v4065 = vld [vmem:[%s4044 + $0x50] sm:$0xf]
    %v4066 = vld [vmem:[%s4044 + $0x54] sm:$0xf]
    %v4067 = vld [vmem:[%s4044 + $0x58] sm:$0xf]
    %v4068 = vld [vmem:[%s4044 + $0x5c] sm:$0xf]
    %v4069 = vld [vmem:[%s4044 + $0x60] sm:$0xf]
    %v4070 = vld [vmem:[%s4044 + $0x64] sm:$0xf]
    %v4071 = vld [vmem:[%s4044 + $0x68] sm:$0xf]
    %v4072 = vld [vmem:[%s4044 + $0x6c] sm:$0xf]
    %v4073 = vld [vmem:[%s4044 + $0x70] sm:$0xf]
    %v4074 = vld [vmem:[%s4044 + $0x74] sm:$0xf]
    %v4075 = vld [vmem:[%s4044 + $0x78] sm:$0xf]
    %v4076 = vld [vmem:[%s4044 + $0x7c] sm:$0xf]
    %v4077 = vld [vmem:[%s4044 + $0x80] sm:$0xf]
    %v4078 = vld [vmem:[%s4044 + $0x84] sm:$0xf]
    %v4079 = vld [vmem:[%s4044 + $0x88] sm:$0xf]
    %v4080 = vld [vmem:[%s4044 + $0x8c] sm:$0xf]
    %v4081 = vld [vmem:[%s4044 + $0x90] sm:$0xf]
    %v4082 = vld [vmem:[%s4044 + $0x94] sm:$0xf]
    %v4083 = vld [vmem:[%s4044 + $0x98] sm:$0xf]
    %v4084 = vld [vmem:[%s4044 + $0x9c] sm:$0xf]
    %v4085 = vld [vmem:[%s4044 + $0xa0] sm:$0xf]
    %v4086 = vld [vmem:[%s4044 + $0xa4] sm:$0xf]
    %v4087 = vld [vmem:[%s4044 + $0xa8] sm:$0xf]
    %v4088 = vld [vmem:[%s4044 + $0xac] sm:$0xf]
    %v4089 = vld [vmem:[%s4044 + $0xb0] sm:$0xf]
    %v4090 = vld [vmem:[%s4044 + $0xb4] sm:$0xf]
    %v4091 = vld [vmem:[%s4044 + $0xb8] sm:$0xf]
    %v4092 = vld [vmem:[%s4044 + $0xbc] sm:$0xf]
    %v4093 = vld [vmem:[%s4044 + $0xc0] sm:$0xf]
    %v4094 = vld [vmem:[%s4044 + $0xc4] sm:$0xf]
    %v4095 = vld [vmem:[%s4044 + $0xc8] sm:$0xf]
    %v4096 = vld [vmem:[%s4044 + $0xcc] sm:$0xf]
    %v4097 = vld [vmem:[%s4044 + $0xd0] sm:$0xf]
    %v4098 = vld [vmem:[%s4044 + $0xd4] sm:$0xf]
    %v4099 = vld [vmem:[%s4044 + $0xd8] sm:$0xf]
    %v4100 = vld [vmem:[%s4044 + $0xdc] sm:$0xf]
    %v4101 = vld [vmem:[%s4044 + $0xe0] sm:$0xf]
    %v4102 = vld [vmem:[%s4044 + $0xe4] sm:$0xf]
    %v4103 = vld [vmem:[%s4044 + $0xe8] sm:$0xf]
    %v4104 = vld [vmem:[%s4044 + $0xec] sm:$0xf]
    %v4105 = vld [vmem:[%s4044 + $0xf0] sm:$0xf]
    %v4106 = vld [vmem:[%s4044 + $0xf4] sm:$0xf]
    %v4107 = vld [vmem:[%s4044 + $0xf8] sm:$0xf]
    %v4108 = vld [vmem:[%s4044 + $0xfc] sm:$0xf]
    %v4109 = vld [vmem:[%s4044 + $0x100] sm:$0xf]
    %v4110 = vld [vmem:[%s4044 + $0x104] sm:$0xf]
    %v4111 = vld [vmem:[%s4044 + $0x108] sm:$0xf]
    %v4112 = vld [vmem:[%s4044 + $0x10c] sm:$0xf]
    %v4113 = vld [vmem:[%s4044 + $0x110] sm:$0xf]
    %v4114 = vld [vmem:[%s4044 + $0x114] sm:$0xf]
    %v4115 = vld [vmem:[%s4044 + $0x118] sm:$0xf]
    %v4116 = vld [vmem:[%s4044 + $0x11c] sm:$0xf]
    %v4117 = vld [vmem:[%s4044 + $0x120] sm:$0xf]
    %v4118 = vld [vmem:[%s4044 + $0x124] sm:$0xf]
    %v4119 = vld [vmem:[%s4044 + $0x128] sm:$0xf]
    %v4120 = vld [vmem:[%s4044 + $0x12c] sm:$0xf]
    %v4121 = vld [vmem:[%s4044 + $0x130] sm:$0xf]
    %v4122 = vld [vmem:[%s4044 + $0x134] sm:$0xf]
    %v4123 = vld [vmem:[%s4044 + $0x138] sm:$0xf]
    %v4124 = vld [vmem:[%s4044 + $0x13c] sm:$0xf]
    %v4125 = vpack.c.b16 %v4008, %v4006
    %v4126 = vpack.c.b16 %v4040, %v4036
    %v4127 = vpack.c.b16 %v4041, %v4037
    %v4128 = vpack.c.b16 %v4042, %v4038
    %v4129 = vpack.c.b16 %v4043, %v4039
    %v4215 = vunpack.c.l.b16 %v4045
    %v4216 = vunpack.c.l.b16 %v4046
    %v4217 = vunpack.c.l.b16 %v4047
    %v4218 = vunpack.c.l.b16 %v4048
    %v4219 = vunpack.c.l.b16 %v4049
    %v4220 = vunpack.c.l.b16 %v4050
    %v4221 = vunpack.c.l.b16 %v4051
    %v4222 = vunpack.c.l.b16 %v4052
    %v4223 = vunpack.c.l.b16 %v4053
    %v4224 = vunpack.c.l.b16 %v4054
    %v4225 = vunpack.c.l.b16 %v4055
    %v4226 = vunpack.c.l.b16 %v4056
    %v4227 = vunpack.c.l.b16 %v4057
    %v4228 = vunpack.c.l.b16 %v4058
    %v4229 = vunpack.c.l.b16 %v4059
    %v4230 = vunpack.c.l.b16 %v4060
    %v4231 = vunpack.c.l.b16 %v4061
    %v4232 = vunpack.c.l.b16 %v4062
    %v4233 = vunpack.c.l.b16 %v4063
    %v4234 = vunpack.c.l.b16 %v4064
    %v4235 = vunpack.c.l.b16 %v4065
    %v4236 = vunpack.c.l.b16 %v4066
    %v4237 = vunpack.c.l.b16 %v4067
    %v4238 = vunpack.c.l.b16 %v4068
    %v4239 = vunpack.c.l.b16 %v4069
    %v4240 = vunpack.c.l.b16 %v4070
    %v4241 = vunpack.c.l.b16 %v4071
    %v4242 = vunpack.c.l.b16 %v4072
    %v4243 = vunpack.c.l.b16 %v4073
    %v4244 = vunpack.c.l.b16 %v4074
    %v4245 = vunpack.c.l.b16 %v4075
    %v4246 = vunpack.c.l.b16 %v4076
    %v4247 = vunpack.c.l.b16 %v4077
    %v4248 = vunpack.c.l.b16 %v4078
    %v4249 = vunpack.c.l.b16 %v4079
    %v4250 = vunpack.c.l.b16 %v4080
    %v4251 = vunpack.c.l.b16 %v4081
    %v4252 = vunpack.c.l.b16 %v4082
    %v4253 = vunpack.c.l.b16 %v4083
    %v4254 = vunpack.c.l.b16 %v4084
    %v4255 = vunpack.c.l.b16 %v4085
    %v4256 = vunpack.c.l.b16 %v4086
    %v4257 = vunpack.c.l.b16 %v4087
    %v4258 = vunpack.c.l.b16 %v4088
    %v4259 = vunpack.c.l.b16 %v4089
    %v4260 = vunpack.c.l.b16 %v4090
    %v4261 = vunpack.c.l.b16 %v4091
    %v4262 = vunpack.c.l.b16 %v4092
    %v4263 = vunpack.c.l.b16 %v4093
    %v4264 = vunpack.c.l.b16 %v4094
    %v4265 = vunpack.c.l.b16 %v4095
    %v4266 = vunpack.c.l.b16 %v4096
    %v4267 = vunpack.c.l.b16 %v4097
    %v4268 = vunpack.c.l.b16 %v4098
    %v4269 = vunpack.c.l.b16 %v4099
    %v4270 = vunpack.c.l.b16 %v4100
    %v4271 = vunpack.c.l.b16 %v4101
    %v4272 = vunpack.c.l.b16 %v4102
    %v4273 = vunpack.c.l.b16 %v4103
    %v4274 = vunpack.c.l.b16 %v4104
    %v4275 = vunpack.c.l.b16 %v4105
    %v4276 = vunpack.c.l.b16 %v4106
    %v4277 = vunpack.c.l.b16 %v4107
    %v4278 = vunpack.c.l.b16 %v4108
    %v4279 = vunpack.c.l.b16 %v4109
    %v4280 = vunpack.c.l.b16 %v4110
    %v4281 = vunpack.c.l.b16 %v4111
    %v4282 = vunpack.c.l.b16 %v4112
    %v4283 = vunpack.c.l.b16 %v4113
    %v4284 = vunpack.c.l.b16 %v4114
    %v4285 = vunpack.c.l.b16 %v4115
    %v4286 = vunpack.c.l.b16 %v4116
    %v4287 = vunpack.c.l.b16 %v4117
    %v4288 = vunpack.c.l.b16 %v4118
    %v4289 = vunpack.c.l.b16 %v4119
    %v4290 = vunpack.c.l.b16 %v4120
    %v4291 = vunpack.c.l.b16 %v4121
    %v4292 = vunpack.c.l.b16 %v4122
    %v4293 = vunpack.c.l.b16 %v4123
    %v4294 = vunpack.c.l.b16 %v4124
    %v4295 = vpack.c.b16 %v4216, %v4215
    %v4296 = vpack.c.b16 %v4218, %v4217
    %v4297 = vpack.c.b16 %v4220, %v4219
    %v4298 = vpack.c.b16 %v4222, %v4221
    %v4299 = vpack.c.b16 %v4224, %v4223
    %v4300 = vpack.c.b16 %v4226, %v4225
    %v4301 = vpack.c.b16 %v4228, %v4227
    %v4302 = vpack.c.b16 %v4230, %v4229
    %v4303 = vpack.c.b16 %v4232, %v4231
    %v4304 = vpack.c.b16 %v4234, %v4233
    %v4305 = vpack.c.b16 %v4236, %v4235
    %v4306 = vpack.c.b16 %v4238, %v4237
    %v4307 = vpack.c.b16 %v4240, %v4239
    %v4308 = vpack.c.b16 %v4242, %v4241
    %v4309 = vpack.c.b16 %v4244, %v4243
    %v4310 = vpack.c.b16 %v4246, %v4245
    %v4311 = vpack.c.b16 %v4248, %v4247
    %v4312 = vpack.c.b16 %v4250, %v4249
    %v4313 = vpack.c.b16 %v4252, %v4251
    %v4314 = vpack.c.b16 %v4254, %v4253
    %v4315 = vpack.c.b16 %v4256, %v4255
    %v4316 = vpack.c.b16 %v4258, %v4257
    %v4317 = vpack.c.b16 %v4260, %v4259
    %v4318 = vpack.c.b16 %v4262, %v4261
    %v4319 = vpack.c.b16 %v4264, %v4263
    %v4320 = vpack.c.b16 %v4266, %v4265
    %v4321 = vpack.c.b16 %v4268, %v4267
    %v4322 = vpack.c.b16 %v4270, %v4269
    %v4323 = vpack.c.b16 %v4272, %v4271
    %v4324 = vpack.c.b16 %v4274, %v4273
    %v4325 = vpack.c.b16 %v4276, %v4275
    %v4326 = vpack.c.b16 %v4278, %v4277
    %v4327 = vpack.c.b16 %v4280, %v4279
    %v4328 = vpack.c.b16 %v4282, %v4281
    %v4329 = vpack.c.b16 %v4284, %v4283
    %v4330 = vpack.c.b16 %v4286, %v4285
    %v4331 = vpack.c.b16 %v4288, %v4287
    %v4332 = vpack.c.b16 %v4290, %v4289
    %v4333 = vpack.c.b16 %v4292, %v4291
    %v4334 = vpack.c.b16 %v4294, %v4293
    %4375 = vmatprep.subr.bf16.mxu0 0
    %4376 = vmatpush1.bf16.msra.mxu0 %v4295
    %4377 = vmatprep.subr.bf16.mxu0 0
    %4378 = vmatpush1.bf16.msra.mxu0 %v4296
    %4379 = vmatprep.subr.bf16.mxu0 0
    %4380 = vmatpush1.bf16.msra.mxu0 %v4297
    %4381 = vmatprep.subr.bf16.mxu0 0
    %4382 = vmatpush1.bf16.msra.mxu0 %v4298
    %4383 = vmatprep.subr.bf16.mxu0 0
    %4384 = vmatpush1.bf16.msra.mxu0 %v4299
    %4385 = vmatprep.subr.bf16.mxu0 0
    %4386 = vmatpush1.bf16.msra.mxu0 %v4300
    %4387 = vmatprep.subr.bf16.mxu0 0
    %4388 = vmatpush1.bf16.msra.mxu0 %v4301
    %4389 = vmatprep.subr.bf16.mxu0 0
    %4390 = vmatpush1.bf16.msra.mxu0 %v4302
    %4391 = vmatprep.subr.bf16.mxu0 0
    %4392 = vmatpush1.bf16.msra.mxu0 %v4303
    %4393 = vmatprep.subr.bf16.mxu0 0
    %4394 = vmatpush1.bf16.msra.mxu0 %v4304
    %4395 = vmatprep.subr.bf16.mxu0 0
    %4396 = vmatpush1.bf16.msra.mxu0 %v4305
    %4397 = vmatprep.subr.bf16.mxu0 0
    %4398 = vmatpush1.bf16.msra.mxu0 %v4306
    %4399 = vmatprep.subr.bf16.mxu0 0
    %4400 = vmatpush1.bf16.msra.mxu0 %v4307
    %4401 = vmatprep.subr.bf16.mxu0 0
    %4402 = vmatpush1.bf16.msra.mxu0 %v4308
    %4403 = vmatprep.subr.bf16.mxu0 0
    %4404 = vmatpush1.bf16.msra.mxu0 %v4309
    %4405 = vmatprep.subr.bf16.mxu0 0
    %4406 = vmatpush1.bf16.msra.mxu0 %v4310
    %4407 = vmatprep.mubr.bf16.mxu0 %v4126
    %4408 = vmatmul.mubr.bf16.gmra.mrb[0].mxu0 %v4125
    %v4409 = vpop.f32.mrb[0].mxu0
    %v4410 = vadd.f32 0.0, %v4409
    %v4411 = vpop.f32.mrb[0].mxu0
    %v4412 = vpop.f32.mrb[0].mxu0
    %v4413 = vadd.f32 0.0, %v4412
    %v4414 = vpop.f32.mrb[0].mxu0
    %4415 = vdwg.mxu0
    %4416 = vmatprep.subr.bf16.mxu0 0
    %4417 = vmatpush1.bf16.msra.mxu0 %v4311
    %4418 = vmatprep.subr.bf16.mxu0 0
    %4419 = vmatpush1.bf16.msra.mxu0 %v4312
    %4420 = vmatprep.subr.bf16.mxu0 0
    %4421 = vmatpush1.bf16.msra.mxu0 %v4313
    %4422 = vmatprep.subr.bf16.mxu0 0
    %4423 = vmatpush1.bf16.msra.mxu0 %v4314
    %4424 = vmatprep.subr.bf16.mxu0 0
    %4425 = vmatpush1.bf16.msra.mxu0 %v4315
    %4426 = vmatprep.subr.bf16.mxu0 0
    %4427 = vmatpush1.bf16.msra.mxu0 %v4316
    %4428 = vmatprep.subr.bf16.mxu0 0
    %4429 = vmatpush1.bf16.msra.mxu0 %v4317
    %4430 = vmatprep.subr.bf16.mxu0 0
    %4431 = vmatpush1.bf16.msra.mxu0 %v4318
    %4432 = vmatprep.subr.bf16.mxu0 0
    %4433 = vmatpush1.bf16.msra.mxu0 %v4319
    %4434 = vmatprep.subr.bf16.mxu0 0
    %4435 = vmatpush1.bf16.msra.mxu0 %v4320
    %4436 = vmatprep.subr.bf16.mxu0 0
    %4437 = vmatpush1.bf16.msra.mxu0 %v4321
    %4438 = vmatprep.subr.bf16.mxu0 0
    %4439 = vmatpush1.bf16.msra.mxu0 %v4322
    %4440 = vmatprep.subr.bf16.mxu0 0
    %4441 = vmatpush1.bf16.msra.mxu0 %v4323
    %4442 = vmatprep.subr.bf16.mxu0 0
    %4443 = vmatpush1.bf16.msra.mxu0 %v4324
    %4444 = vmatprep.subr.bf16.mxu0 0
    %4445 = vmatpush1.bf16.msra.mxu0 %v4325
    %4446 = vmatprep.subr.bf16.mxu0 0
    %4447 = vmatpush1.bf16.msra.mxu0 %v4326
    %4448 = vmatprep.mubr.bf16.mxu0 %v4128
    %4449 = vmatmul.mubr.bf16.gmra.mrb[0].mxu0 %v4127
    %v4450 = vpop.f32.mrb[0].mxu0
    %v4451 = vadd.f32 %v4410, %v4450
    %v4452 = vpop.f32.mrb[0].mxu0
    %v4453 = vpop.f32.mrb[0].mxu0
    %v4454 = vadd.f32 %v4413, %v4453
    %v4455 = vpop.f32.mrb[0].mxu0
    %4456 = vdwg.mxu0
    %4457 = vmatprep.subr.bf16.mxu0 0
    %4458 = vmatpush1.bf16.msra.mxu0 %v4327
    %4459 = vmatprep.subr.bf16.mxu0 0
    %4460 = vmatpush1.bf16.msra.mxu0 %v4328
    %4461 = vmatprep.subr.bf16.mxu0 0
    %4462 = vmatpush1.bf16.msra.mxu0 %v4329
    %4463 = vmatprep.subr.bf16.mxu0 0
    %4464 = vmatpush1.bf16.msra.mxu0 %v4330
    %4465 = vmatprep.subr.bf16.mxu0 0
    %4466 = vmatpush1.bf16.msra.mxu0 %v4331
    %4467 = vmatprep.subr.bf16.mxu0 0
    %4468 = vmatpush1.bf16.msra.mxu0 %v4332
    %4469 = vmatprep.subr.bf16.mxu0 0
    %4470 = vmatpush1.bf16.msra.mxu0 %v4333
    %4471 = vmatprep.subr.bf16.mxu0 0
    %4472 = vmatpush1.bf16.msra.mxu0 %v4334
    %4473 = vmatprep.subr.bf16.mxu0 0
    %4474 = vmatpush1.bf16.msra.mxu0 0
    %4475 = vmatprep.subr.bf16.mxu0 0
    %4476 = vmatpush1.bf16.msra.mxu0 0
    %4477 = vmatprep.subr.bf16.mxu0 0
    %4478 = vmatpush1.bf16.msra.mxu0 0
    %4479 = vmatprep.subr.bf16.mxu0 0
    %4480 = vmatpush1.bf16.msra.mxu0 0
    %4481 = vmatprep.subr.bf16.mxu0 0
    %4482 = vmatpush1.bf16.msra.mxu0 0
    %4483 = vmatprep.subr.bf16.mxu0 0
    %4484 = vmatpush1.bf16.msra.mxu0 0
    %4485 = vmatprep.subr.bf16.mxu0 0
    %4486 = vmatpush1.bf16.msra.mxu0 0
    %4487 = vmatprep.subr.bf16.mxu0 0
    %4488 = vmatpush1.bf16.msra.mxu0 0
    %4489 = vmatprep.mubr.bf16.mxu0 0
    %4490 = vmatmul.mubr.bf16.gmra.mrb[0].mxu0 %v4129
    %v4491 = vpop.f32.mrb[0].mxu0
    %v4492 = vadd.f32 %v4451, %v4491
    %v4493 = vpop.f32.mrb[0].mxu0
    %v4494 = vpop.f32.mrb[0].mxu0
    %v4495 = vadd.f32 %v4454, %v4494
    %v4496 = vpop.f32.mrb[0].mxu0
    %4497 = vdwg.mxu0
    %s4498 = scalar_lea.vmem [#allocation11], 6
    %v4499 = vld [vmem:[%s4498] sm:$0x1]
    %v4501 = vlaneseq
    %v4502 = vshrl.u32 %v4501, 7
    %v4503 = vsub.s32 0, %v4502
    %v4504 = vrot.slane %v4499, %v4503
    %v4506 = vadd.f32 %v4492, %v4504
    %v4507 = vadd.f32 %v4495, %v4504
    %v4508 = vmax.f32 %v4506, 0.0
    %v4509 = vmax.f32 %v4507, 0.0
    %v4510 = vpack.c.bf16 %v4508, %v4508
    %v4511 = vpack.c.bf16 %v4509, %v4509
    %v4514 = vunpack.c.l.b16 %v4510
    %v4515 = vunpack.c.l.b16 %v4511
    %v4516 = vpack.c.b16 %v4514, %v4514
    %v4517 = vpack.c.b16 %v4515, %v4515
    %v4518 = vrot.slane %v4516, 7
    %v4519 = vrot.slane %v4518, 4
    %v4520 = vrot.slane %v4517, 7
    %v4521 = vrot.slane %v4520, 4
    %4526 = vst [vmem:[#allocation2] sm:$0xe] %v4518
    %4527 = vst [vmem:[#allocation2 + $0x4] sm:$0x1] %v4519
    %4528 = vst [vmem:[#allocation2 + $0x8] sm:$0xe] %v4520
    %4529 = vst [vmem:[#allocation2 + $0xc] sm:$0x1] %v4521
    %v4530 = vld [vmem:[#allocation2] sm:$0xf]
    %v4531 = vld [vmem:[#allocation2 + $0x4] sm:$0x3]
    %v4532 = vld [vmem:[#allocation2 + $0x8] sm:$0xf]
    %v4533 = vld [vmem:[#allocation2 + $0xc] sm:$0x3]
    %v4538 = vunpack.c.l.b16 %v4530
    %v4539 = vunpack.c.l.b16 %v4531
    %v4540 = vunpack.c.l.b16 %v4532
    %v4541 = vunpack.c.l.b16 %v4533
    %v4542 = vpack.c.b16 %v4539, %v4538
    %v4543 = vpack.c.b16 %v4541, %v4540
    %v4545 = vshrl.u32 %v4542, 16
    %v4547 = vshll.u32 %v4542, 16
    %v4549 = vrot.slane %v4547, 1
    %v4550 = vor.u32 %v4545, %v4549
    %v4552 = vshrl.u32 %v4543, 16
    %v4554 = vshll.u32 %v4543, 16
    %v4556 = vrot.slane %v4554, 1
    %v4557 = vor.u32 %v4552, %v4556
    %v4558 = vrot.slane %v4542, 1
    %v4559 = vrot.slane %v4543, 1
    %v4560 = vrot.slane %v4545, 1
    %v4561 = vrot.slane %v4547, 2
    %v4562 = vor.u32 %v4560, %v4561
    %v4563 = vrot.slane %v4552, 1
    %v4564 = vrot.slane %v4554, 2
    %v4565 = vor.u32 %v4563, %v4564
    %v4566 = vrot.slane %v4542, 2
    %v4567 = vrot.slane %v4543, 2
    %v4568 = vunpack.c.l.b16 %v4550
    %v4569 = vunpack.c.l.b16 %v4558
    %v4570 = vunpack.c.l.b16 %v4562
    %v4571 = vunpack.c.l.b16 %v4566
    %v4572 = vunpack.c.l.b16 %v4557
    %v4573 = vunpack.c.l.b16 %v4559
    %v4574 = vunpack.c.l.b16 %v4565
    %v4575 = vunpack.c.l.b16 %v4567
    %s4576 = scalar_lea.vmem [#allocation9], 2240
    %v4577 = vld [vmem:[%s4576] sm:$0xf]
    %v4578 = vld [vmem:[%s4576 + $0x4] sm:$0xf]
    %v4579 = vld [vmem:[%s4576 + $0x8] sm:$0xf]
    %v4580 = vld [vmem:[%s4576 + $0xc] sm:$0xf]
    %v4581 = vld [vmem:[%s4576 + $0x10] sm:$0xf]
    %v4582 = vld [vmem:[%s4576 + $0x14] sm:$0xf]
    %v4583 = vld [vmem:[%s4576 + $0x18] sm:$0xf]
    %v4584 = vld [vmem:[%s4576 + $0x1c] sm:$0xf]
    %v4585 = vld [vmem:[%s4576 + $0x20] sm:$0xf]
    %v4586 = vld [vmem:[%s4576 + $0x24] sm:$0xf]
    %v4587 = vld [vmem:[%s4576 + $0x28] sm:$0xf]
    %v4588 = vld [vmem:[%s4576 + $0x2c] sm:$0xf]
    %v4589 = vld [vmem:[%s4576 + $0x30] sm:$0xf]
    %v4590 = vld [vmem:[%s4576 + $0x34] sm:$0xf]
    %v4591 = vld [vmem:[%s4576 + $0x38] sm:$0xf]
    %v4592 = vld [vmem:[%s4576 + $0x3c] sm:$0xf]
    %v4593 = vld [vmem:[%s4576 + $0x40] sm:$0xf]
    %v4594 = vld [vmem:[%s4576 + $0x44] sm:$0xf]
    %v4595 = vld [vmem:[%s4576 + $0x48] sm:$0xf]
    %v4596 = vld [vmem:[%s4576 + $0x4c] sm:$0xf]
    %v4597 = vld [vmem:[%s4576 + $0x50] sm:$0xf]
    %v4598 = vld [vmem:[%s4576 + $0x54] sm:$0xf]
    %v4599 = vld [vmem:[%s4576 + $0x58] sm:$0xf]
    %v4600 = vld [vmem:[%s4576 + $0x5c] sm:$0xf]
    %v4601 = vld [vmem:[%s4576 + $0x60] sm:$0xf]
    %v4602 = vld [vmem:[%s4576 + $0x64] sm:$0xf]
    %v4603 = vld [vmem:[%s4576 + $0x68] sm:$0xf]
    %v4604 = vld [vmem:[%s4576 + $0x6c] sm:$0xf]
    %v4605 = vld [vmem:[%s4576 + $0x70] sm:$0xf]
    %v4606 = vld [vmem:[%s4576 + $0x74] sm:$0xf]
    %v4607 = vld [vmem:[%s4576 + $0x78] sm:$0xf]
    %v4608 = vld [vmem:[%s4576 + $0x7c] sm:$0xf]
    %v4609 = vld [vmem:[%s4576 + $0x80] sm:$0xf]
    %v4610 = vld [vmem:[%s4576 + $0x84] sm:$0xf]
    %v4611 = vld [vmem:[%s4576 + $0x88] sm:$0xf]
    %v4612 = vld [vmem:[%s4576 + $0x8c] sm:$0xf]
    %v4613 = vld [vmem:[%s4576 + $0x90] sm:$0xf]
    %v4614 = vld [vmem:[%s4576 + $0x94] sm:$0xf]
    %v4615 = vld [vmem:[%s4576 + $0x98] sm:$0xf]
    %v4616 = vld [vmem:[%s4576 + $0x9c] sm:$0xf]
    %v4617 = vld [vmem:[%s4576 + $0xa0] sm:$0xf]
    %v4618 = vld [vmem:[%s4576 + $0xa4] sm:$0xf]
    %v4619 = vld [vmem:[%s4576 + $0xa8] sm:$0xf]
    %v4620 = vld [vmem:[%s4576 + $0xac] sm:$0xf]
    %v4621 = vld [vmem:[%s4576 + $0xb0] sm:$0xf]
    %v4622 = vld [vmem:[%s4576 + $0xb4] sm:$0xf]
    %v4623 = vld [vmem:[%s4576 + $0xb8] sm:$0xf]
    %v4624 = vld [vmem:[%s4576 + $0xbc] sm:$0xf]
    %v4625 = vld [vmem:[%s4576 + $0xc0] sm:$0xf]
    %v4626 = vld [vmem:[%s4576 + $0xc4] sm:$0xf]
    %v4627 = vld [vmem:[%s4576 + $0xc8] sm:$0xf]
    %v4628 = vld [vmem:[%s4576 + $0xcc] sm:$0xf]
    %v4629 = vld [vmem:[%s4576 + $0xd0] sm:$0xf]
    %v4630 = vld [vmem:[%s4576 + $0xd4] sm:$0xf]
    %v4631 = vld [vmem:[%s4576 + $0xd8] sm:$0xf]
    %v4632 = vld [vmem:[%s4576 + $0xdc] sm:$0xf]
    %v4633 = vld [vmem:[%s4576 + $0xe0] sm:$0xf]
    %v4634 = vld [vmem:[%s4576 + $0xe4] sm:$0xf]
    %v4635 = vld [vmem:[%s4576 + $0xe8] sm:$0xf]
    %v4636 = vld [vmem:[%s4576 + $0xec] sm:$0xf]
    %v4637 = vld [vmem:[%s4576 + $0xf0] sm:$0xf]
    %v4638 = vld [vmem:[%s4576 + $0xf4] sm:$0xf]
    %v4639 = vld [vmem:[%s4576 + $0xf8] sm:$0xf]
    %v4640 = vld [vmem:[%s4576 + $0xfc] sm:$0xf]
    %v4641 = vld [vmem:[%s4576 + $0x100] sm:$0xf]
    %v4642 = vld [vmem:[%s4576 + $0x104] sm:$0xf]
    %v4643 = vld [vmem:[%s4576 + $0x108] sm:$0xf]
    %v4644 = vld [vmem:[%s4576 + $0x10c] sm:$0xf]
    %v4645 = vld [vmem:[%s4576 + $0x110] sm:$0xf]
    %v4646 = vld [vmem:[%s4576 + $0x114] sm:$0xf]
    %v4647 = vld [vmem:[%s4576 + $0x118] sm:$0xf]
    %v4648 = vld [vmem:[%s4576 + $0x11c] sm:$0xf]
    %v4649 = vld [vmem:[%s4576 + $0x120] sm:$0xf]
    %v4650 = vld [vmem:[%s4576 + $0x124] sm:$0xf]
    %v4651 = vld [vmem:[%s4576 + $0x128] sm:$0xf]
    %v4652 = vld [vmem:[%s4576 + $0x12c] sm:$0xf]
    %v4653 = vld [vmem:[%s4576 + $0x130] sm:$0xf]
    %v4654 = vld [vmem:[%s4576 + $0x134] sm:$0xf]
    %v4655 = vld [vmem:[%s4576 + $0x138] sm:$0xf]
    %v4656 = vld [vmem:[%s4576 + $0x13c] sm:$0xf]
    %v4657 = vpack.c.b16 %v4540, %v4538
    %v4658 = vpack.c.b16 %v4572, %v4568
    %v4659 = vpack.c.b16 %v4573, %v4569
    %v4660 = vpack.c.b16 %v4574, %v4570
    %v4661 = vpack.c.b16 %v4575, %v4571
    %v4747 = vunpack.c.l.b16 %v4577
    %v4748 = vunpack.c.l.b16 %v4578
    %v4749 = vunpack.c.l.b16 %v4579
    %v4750 = vunpack.c.l.b16 %v4580
    %v4751 = vunpack.c.l.b16 %v4581
    %v4752 = vunpack.c.l.b16 %v4582
    %v4753 = vunpack.c.l.b16 %v4583
    %v4754 = vunpack.c.l.b16 %v4584
    %v4755 = vunpack.c.l.b16 %v4585
    %v4756 = vunpack.c.l.b16 %v4586
    %v4757 = vunpack.c.l.b16 %v4587
    %v4758 = vunpack.c.l.b16 %v4588
    %v4759 = vunpack.c.l.b16 %v4589
    %v4760 = vunpack.c.l.b16 %v4590
    %v4761 = vunpack.c.l.b16 %v4591
    %v4762 = vunpack.c.l.b16 %v4592
    %v4763 = vunpack.c.l.b16 %v4593
    %v4764 = vunpack.c.l.b16 %v4594
    %v4765 = vunpack.c.l.b16 %v4595
    %v4766 = vunpack.c.l.b16 %v4596
    %v4767 = vunpack.c.l.b16 %v4597
    %v4768 = vunpack.c.l.b16 %v4598
    %v4769 = vunpack.c.l.b16 %v4599
    %v4770 = vunpack.c.l.b16 %v4600
    %v4771 = vunpack.c.l.b16 %v4601
    %v4772 = vunpack.c.l.b16 %v4602
    %v4773 = vunpack.c.l.b16 %v4603
    %v4774 = vunpack.c.l.b16 %v4604
    %v4775 = vunpack.c.l.b16 %v4605
    %v4776 = vunpack.c.l.b16 %v4606
    %v4777 = vunpack.c.l.b16 %v4607
    %v4778 = vunpack.c.l.b16 %v4608
    %v4779 = vunpack.c.l.b16 %v4609
    %v4780 = vunpack.c.l.b16 %v4610
    %v4781 = vunpack.c.l.b16 %v4611
    %v4782 = vunpack.c.l.b16 %v4612
    %v4783 = vunpack.c.l.b16 %v4613
    %v4784 = vunpack.c.l.b16 %v4614
    %v4785 = vunpack.c.l.b16 %v4615
    %v4786 = vunpack.c.l.b16 %v4616
    %v4787 = vunpack.c.l.b16 %v4617
    %v4788 = vunpack.c.l.b16 %v4618
    %v4789 = vunpack.c.l.b16 %v4619
    %v4790 = vunpack.c.l.b16 %v4620
    %v4791 = vunpack.c.l.b16 %v4621
    %v4792 = vunpack.c.l.b16 %v4622
    %v4793 = vunpack.c.l.b16 %v4623
    %v4794 = vunpack.c.l.b16 %v4624
    %v4795 = vunpack.c.l.b16 %v4625
    %v4796 = vunpack.c.l.b16 %v4626
    %v4797 = vunpack.c.l.b16 %v4627
    %v4798 = vunpack.c.l.b16 %v4628
    %v4799 = vunpack.c.l.b16 %v4629
    %v4800 = vunpack.c.l.b16 %v4630
    %v4801 = vunpack.c.l.b16 %v4631
    %v4802 = vunpack.c.l.b16 %v4632
    %v4803 = vunpack.c.l.b16 %v4633
    %v4804 = vunpack.c.l.b16 %v4634
    %v4805 = vunpack.c.l.b16 %v4635
    %v4806 = vunpack.c.l.b16 %v4636
    %v4807 = vunpack.c.l.b16 %v4637
    %v4808 = vunpack.c.l.b16 %v4638
    %v4809 = vunpack.c.l.b16 %v4639
    %v4810 = vunpack.c.l.b16 %v4640
    %v4811 = vunpack.c.l.b16 %v4641
    %v4812 = vunpack.c.l.b16 %v4642
    %v4813 = vunpack.c.l.b16 %v4643
    %v4814 = vunpack.c.l.b16 %v4644
    %v4815 = vunpack.c.l.b16 %v4645
    %v4816 = vunpack.c.l.b16 %v4646
    %v4817 = vunpack.c.l.b16 %v4647
    %v4818 = vunpack.c.l.b16 %v4648
    %v4819 = vunpack.c.l.b16 %v4649
    %v4820 = vunpack.c.l.b16 %v4650
    %v4821 = vunpack.c.l.b16 %v4651
    %v4822 = vunpack.c.l.b16 %v4652
    %v4823 = vunpack.c.l.b16 %v4653
    %v4824 = vunpack.c.l.b16 %v4654
    %v4825 = vunpack.c.l.b16 %v4655
    %v4826 = vunpack.c.l.b16 %v4656
    %v4827 = vpack.c.b16 %v4748, %v4747
    %v4828 = vpack.c.b16 %v4750, %v4749
    %v4829 = vpack.c.b16 %v4752, %v4751
    %v4830 = vpack.c.b16 %v4754, %v4753
    %v4831 = vpack.c.b16 %v4756, %v4755
    %v4832 = vpack.c.b16 %v4758, %v4757
    %v4833 = vpack.c.b16 %v4760, %v4759
    %v4834 = vpack.c.b16 %v4762, %v4761
    %v4835 = vpack.c.b16 %v4764, %v4763
    %v4836 = vpack.c.b16 %v4766, %v4765
    %v4837 = vpack.c.b16 %v4768, %v4767
    %v4838 = vpack.c.b16 %v4770, %v4769
    %v4839 = vpack.c.b16 %v4772, %v4771
    %v4840 = vpack.c.b16 %v4774, %v4773
    %v4841 = vpack.c.b16 %v4776, %v4775
    %v4842 = vpack.c.b16 %v4778, %v4777
    %v4843 = vpack.c.b16 %v4780, %v4779
    %v4844 = vpack.c.b16 %v4782, %v4781
    %v4845 = vpack.c.b16 %v4784, %v4783
    %v4846 = vpack.c.b16 %v4786, %v4785
    %v4847 = vpack.c.b16 %v4788, %v4787
    %v4848 = vpack.c.b16 %v4790, %v4789
    %v4849 = vpack.c.b16 %v4792, %v4791
    %v4850 = vpack.c.b16 %v4794, %v4793
    %v4851 = vpack.c.b16 %v4796, %v4795
    %v4852 = vpack.c.b16 %v4798, %v4797
    %v4853 = vpack.c.b16 %v4800, %v4799
    %v4854 = vpack.c.b16 %v4802, %v4801
    %v4855 = vpack.c.b16 %v4804, %v4803
    %v4856 = vpack.c.b16 %v4806, %v4805
    %v4857 = vpack.c.b16 %v4808, %v4807
    %v4858 = vpack.c.b16 %v4810, %v4809
    %v4859 = vpack.c.b16 %v4812, %v4811
    %v4860 = vpack.c.b16 %v4814, %v4813
    %v4861 = vpack.c.b16 %v4816, %v4815
    %v4862 = vpack.c.b16 %v4818, %v4817
    %v4863 = vpack.c.b16 %v4820, %v4819
    %v4864 = vpack.c.b16 %v4822, %v4821
    %v4865 = vpack.c.b16 %v4824, %v4823
    %v4866 = vpack.c.b16 %v4826, %v4825
    %4907 = vmatprep.subr.bf16.mxu0 0
    %4908 = vmatpush1.bf16.msra.mxu0 %v4827
    %4909 = vmatprep.subr.bf16.mxu0 0
    %4910 = vmatpush1.bf16.msra.mxu0 %v4828
    %4911 = vmatprep.subr.bf16.mxu0 0
    %4912 = vmatpush1.bf16.msra.mxu0 %v4829
    %4913 = vmatprep.subr.bf16.mxu0 0
    %4914 = vmatpush1.bf16.msra.mxu0 %v4830
    %4915 = vmatprep.subr.bf16.mxu0 0
    %4916 = vmatpush1.bf16.msra.mxu0 %v4831
    %4917 = vmatprep.subr.bf16.mxu0 0
    %4918 = vmatpush1.bf16.msra.mxu0 %v4832
    %4919 = vmatprep.subr.bf16.mxu0 0
    %4920 = vmatpush1.bf16.msra.mxu0 %v4833
    %4921 = vmatprep.subr.bf16.mxu0 0
    %4922 = vmatpush1.bf16.msra.mxu0 %v4834
    %4923 = vmatprep.subr.bf16.mxu0 0
    %4924 = vmatpush1.bf16.msra.mxu0 %v4835
    %4925 = vmatprep.subr.bf16.mxu0 0
    %4926 = vmatpush1.bf16.msra.mxu0 %v4836
    %4927 = vmatprep.subr.bf16.mxu0 0
    %4928 = vmatpush1.bf16.msra.mxu0 %v4837
    %4929 = vmatprep.subr.bf16.mxu0 0
    %4930 = vmatpush1.bf16.msra.mxu0 %v4838
    %4931 = vmatprep.subr.bf16.mxu0 0
    %4932 = vmatpush1.bf16.msra.mxu0 %v4839
    %4933 = vmatprep.subr.bf16.mxu0 0
    %4934 = vmatpush1.bf16.msra.mxu0 %v4840
    %4935 = vmatprep.subr.bf16.mxu0 0
    %4936 = vmatpush1.bf16.msra.mxu0 %v4841
    %4937 = vmatprep.subr.bf16.mxu0 0
    %4938 = vmatpush1.bf16.msra.mxu0 %v4842
    %4939 = vmatprep.mubr.bf16.mxu0 %v4658
    %4940 = vmatmul.mubr.bf16.gmra.mrb[0].mxu0 %v4657
    %v4941 = vpop.f32.mrb[0].mxu0
    %v4942 = vadd.f32 0.0, %v4941
    %v4943 = vpop.f32.mrb[0].mxu0
    %v4944 = vpop.f32.mrb[0].mxu0
    %v4945 = vadd.f32 0.0, %v4944
    %v4946 = vpop.f32.mrb[0].mxu0
    %4947 = vdwg.mxu0
    %4948 = vmatprep.subr.bf16.mxu0 0
    %4949 = vmatpush1.bf16.msra.mxu0 %v4843
    %4950 = vmatprep.subr.bf16.mxu0 0
    %4951 = vmatpush1.bf16.msra.mxu0 %v4844
    %4952 = vmatprep.subr.bf16.mxu0 0
    %4953 = vmatpush1.bf16.msra.mxu0 %v4845
    %4954 = vmatprep.subr.bf16.mxu0 0
    %4955 = vmatpush1.bf16.msra.mxu0 %v4846
    %4956 = vmatprep.subr.bf16.mxu0 0
    %4957 = vmatpush1.bf16.msra.mxu0 %v4847
    %4958 = vmatprep.subr.bf16.mxu0 0
    %4959 = vmatpush1.bf16.msra.mxu0 %v4848
    %4960 = vmatprep.subr.bf16.mxu0 0
    %4961 = vmatpush1.bf16.msra.mxu0 %v4849
    %4962 = vmatprep.subr.bf16.mxu0 0
    %4963 = vmatpush1.bf16.msra.mxu0 %v4850
    %4964 = vmatprep.subr.bf16.mxu0 0
    %4965 = vmatpush1.bf16.msra.mxu0 %v4851
    %4966 = vmatprep.subr.bf16.mxu0 0
    %4967 = vmatpush1.bf16.msra.mxu0 %v4852
    %4968 = vmatprep.subr.bf16.mxu0 0
    %4969 = vmatpush1.bf16.msra.mxu0 %v4853
    %4970 = vmatprep.subr.bf16.mxu0 0
    %4971 = vmatpush1.bf16.msra.mxu0 %v4854
    %4972 = vmatprep.subr.bf16.mxu0 0
    %4973 = vmatpush1.bf16.msra.mxu0 %v4855
    %4974 = vmatprep.subr.bf16.mxu0 0
    %4975 = vmatpush1.bf16.msra.mxu0 %v4856
    %4976 = vmatprep.subr.bf16.mxu0 0
    %4977 = vmatpush1.bf16.msra.mxu0 %v4857
    %4978 = vmatprep.subr.bf16.mxu0 0
    %4979 = vmatpush1.bf16.msra.mxu0 %v4858
    %4980 = vmatprep.mubr.bf16.mxu0 %v4660
    %4981 = vmatmul.mubr.bf16.gmra.mrb[0].mxu0 %v4659
    %v4982 = vpop.f32.mrb[0].mxu0
    %v4983 = vadd.f32 %v4942, %v4982
    %v4984 = vpop.f32.mrb[0].mxu0
    %v4985 = vpop.f32.mrb[0].mxu0
    %v4986 = vadd.f32 %v4945, %v4985
    %v4987 = vpop.f32.mrb[0].mxu0
    %4988 = vdwg.mxu0
    %4989 = vmatprep.subr.bf16.mxu0 0
    %4990 = vmatpush1.bf16.msra.mxu0 %v4859
    %4991 = vmatprep.subr.bf16.mxu0 0
    %4992 = vmatpush1.bf16.msra.mxu0 %v4860
    %4993 = vmatprep.subr.bf16.mxu0 0
    %4994 = vmatpush1.bf16.msra.mxu0 %v4861
    %4995 = vmatprep.subr.bf16.mxu0 0
    %4996 = vmatpush1.bf16.msra.mxu0 %v4862
    %4997 = vmatprep.subr.bf16.mxu0 0
    %4998 = vmatpush1.bf16.msra.mxu0 %v4863
    %4999 = vmatprep.subr.bf16.mxu0 0
    %5000 = vmatpush1.bf16.msra.mxu0 %v4864
    %5001 = vmatprep.subr.bf16.mxu0 0
    %5002 = vmatpush1.bf16.msra.mxu0 %v4865
    %5003 = vmatprep.subr.bf16.mxu0 0
    %5004 = vmatpush1.bf16.msra.mxu0 %v4866
    %5005 = vmatprep.subr.bf16.mxu0 0
    %5006 = vmatpush1.bf16.msra.mxu0 0
    %5007 = vmatprep.subr.bf16.mxu0 0
    %5008 = vmatpush1.bf16.msra.mxu0 0
    %5009 = vmatprep.subr.bf16.mxu0 0
    %5010 = vmatpush1.bf16.msra.mxu0 0
    %5011 = vmatprep.subr.bf16.mxu0 0
    %5012 = vmatpush1.bf16.msra.mxu0 0
    %5013 = vmatprep.subr.bf16.mxu0 0
    %5014 = vmatpush1.bf16.msra.mxu0 0
    %5015 = vmatprep.subr.bf16.mxu0 0
    %5016 = vmatpush1.bf16.msra.mxu0 0
    %5017 = vmatprep.subr.bf16.mxu0 0
    %5018 = vmatpush1.bf16.msra.mxu0 0
    %5019 = vmatprep.subr.bf16.mxu0 0
    %5020 = vmatpush1.bf16.msra.mxu0 0
    %5021 = vmatprep.mubr.bf16.mxu0 0
    %5022 = vmatmul.mubr.bf16.gmra.mrb[0].mxu0 %v4661
    %v5023 = vpop.f32.mrb[0].mxu0
    %v5024 = vadd.f32 %v4983, %v5023
    %v5025 = vpop.f32.mrb[0].mxu0
    %v5026 = vpop.f32.mrb[0].mxu0
    %v5027 = vadd.f32 %v4986, %v5026
    %v5028 = vpop.f32.mrb[0].mxu0
    %5029 = vdwg.mxu0
    %s5030 = scalar_lea.vmem [#allocation11], 7
    %v5031 = vld [vmem:[%s5030] sm:$0x1]
    %v5033 = vlaneseq
    %v5034 = vshrl.u32 %v5033, 7
    %v5035 = vsub.s32 0, %v5034
    %v5036 = vrot.slane %v5031, %v5035
    %v5038 = vadd.f32 %v5024, %v5036
    %v5039 = vadd.f32 %v5027, %v5036
    %v5040 = vadd.f32 %v3974, %v5038
    %v5041 = vadd.f32 %v3975, %v5039
    %v5042 = vmax.f32 %v5040, 0.0
    %v5043 = vmax.f32 %v5041, 0.0
    %v5044 = vpack.c.bf16 %v5042, %v5042
    %v5045 = vpack.c.bf16 %v5043, %v5043
    %v5048 = vunpack.c.l.b16 %v5044
    %v5049 = vunpack.c.l.b16 %v5045
    %v5050 = vpack.c.b16 %v5048, %v5048
    %v5051 = vpack.c.b16 %v5049, %v5049
    %v5052 = vrot.slane %v5050, 7
    %v5053 = vrot.slane %v5052, 4
    %v5054 = vrot.slane %v5051, 7
    %v5055 = vrot.slane %v5054, 4
    %5060 = vst [vmem:[#allocation2] sm:$0xe] %v5052
    %5061 = vst [vmem:[#allocation2 + $0x4] sm:$0x1] %v5053
    %5062 = vst [vmem:[#allocation2 + $0x8] sm:$0xe] %v5054
    %5063 = vst [vmem:[#allocation2 + $0xc] sm:$0x1] %v5055
    %v5064 = vld [vmem:[#allocation2] sm:$0xf]
    %v5065 = vld [vmem:[#allocation2 + $0x4] sm:$0x3]
    %v5066 = vld [vmem:[#allocation2 + $0x8] sm:$0xf]
    %v5067 = vld [vmem:[#allocation2 + $0xc] sm:$0x3]
    %v5072 = vunpack.c.l.b16 %v5064
    %v5073 = vunpack.c.l.b16 %v5065
    %v5074 = vunpack.c.l.b16 %v5066
    %v5075 = vunpack.c.l.b16 %v5067
    %v5076 = vpack.c.b16 %v5073, %v5072
    %v5077 = vpack.c.b16 %v5075, %v5074
    %v5079 = vshrl.u32 %v5076, 16
    %v5081 = vshll.u32 %v5076, 16
    %v5083 = vrot.slane %v5081, 1
    %v5084 = vor.u32 %v5079, %v5083
    %v5086 = vshrl.u32 %v5077, 16
    %v5088 = vshll.u32 %v5077, 16
    %v5090 = vrot.slane %v5088, 1
    %v5091 = vor.u32 %v5086, %v5090
    %v5092 = vrot.slane %v5076, 1
    %v5093 = vrot.slane %v5077, 1
    %v5094 = vrot.slane %v5079, 1
    %v5095 = vrot.slane %v5081, 2
    %v5096 = vor.u32 %v5094, %v5095
    %v5097 = vrot.slane %v5086, 1
    %v5098 = vrot.slane %v5088, 2
    %v5099 = vor.u32 %v5097, %v5098
    %v5100 = vrot.slane %v5076, 2
    %v5101 = vrot.slane %v5077, 2
    %v5102 = vunpack.c.l.b16 %v5084
    %v5103 = vunpack.c.l.b16 %v5092
    %v5104 = vunpack.c.l.b16 %v5096
    %v5105 = vunpack.c.l.b16 %v5100
    %v5106 = vunpack.c.l.b16 %v5091
    %v5107 = vunpack.c.l.b16 %v5093
    %v5108 = vunpack.c.l.b16 %v5099
    %v5109 = vunpack.c.l.b16 %v5101
    %s5110 = scalar_lea.vmem [#allocation9], 2560
    %v5111 = vld [vmem:[%s5110] sm:$0xf]
    %v5112 = vld [vmem:[%s5110 + $0x4] sm:$0xf]
    %v5113 = vld [vmem:[%s5110 + $0x8] sm:$0xf]
    %v5114 = vld [vmem:[%s5110 + $0xc] sm:$0xf]
    %v5115 = vld [vmem:[%s5110 + $0x10] sm:$0xf]
    %v5116 = vld [vmem:[%s5110 + $0x14] sm:$0xf]
    %v5117 = vld [vmem:[%s5110 + $0x18] sm:$0xf]
    %v5118 = vld [vmem:[%s5110 + $0x1c] sm:$0xf]
    %v5119 = vld [vmem:[%s5110 + $0x20] sm:$0xf]
    %v5120 = vld [vmem:[%s5110 + $0x24] sm:$0xf]
    %v5121 = vld [vmem:[%s5110 + $0x28] sm:$0xf]
    %v5122 = vld [vmem:[%s5110 + $0x2c] sm:$0xf]
    %v5123 = vld [vmem:[%s5110 + $0x30] sm:$0xf]
    %v5124 = vld [vmem:[%s5110 + $0x34] sm:$0xf]
    %v5125 = vld [vmem:[%s5110 + $0x38] sm:$0xf]
    %v5126 = vld [vmem:[%s5110 + $0x3c] sm:$0xf]
    %v5127 = vld [vmem:[%s5110 + $0x40] sm:$0xf]
    %v5128 = vld [vmem:[%s5110 + $0x44] sm:$0xf]
    %v5129 = vld [vmem:[%s5110 + $0x48] sm:$0xf]
    %v5130 = vld [vmem:[%s5110 + $0x4c] sm:$0xf]
    %v5131 = vld [vmem:[%s5110 + $0x50] sm:$0xf]
    %v5132 = vld [vmem:[%s5110 + $0x54] sm:$0xf]
    %v5133 = vld [vmem:[%s5110 + $0x58] sm:$0xf]
    %v5134 = vld [vmem:[%s5110 + $0x5c] sm:$0xf]
    %v5135 = vld [vmem:[%s5110 + $0x60] sm:$0xf]
    %v5136 = vld [vmem:[%s5110 + $0x64] sm:$0xf]
    %v5137 = vld [vmem:[%s5110 + $0x68] sm:$0xf]
    %v5138 = vld [vmem:[%s5110 + $0x6c] sm:$0xf]
    %v5139 = vld [vmem:[%s5110 + $0x70] sm:$0xf]
    %v5140 = vld [vmem:[%s5110 + $0x74] sm:$0xf]
    %v5141 = vld [vmem:[%s5110 + $0x78] sm:$0xf]
    %v5142 = vld [vmem:[%s5110 + $0x7c] sm:$0xf]
    %v5143 = vld [vmem:[%s5110 + $0x80] sm:$0xf]
    %v5144 = vld [vmem:[%s5110 + $0x84] sm:$0xf]
    %v5145 = vld [vmem:[%s5110 + $0x88] sm:$0xf]
    %v5146 = vld [vmem:[%s5110 + $0x8c] sm:$0xf]
    %v5147 = vld [vmem:[%s5110 + $0x90] sm:$0xf]
    %v5148 = vld [vmem:[%s5110 + $0x94] sm:$0xf]
    %v5149 = vld [vmem:[%s5110 + $0x98] sm:$0xf]
    %v5150 = vld [vmem:[%s5110 + $0x9c] sm:$0xf]
    %v5151 = vld [vmem:[%s5110 + $0xa0] sm:$0xf]
    %v5152 = vld [vmem:[%s5110 + $0xa4] sm:$0xf]
    %v5153 = vld [vmem:[%s5110 + $0xa8] sm:$0xf]
    %v5154 = vld [vmem:[%s5110 + $0xac] sm:$0xf]
    %v5155 = vld [vmem:[%s5110 + $0xb0] sm:$0xf]
    %v5156 = vld [vmem:[%s5110 + $0xb4] sm:$0xf]
    %v5157 = vld [vmem:[%s5110 + $0xb8] sm:$0xf]
    %v5158 = vld [vmem:[%s5110 + $0xbc] sm:$0xf]
    %v5159 = vld [vmem:[%s5110 + $0xc0] sm:$0xf]
    %v5160 = vld [vmem:[%s5110 + $0xc4] sm:$0xf]
    %v5161 = vld [vmem:[%s5110 + $0xc8] sm:$0xf]
    %v5162 = vld [vmem:[%s5110 + $0xcc] sm:$0xf]
    %v5163 = vld [vmem:[%s5110 + $0xd0] sm:$0xf]
    %v5164 = vld [vmem:[%s5110 + $0xd4] sm:$0xf]
    %v5165 = vld [vmem:[%s5110 + $0xd8] sm:$0xf]
    %v5166 = vld [vmem:[%s5110 + $0xdc] sm:$0xf]
    %v5167 = vld [vmem:[%s5110 + $0xe0] sm:$0xf]
    %v5168 = vld [vmem:[%s5110 + $0xe4] sm:$0xf]
    %v5169 = vld [vmem:[%s5110 + $0xe8] sm:$0xf]
    %v5170 = vld [vmem:[%s5110 + $0xec] sm:$0xf]
    %v5171 = vld [vmem:[%s5110 + $0xf0] sm:$0xf]
    %v5172 = vld [vmem:[%s5110 + $0xf4] sm:$0xf]
    %v5173 = vld [vmem:[%s5110 + $0xf8] sm:$0xf]
    %v5174 = vld [vmem:[%s5110 + $0xfc] sm:$0xf]
    %v5175 = vld [vmem:[%s5110 + $0x100] sm:$0xf]
    %v5176 = vld [vmem:[%s5110 + $0x104] sm:$0xf]
    %v5177 = vld [vmem:[%s5110 + $0x108] sm:$0xf]
    %v5178 = vld [vmem:[%s5110 + $0x10c] sm:$0xf]
    %v5179 = vld [vmem:[%s5110 + $0x110] sm:$0xf]
    %v5180 = vld [vmem:[%s5110 + $0x114] sm:$0xf]
    %v5181 = vld [vmem:[%s5110 + $0x118] sm:$0xf]
    %v5182 = vld [vmem:[%s5110 + $0x11c] sm:$0xf]
    %v5183 = vld [vmem:[%s5110 + $0x120] sm:$0xf]
    %v5184 = vld [vmem:[%s5110 + $0x124] sm:$0xf]
    %v5185 = vld [vmem:[%s5110 + $0x128] sm:$0xf]
    %v5186 = vld [vmem:[%s5110 + $0x12c] sm:$0xf]
    %v5187 = vld [vmem:[%s5110 + $0x130] sm:$0xf]
    %v5188 = vld [vmem:[%s5110 + $0x134] sm:$0xf]
    %v5189 = vld [vmem:[%s5110 + $0x138] sm:$0xf]
    %v5190 = vld [vmem:[%s5110 + $0x13c] sm:$0xf]
    %v5191 = vpack.c.b16 %v5074, %v5072
    %v5192 = vpack.c.b16 %v5106, %v5102
    %v5193 = vpack.c.b16 %v5107, %v5103
    %v5194 = vpack.c.b16 %v5108, %v5104
    %v5195 = vpack.c.b16 %v5109, %v5105
    %v5281 = vunpack.c.l.b16 %v5111
    %v5282 = vunpack.c.l.b16 %v5112
    %v5283 = vunpack.c.l.b16 %v5113
    %v5284 = vunpack.c.l.b16 %v5114
    %v5285 = vunpack.c.l.b16 %v5115
    %v5286 = vunpack.c.l.b16 %v5116
    %v5287 = vunpack.c.l.b16 %v5117
    %v5288 = vunpack.c.l.b16 %v5118
    %v5289 = vunpack.c.l.b16 %v5119
    %v5290 = vunpack.c.l.b16 %v5120
    %v5291 = vunpack.c.l.b16 %v5121
    %v5292 = vunpack.c.l.b16 %v5122
    %v5293 = vunpack.c.l.b16 %v5123
    %v5294 = vunpack.c.l.b16 %v5124
    %v5295 = vunpack.c.l.b16 %v5125
    %v5296 = vunpack.c.l.b16 %v5126
    %v5297 = vunpack.c.l.b16 %v5127
    %v5298 = vunpack.c.l.b16 %v5128
    %v5299 = vunpack.c.l.b16 %v5129
    %v5300 = vunpack.c.l.b16 %v5130
    %v5301 = vunpack.c.l.b16 %v5131
    %v5302 = vunpack.c.l.b16 %v5132
    %v5303 = vunpack.c.l.b16 %v5133
    %v5304 = vunpack.c.l.b16 %v5134
    %v5305 = vunpack.c.l.b16 %v5135
    %v5306 = vunpack.c.l.b16 %v5136
    %v5307 = vunpack.c.l.b16 %v5137
    %v5308 = vunpack.c.l.b16 %v5138
    %v5309 = vunpack.c.l.b16 %v5139
    %v5310 = vunpack.c.l.b16 %v5140
    %v5311 = vunpack.c.l.b16 %v5141
    %v5312 = vunpack.c.l.b16 %v5142
    %v5313 = vunpack.c.l.b16 %v5143
    %v5314 = vunpack.c.l.b16 %v5144
    %v5315 = vunpack.c.l.b16 %v5145
    %v5316 = vunpack.c.l.b16 %v5146
    %v5317 = vunpack.c.l.b16 %v5147
    %v5318 = vunpack.c.l.b16 %v5148
    %v5319 = vunpack.c.l.b16 %v5149
    %v5320 = vunpack.c.l.b16 %v5150
    %v5321 = vunpack.c.l.b16 %v5151
    %v5322 = vunpack.c.l.b16 %v5152
    %v5323 = vunpack.c.l.b16 %v5153
    %v5324 = vunpack.c.l.b16 %v5154
    %v5325 = vunpack.c.l.b16 %v5155
    %v5326 = vunpack.c.l.b16 %v5156
    %v5327 = vunpack.c.l.b16 %v5157
    %v5328 = vunpack.c.l.b16 %v5158
    %v5329 = vunpack.c.l.b16 %v5159
    %v5330 = vunpack.c.l.b16 %v5160
    %v5331 = vunpack.c.l.b16 %v5161
    %v5332 = vunpack.c.l.b16 %v5162
    %v5333 = vunpack.c.l.b16 %v5163
    %v5334 = vunpack.c.l.b16 %v5164
    %v5335 = vunpack.c.l.b16 %v5165
    %v5336 = vunpack.c.l.b16 %v5166
    %v5337 = vunpack.c.l.b16 %v5167
    %v5338 = vunpack.c.l.b16 %v5168
    %v5339 = vunpack.c.l.b16 %v5169
    %v5340 = vunpack.c.l.b16 %v5170
    %v5341 = vunpack.c.l.b16 %v5171
    %v5342 = vunpack.c.l.b16 %v5172
    %v5343 = vunpack.c.l.b16 %v5173
    %v5344 = vunpack.c.l.b16 %v5174
    %v5345 = vunpack.c.l.b16 %v5175
    %v5346 = vunpack.c.l.b16 %v5176
    %v5347 = vunpack.c.l.b16 %v5177
    %v5348 = vunpack.c.l.b16 %v5178
    %v5349 = vunpack.c.l.b16 %v5179
    %v5350 = vunpack.c.l.b16 %v5180
    %v5351 = vunpack.c.l.b16 %v5181
    %v5352 = vunpack.c.l.b16 %v5182
    %v5353 = vunpack.c.l.b16 %v5183
    %v5354 = vunpack.c.l.b16 %v5184
    %v5355 = vunpack.c.l.b16 %v5185
    %v5356 = vunpack.c.l.b16 %v5186
    %v5357 = vunpack.c.l.b16 %v5187
    %v5358 = vunpack.c.l.b16 %v5188
    %v5359 = vunpack.c.l.b16 %v5189
    %v5360 = vunpack.c.l.b16 %v5190
    %v5361 = vpack.c.b16 %v5282, %v5281
    %v5362 = vpack.c.b16 %v5284, %v5283
    %v5363 = vpack.c.b16 %v5286, %v5285
    %v5364 = vpack.c.b16 %v5288, %v5287
    %v5365 = vpack.c.b16 %v5290, %v5289
    %v5366 = vpack.c.b16 %v5292, %v5291
    %v5367 = vpack.c.b16 %v5294, %v5293
    %v5368 = vpack.c.b16 %v5296, %v5295
    %v5369 = vpack.c.b16 %v5298, %v5297
    %v5370 = vpack.c.b16 %v5300, %v5299
    %v5371 = vpack.c.b16 %v5302, %v5301
    %v5372 = vpack.c.b16 %v5304, %v5303
    %v5373 = vpack.c.b16 %v5306, %v5305
    %v5374 = vpack.c.b16 %v5308, %v5307
    %v5375 = vpack.c.b16 %v5310, %v5309
    %v5376 = vpack.c.b16 %v5312, %v5311
    %v5377 = vpack.c.b16 %v5314, %v5313
    %v5378 = vpack.c.b16 %v5316, %v5315
    %v5379 = vpack.c.b16 %v5318, %v5317
    %v5380 = vpack.c.b16 %v5320, %v5319
    %v5381 = vpack.c.b16 %v5322, %v5321
    %v5382 = vpack.c.b16 %v5324, %v5323
    %v5383 = vpack.c.b16 %v5326, %v5325
    %v5384 = vpack.c.b16 %v5328, %v5327
    %v5385 = vpack.c.b16 %v5330, %v5329
    %v5386 = vpack.c.b16 %v5332, %v5331
    %v5387 = vpack.c.b16 %v5334, %v5333
    %v5388 = vpack.c.b16 %v5336, %v5335
    %v5389 = vpack.c.b16 %v5338, %v5337
    %v5390 = vpack.c.b16 %v5340, %v5339
    %v5391 = vpack.c.b16 %v5342, %v5341
    %v5392 = vpack.c.b16 %v5344, %v5343
    %v5393 = vpack.c.b16 %v5346, %v5345
    %v5394 = vpack.c.b16 %v5348, %v5347
    %v5395 = vpack.c.b16 %v5350, %v5349
    %v5396 = vpack.c.b16 %v5352, %v5351
    %v5397 = vpack.c.b16 %v5354, %v5353
    %v5398 = vpack.c.b16 %v5356, %v5355
    %v5399 = vpack.c.b16 %v5358, %v5357
    %v5400 = vpack.c.b16 %v5360, %v5359
    %5441 = vmatprep.subr.bf16.mxu0 0
    %5442 = vmatpush1.bf16.msra.mxu0 %v5361
    %5443 = vmatprep.subr.bf16.mxu0 0
    %5444 = vmatpush1.bf16.msra.mxu0 %v5362
    %5445 = vmatprep.subr.bf16.mxu0 0
    %5446 = vmatpush1.bf16.msra.mxu0 %v5363
    %5447 = vmatprep.subr.bf16.mxu0 0
    %5448 = vmatpush1.bf16.msra.mxu0 %v5364
    %5449 = vmatprep.subr.bf16.mxu0 0
    %5450 = vmatpush1.bf16.msra.mxu0 %v5365
    %5451 = vmatprep.subr.bf16.mxu0 0
    %5452 = vmatpush1.bf16.msra.mxu0 %v5366
    %5453 = vmatprep.subr.bf16.mxu0 0
    %5454 = vmatpush1.bf16.msra.mxu0 %v5367
    %5455 = vmatprep.subr.bf16.mxu0 0
    %5456 = vmatpush1.bf16.msra.mxu0 %v5368
    %5457 = vmatprep.subr.bf16.mxu0 0
    %5458 = vmatpush1.bf16.msra.mxu0 %v5369
    %5459 = vmatprep.subr.bf16.mxu0 0
    %5460 = vmatpush1.bf16.msra.mxu0 %v5370
    %5461 = vmatprep.subr.bf16.mxu0 0
    %5462 = vmatpush1.bf16.msra.mxu0 %v5371
    %5463 = vmatprep.subr.bf16.mxu0 0
    %5464 = vmatpush1.bf16.msra.mxu0 %v5372
    %5465 = vmatprep.subr.bf16.mxu0 0
    %5466 = vmatpush1.bf16.msra.mxu0 %v5373
    %5467 = vmatprep.subr.bf16.mxu0 0
    %5468 = vmatpush1.bf16.msra.mxu0 %v5374
    %5469 = vmatprep.subr.bf16.mxu0 0
    %5470 = vmatpush1.bf16.msra.mxu0 %v5375
    %5471 = vmatprep.subr.bf16.mxu0 0
    %5472 = vmatpush1.bf16.msra.mxu0 %v5376
    %5473 = vmatprep.mubr.bf16.mxu0 %v5192
    %5474 = vmatmul.mubr.bf16.gmra.mrb[0].mxu0 %v5191
    %v5475 = vpop.f32.mrb[0].mxu0
    %v5476 = vadd.f32 0.0, %v5475
    %v5477 = vpop.f32.mrb[0].mxu0
    %v5478 = vpop.f32.mrb[0].mxu0
    %v5479 = vadd.f32 0.0, %v5478
    %v5480 = vpop.f32.mrb[0].mxu0
    %5481 = vdwg.mxu0
    %5482 = vmatprep.subr.bf16.mxu0 0
    %5483 = vmatpush1.bf16.msra.mxu0 %v5377
    %5484 = vmatprep.subr.bf16.mxu0 0
    %5485 = vmatpush1.bf16.msra.mxu0 %v5378
    %5486 = vmatprep.subr.bf16.mxu0 0
    %5487 = vmatpush1.bf16.msra.mxu0 %v5379
    %5488 = vmatprep.subr.bf16.mxu0 0
    %5489 = vmatpush1.bf16.msra.mxu0 %v5380
    %5490 = vmatprep.subr.bf16.mxu0 0
    %5491 = vmatpush1.bf16.msra.mxu0 %v5381
    %5492 = vmatprep.subr.bf16.mxu0 0
    %5493 = vmatpush1.bf16.msra.mxu0 %v5382
    %5494 = vmatprep.subr.bf16.mxu0 0
    %5495 = vmatpush1.bf16.msra.mxu0 %v5383
    %5496 = vmatprep.subr.bf16.mxu0 0
    %5497 = vmatpush1.bf16.msra.mxu0 %v5384
    %5498 = vmatprep.subr.bf16.mxu0 0
    %5499 = vmatpush1.bf16.msra.mxu0 %v5385
    %5500 = vmatprep.subr.bf16.mxu0 0
    %5501 = vmatpush1.bf16.msra.mxu0 %v5386
    %5502 = vmatprep.subr.bf16.mxu0 0
    %5503 = vmatpush1.bf16.msra.mxu0 %v5387
    %5504 = vmatprep.subr.bf16.mxu0 0
    %5505 = vmatpush1.bf16.msra.mxu0 %v5388
    %5506 = vmatprep.subr.bf16.mxu0 0
    %5507 = vmatpush1.bf16.msra.mxu0 %v5389
    %5508 = vmatprep.subr.bf16.mxu0 0
    %5509 = vmatpush1.bf16.msra.mxu0 %v5390
    %5510 = vmatprep.subr.bf16.mxu0 0
    %5511 = vmatpush1.bf16.msra.mxu0 %v5391
    %5512 = vmatprep.subr.bf16.mxu0 0
    %5513 = vmatpush1.bf16.msra.mxu0 %v5392
    %5514 = vmatprep.mubr.bf16.mxu0 %v5194
    %5515 = vmatmul.mubr.bf16.gmra.mrb[0].mxu0 %v5193
    %v5516 = vpop.f32.mrb[0].mxu0
    %v5517 = vadd.f32 %v5476, %v5516
    %v5518 = vpop.f32.mrb[0].mxu0
    %v5519 = vpop.f32.mrb[0].mxu0
    %v5520 = vadd.f32 %v5479, %v5519
    %v5521 = vpop.f32.mrb[0].mxu0
    %5522 = vdwg.mxu0
    %5523 = vmatprep.subr.bf16.mxu0 0
    %5524 = vmatpush1.bf16.msra.mxu0 %v5393
    %5525 = vmatprep.subr.bf16.mxu0 0
    %5526 = vmatpush1.bf16.msra.mxu0 %v5394
    %5527 = vmatprep.subr.bf16.mxu0 0
    %5528 = vmatpush1.bf16.msra.mxu0 %v5395
    %5529 = vmatprep.subr.bf16.mxu0 0
    %5530 = vmatpush1.bf16.msra.mxu0 %v5396
    %5531 = vmatprep.subr.bf16.mxu0 0
    %5532 = vmatpush1.bf16.msra.mxu0 %v5397
    %5533 = vmatprep.subr.bf16.mxu0 0
    %5534 = vmatpush1.bf16.msra.mxu0 %v5398
    %5535 = vmatprep.subr.bf16.mxu0 0
    %5536 = vmatpush1.bf16.msra.mxu0 %v5399
    %5537 = vmatprep.subr.bf16.mxu0 0
    %5538 = vmatpush1.bf16.msra.mxu0 %v5400
    %5539 = vmatprep.subr.bf16.mxu0 0
    %5540 = vmatpush1.bf16.msra.mxu0 0
    %5541 = vmatprep.subr.bf16.mxu0 0
    %5542 = vmatpush1.bf16.msra.mxu0 0
    %5543 = vmatprep.subr.bf16.mxu0 0
    %5544 = vmatpush1.bf16.msra.mxu0 0
    %5545 = vmatprep.subr.bf16.mxu0 0
    %5546 = vmatpush1.bf16.msra.mxu0 0
    %5547 = vmatprep.subr.bf16.mxu0 0
    %5548 = vmatpush1.bf16.msra.mxu0 0
    %5549 = vmatprep.subr.bf16.mxu0 0
    %5550 = vmatpush1.bf16.msra.mxu0 0
    %5551 = vmatprep.subr.bf16.mxu0 0
    %5552 = vmatpush1.bf16.msra.mxu0 0
    %5553 = vmatprep.subr.bf16.mxu0 0
    %5554 = vmatpush1.bf16.msra.mxu0 0
    %5555 = vmatprep.mubr.bf16.mxu0 0
    %5556 = vmatmul.mubr.bf16.gmra.mrb[0].mxu0 %v5195
    %v5557 = vpop.f32.mrb[0].mxu0
    %v5558 = vadd.f32 %v5517, %v5557
    %v5559 = vpop.f32.mrb[0].mxu0
    %v5560 = vpop.f32.mrb[0].mxu0
    %v5561 = vadd.f32 %v5520, %v5560
    %v5562 = vpop.f32.mrb[0].mxu0
    %5563 = vdwg.mxu0
    %s5564 = scalar_lea.vmem [#allocation11], 8
    %v5565 = vld [vmem:[%s5564] sm:$0x1]
    %v5567 = vlaneseq
    %v5568 = vshrl.u32 %v5567, 7
    %v5569 = vsub.s32 0, %v5568
    %v5570 = vrot.slane %v5565, %v5569
    %v5572 = vadd.f32 %v5558, %v5570
    %v5573 = vadd.f32 %v5561, %v5570
    %v5574 = vmax.f32 %v5572, 0.0
    %v5575 = vmax.f32 %v5573, 0.0
    %v5576 = vpack.c.bf16 %v5574, %v5574
    %v5577 = vpack.c.bf16 %v5575, %v5575
    %v5580 = vunpack.c.l.b16 %v5576
    %v5581 = vunpack.c.l.b16 %v5577
    %v5582 = vpack.c.b16 %v5580, %v5580
    %v5583 = vpack.c.b16 %v5581, %v5581
    %v5584 = vrot.slane %v5582, 7
    %v5585 = vrot.slane %v5584, 4
    %v5586 = vrot.slane %v5583, 7
    %v5587 = vrot.slane %v5586, 4
    %5592 = vst [vmem:[#allocation2] sm:$0xe] %v5584
    %5593 = vst [vmem:[#allocation2 + $0x4] sm:$0x1] %v5585
    %5594 = vst [vmem:[#allocation2 + $0x8] sm:$0xe] %v5586
    %5595 = vst [vmem:[#allocation2 + $0xc] sm:$0x1] %v5587
    %v5596 = vld [vmem:[#allocation2] sm:$0xf]
    %v5597 = vld [vmem:[#allocation2 + $0x4] sm:$0x3]
    %v5598 = vld [vmem:[#allocation2 + $0x8] sm:$0xf]
    %v5599 = vld [vmem:[#allocation2 + $0xc] sm:$0x3]
    %v5604 = vunpack.c.l.b16 %v5596
    %v5605 = vunpack.c.l.b16 %v5597
    %v5606 = vunpack.c.l.b16 %v5598
    %v5607 = vunpack.c.l.b16 %v5599
    %v5608 = vpack.c.b16 %v5605, %v5604
    %v5609 = vpack.c.b16 %v5607, %v5606
    %v5611 = vshrl.u32 %v5608, 16
    %v5613 = vshll.u32 %v5608, 16
    %v5615 = vrot.slane %v5613, 1
    %v5616 = vor.u32 %v5611, %v5615
    %v5618 = vshrl.u32 %v5609, 16
    %v5620 = vshll.u32 %v5609, 16
    %v5622 = vrot.slane %v5620, 1
    %v5623 = vor.u32 %v5618, %v5622
    %v5624 = vrot.slane %v5608, 1
    %v5625 = vrot.slane %v5609, 1
    %v5626 = vrot.slane %v5611, 1
    %v5627 = vrot.slane %v5613, 2
    %v5628 = vor.u32 %v5626, %v5627
    %v5629 = vrot.slane %v5618, 1
    %v5630 = vrot.slane %v5620, 2
    %v5631 = vor.u32 %v5629, %v5630
    %v5632 = vrot.slane %v5608, 2
    %v5633 = vrot.slane %v5609, 2
    %v5634 = vunpack.c.l.b16 %v5616
    %v5635 = vunpack.c.l.b16 %v5624
    %v5636 = vunpack.c.l.b16 %v5628
    %v5637 = vunpack.c.l.b16 %v5632
    %v5638 = vunpack.c.l.b16 %v5623
    %v5639 = vunpack.c.l.b16 %v5625
    %v5640 = vunpack.c.l.b16 %v5631
    %v5641 = vunpack.c.l.b16 %v5633
    %s5642 = scalar_lea.vmem [#allocation9], 2880
    %v5643 = vld [vmem:[%s5642] sm:$0xf]
    %v5644 = vld [vmem:[%s5642 + $0x4] sm:$0xf]
    %v5645 = vld [vmem:[%s5642 + $0x8] sm:$0xf]
    %v5646 = vld [vmem:[%s5642 + $0xc] sm:$0xf]
    %v5647 = vld [vmem:[%s5642 + $0x10] sm:$0xf]
    %v5648 = vld [vmem:[%s5642 + $0x14] sm:$0xf]
    %v5649 = vld [vmem:[%s5642 + $0x18] sm:$0xf]
    %v5650 = vld [vmem:[%s5642 + $0x1c] sm:$0xf]
    %v5651 = vld [vmem:[%s5642 + $0x20] sm:$0xf]
    %v5652 = vld [vmem:[%s5642 + $0x24] sm:$0xf]
    %v5653 = vld [vmem:[%s5642 + $0x28] sm:$0xf]
    %v5654 = vld [vmem:[%s5642 + $0x2c] sm:$0xf]
    %v5655 = vld [vmem:[%s5642 + $0x30] sm:$0xf]
    %v5656 = vld [vmem:[%s5642 + $0x34] sm:$0xf]
    %v5657 = vld [vmem:[%s5642 + $0x38] sm:$0xf]
    %v5658 = vld [vmem:[%s5642 + $0x3c] sm:$0xf]
    %v5659 = vld [vmem:[%s5642 + $0x40] sm:$0xf]
    %v5660 = vld [vmem:[%s5642 + $0x44] sm:$0xf]
    %v5661 = vld [vmem:[%s5642 + $0x48] sm:$0xf]
    %v5662 = vld [vmem:[%s5642 + $0x4c] sm:$0xf]
    %v5663 = vld [vmem:[%s5642 + $0x50] sm:$0xf]
    %v5664 = vld [vmem:[%s5642 + $0x54] sm:$0xf]
    %v5665 = vld [vmem:[%s5642 + $0x58] sm:$0xf]
    %v5666 = vld [vmem:[%s5642 + $0x5c] sm:$0xf]
    %v5667 = vld [vmem:[%s5642 + $0x60] sm:$0xf]
    %v5668 = vld [vmem:[%s5642 + $0x64] sm:$0xf]
    %v5669 = vld [vmem:[%s5642 + $0x68] sm:$0xf]
    %v5670 = vld [vmem:[%s5642 + $0x6c] sm:$0xf]
    %v5671 = vld [vmem:[%s5642 + $0x70] sm:$0xf]
    %v5672 = vld [vmem:[%s5642 + $0x74] sm:$0xf]
    %v5673 = vld [vmem:[%s5642 + $0x78] sm:$0xf]
    %v5674 = vld [vmem:[%s5642 + $0x7c] sm:$0xf]
    %v5675 = vld [vmem:[%s5642 + $0x80] sm:$0xf]
    %v5676 = vld [vmem:[%s5642 + $0x84] sm:$0xf]
    %v5677 = vld [vmem:[%s5642 + $0x88] sm:$0xf]
    %v5678 = vld [vmem:[%s5642 + $0x8c] sm:$0xf]
    %v5679 = vld [vmem:[%s5642 + $0x90] sm:$0xf]
    %v5680 = vld [vmem:[%s5642 + $0x94] sm:$0xf]
    %v5681 = vld [vmem:[%s5642 + $0x98] sm:$0xf]
    %v5682 = vld [vmem:[%s5642 + $0x9c] sm:$0xf]
    %v5683 = vld [vmem:[%s5642 + $0xa0] sm:$0xf]
    %v5684 = vld [vmem:[%s5642 + $0xa4] sm:$0xf]
    %v5685 = vld [vmem:[%s5642 + $0xa8] sm:$0xf]
    %v5686 = vld [vmem:[%s5642 + $0xac] sm:$0xf]
    %v5687 = vld [vmem:[%s5642 + $0xb0] sm:$0xf]
    %v5688 = vld [vmem:[%s5642 + $0xb4] sm:$0xf]
    %v5689 = vld [vmem:[%s5642 + $0xb8] sm:$0xf]
    %v5690 = vld [vmem:[%s5642 + $0xbc] sm:$0xf]
    %v5691 = vld [vmem:[%s5642 + $0xc0] sm:$0xf]
    %v5692 = vld [vmem:[%s5642 + $0xc4] sm:$0xf]
    %v5693 = vld [vmem:[%s5642 + $0xc8] sm:$0xf]
    %v5694 = vld [vmem:[%s5642 + $0xcc] sm:$0xf]
    %v5695 = vld [vmem:[%s5642 + $0xd0] sm:$0xf]
    %v5696 = vld [vmem:[%s5642 + $0xd4] sm:$0xf]
    %v5697 = vld [vmem:[%s5642 + $0xd8] sm:$0xf]
    %v5698 = vld [vmem:[%s5642 + $0xdc] sm:$0xf]
    %v5699 = vld [vmem:[%s5642 + $0xe0] sm:$0xf]
    %v5700 = vld [vmem:[%s5642 + $0xe4] sm:$0xf]
    %v5701 = vld [vmem:[%s5642 + $0xe8] sm:$0xf]
    %v5702 = vld [vmem:[%s5642 + $0xec] sm:$0xf]
    %v5703 = vld [vmem:[%s5642 + $0xf0] sm:$0xf]
    %v5704 = vld [vmem:[%s5642 + $0xf4] sm:$0xf]
    %v5705 = vld [vmem:[%s5642 + $0xf8] sm:$0xf]
    %v5706 = vld [vmem:[%s5642 + $0xfc] sm:$0xf]
    %v5707 = vld [vmem:[%s5642 + $0x100] sm:$0xf]
    %v5708 = vld [vmem:[%s5642 + $0x104] sm:$0xf]
    %v5709 = vld [vmem:[%s5642 + $0x108] sm:$0xf]
    %v5710 = vld [vmem:[%s5642 + $0x10c] sm:$0xf]
    %v5711 = vld [vmem:[%s5642 + $0x110] sm:$0xf]
    %v5712 = vld [vmem:[%s5642 + $0x114] sm:$0xf]
    %v5713 = vld [vmem:[%s5642 + $0x118] sm:$0xf]
    %v5714 = vld [vmem:[%s5642 + $0x11c] sm:$0xf]
    %v5715 = vld [vmem:[%s5642 + $0x120] sm:$0xf]
    %v5716 = vld [vmem:[%s5642 + $0x124] sm:$0xf]
    %v5717 = vld [vmem:[%s5642 + $0x128] sm:$0xf]
    %v5718 = vld [vmem:[%s5642 + $0x12c] sm:$0xf]
    %v5719 = vld [vmem:[%s5642 + $0x130] sm:$0xf]
    %v5720 = vld [vmem:[%s5642 + $0x134] sm:$0xf]
    %v5721 = vld [vmem:[%s5642 + $0x138] sm:$0xf]
    %v5722 = vld [vmem:[%s5642 + $0x13c] sm:$0xf]
    %v5723 = vpack.c.b16 %v5606, %v5604
    %v5724 = vpack.c.b16 %v5638, %v5634
    %v5725 = vpack.c.b16 %v5639, %v5635
    %v5726 = vpack.c.b16 %v5640, %v5636
    %v5727 = vpack.c.b16 %v5641, %v5637
    %v5813 = vunpack.c.l.b16 %v5643
    %v5814 = vunpack.c.l.b16 %v5644
    %v5815 = vunpack.c.l.b16 %v5645
    %v5816 = vunpack.c.l.b16 %v5646
    %v5817 = vunpack.c.l.b16 %v5647
    %v5818 = vunpack.c.l.b16 %v5648
    %v5819 = vunpack.c.l.b16 %v5649
    %v5820 = vunpack.c.l.b16 %v5650
    %v5821 = vunpack.c.l.b16 %v5651
    %v5822 = vunpack.c.l.b16 %v5652
    %v5823 = vunpack.c.l.b16 %v5653
    %v5824 = vunpack.c.l.b16 %v5654
    %v5825 = vunpack.c.l.b16 %v5655
    %v5826 = vunpack.c.l.b16 %v5656
    %v5827 = vunpack.c.l.b16 %v5657
    %v5828 = vunpack.c.l.b16 %v5658
    %v5829 = vunpack.c.l.b16 %v5659
    %v5830 = vunpack.c.l.b16 %v5660
    %v5831 = vunpack.c.l.b16 %v5661
    %v5832 = vunpack.c.l.b16 %v5662
    %v5833 = vunpack.c.l.b16 %v5663
    %v5834 = vunpack.c.l.b16 %v5664
    %v5835 = vunpack.c.l.b16 %v5665
    %v5836 = vunpack.c.l.b16 %v5666
    %v5837 = vunpack.c.l.b16 %v5667
    %v5838 = vunpack.c.l.b16 %v5668
    %v5839 = vunpack.c.l.b16 %v5669
    %v5840 = vunpack.c.l.b16 %v5670
    %v5841 = vunpack.c.l.b16 %v5671
    %v5842 = vunpack.c.l.b16 %v5672
    %v5843 = vunpack.c.l.b16 %v5673
    %v5844 = vunpack.c.l.b16 %v5674
    %v5845 = vunpack.c.l.b16 %v5675
    %v5846 = vunpack.c.l.b16 %v5676
    %v5847 = vunpack.c.l.b16 %v5677
    %v5848 = vunpack.c.l.b16 %v5678
    %v5849 = vunpack.c.l.b16 %v5679
    %v5850 = vunpack.c.l.b16 %v5680
    %v5851 = vunpack.c.l.b16 %v5681
    %v5852 = vunpack.c.l.b16 %v5682
    %v5853 = vunpack.c.l.b16 %v5683
    %v5854 = vunpack.c.l.b16 %v5684
    %v5855 = vunpack.c.l.b16 %v5685
    %v5856 = vunpack.c.l.b16 %v5686
    %v5857 = vunpack.c.l.b16 %v5687
    %v5858 = vunpack.c.l.b16 %v5688
    %v5859 = vunpack.c.l.b16 %v5689
    %v5860 = vunpack.c.l.b16 %v5690
    %v5861 = vunpack.c.l.b16 %v5691
    %v5862 = vunpack.c.l.b16 %v5692
    %v5863 = vunpack.c.l.b16 %v5693
    %v5864 = vunpack.c.l.b16 %v5694
    %v5865 = vunpack.c.l.b16 %v5695
    %v5866 = vunpack.c.l.b16 %v5696
    %v5867 = vunpack.c.l.b16 %v5697
    %v5868 = vunpack.c.l.b16 %v5698
    %v5869 = vunpack.c.l.b16 %v5699
    %v5870 = vunpack.c.l.b16 %v5700
    %v5871 = vunpack.c.l.b16 %v5701
    %v5872 = vunpack.c.l.b16 %v5702
    %v5873 = vunpack.c.l.b16 %v5703
    %v5874 = vunpack.c.l.b16 %v5704
    %v5875 = vunpack.c.l.b16 %v5705
    %v5876 = vunpack.c.l.b16 %v5706
    %v5877 = vunpack.c.l.b16 %v5707
    %v5878 = vunpack.c.l.b16 %v5708
    %v5879 = vunpack.c.l.b16 %v5709
    %v5880 = vunpack.c.l.b16 %v5710
    %v5881 = vunpack.c.l.b16 %v5711
    %v5882 = vunpack.c.l.b16 %v5712
    %v5883 = vunpack.c.l.b16 %v5713
    %v5884 = vunpack.c.l.b16 %v5714
    %v5885 = vunpack.c.l.b16 %v5715
    %v5886 = vunpack.c.l.b16 %v5716
    %v5887 = vunpack.c.l.b16 %v5717
    %v5888 = vunpack.c.l.b16 %v5718
    %v5889 = vunpack.c.l.b16 %v5719
    %v5890 = vunpack.c.l.b16 %v5720
    %v5891 = vunpack.c.l.b16 %v5721
    %v5892 = vunpack.c.l.b16 %v5722
    %v5893 = vpack.c.b16 %v5814, %v5813
    %v5894 = vpack.c.b16 %v5816, %v5815
    %v5895 = vpack.c.b16 %v5818, %v5817
    %v5896 = vpack.c.b16 %v5820, %v5819
    %v5897 = vpack.c.b16 %v5822, %v5821
    %v5898 = vpack.c.b16 %v5824, %v5823
    %v5899 = vpack.c.b16 %v5826, %v5825
    %v5900 = vpack.c.b16 %v5828, %v5827
    %v5901 = vpack.c.b16 %v5830, %v5829
    %v5902 = vpack.c.b16 %v5832, %v5831
    %v5903 = vpack.c.b16 %v5834, %v5833
    %v5904 = vpack.c.b16 %v5836, %v5835
    %v5905 = vpack.c.b16 %v5838, %v5837
    %v5906 = vpack.c.b16 %v5840, %v5839
    %v5907 = vpack.c.b16 %v5842, %v5841
    %v5908 = vpack.c.b16 %v5844, %v5843
    %v5909 = vpack.c.b16 %v5846, %v5845
    %v5910 = vpack.c.b16 %v5848, %v5847
    %v5911 = vpack.c.b16 %v5850, %v5849
    %v5912 = vpack.c.b16 %v5852, %v5851
    %v5913 = vpack.c.b16 %v5854, %v5853
    %v5914 = vpack.c.b16 %v5856, %v5855
    %v5915 = vpack.c.b16 %v5858, %v5857
    %v5916 = vpack.c.b16 %v5860, %v5859
    %v5917 = vpack.c.b16 %v5862, %v5861
    %v5918 = vpack.c.b16 %v5864, %v5863
    %v5919 = vpack.c.b16 %v5866, %v5865
    %v5920 = vpack.c.b16 %v5868, %v5867
    %v5921 = vpack.c.b16 %v5870, %v5869
    %v5922 = vpack.c.b16 %v5872, %v5871
    %v5923 = vpack.c.b16 %v5874, %v5873
    %v5924 = vpack.c.b16 %v5876, %v5875
    %v5925 = vpack.c.b16 %v5878, %v5877
    %v5926 = vpack.c.b16 %v5880, %v5879
    %v5927 = vpack.c.b16 %v5882, %v5881
    %v5928 = vpack.c.b16 %v5884, %v5883
    %v5929 = vpack.c.b16 %v5886, %v5885
    %v5930 = vpack.c.b16 %v5888, %v5887
    %v5931 = vpack.c.b16 %v5890, %v5889
    %v5932 = vpack.c.b16 %v5892, %v5891
    %5973 = vmatprep.subr.bf16.mxu0 0
    %5974 = vmatpush1.bf16.msra.mxu0 %v5893
    %5975 = vmatprep.subr.bf16.mxu0 0
    %5976 = vmatpush1.bf16.msra.mxu0 %v5894
    %5977 = vmatprep.subr.bf16.mxu0 0
    %5978 = vmatpush1.bf16.msra.mxu0 %v5895
    %5979 = vmatprep.subr.bf16.mxu0 0
    %5980 = vmatpush1.bf16.msra.mxu0 %v5896
    %5981 = vmatprep.subr.bf16.mxu0 0
    %5982 = vmatpush1.bf16.msra.mxu0 %v5897
    %5983 = vmatprep.subr.bf16.mxu0 0
    %5984 = vmatpush1.bf16.msra.mxu0 %v5898
    %5985 = vmatprep.subr.bf16.mxu0 0
    %5986 = vmatpush1.bf16.msra.mxu0 %v5899
    %5987 = vmatprep.subr.bf16.mxu0 0
    %5988 = vmatpush1.bf16.msra.mxu0 %v5900
    %5989 = vmatprep.subr.bf16.mxu0 0
    %5990 = vmatpush1.bf16.msra.mxu0 %v5901
    %5991 = vmatprep.subr.bf16.mxu0 0
    %5992 = vmatpush1.bf16.msra.mxu0 %v5902
    %5993 = vmatprep.subr.bf16.mxu0 0
    %5994 = vmatpush1.bf16.msra.mxu0 %v5903
    %5995 = vmatprep.subr.bf16.mxu0 0
    %5996 = vmatpush1.bf16.msra.mxu0 %v5904
    %5997 = vmatprep.subr.bf16.mxu0 0
    %5998 = vmatpush1.bf16.msra.mxu0 %v5905
    %5999 = vmatprep.subr.bf16.mxu0 0
    %6000 = vmatpush1.bf16.msra.mxu0 %v5906
    %6001 = vmatprep.subr.bf16.mxu0 0
    %6002 = vmatpush1.bf16.msra.mxu0 %v5907
    %6003 = vmatprep.subr.bf16.mxu0 0
    %6004 = vmatpush1.bf16.msra.mxu0 %v5908
    %6005 = vmatprep.mubr.bf16.mxu0 %v5724
    %6006 = vmatmul.mubr.bf16.gmra.mrb[0].mxu0 %v5723
    %v6007 = vpop.f32.mrb[0].mxu0
    %v6008 = vadd.f32 0.0, %v6007
    %v6009 = vpop.f32.mrb[0].mxu0
    %v6010 = vpop.f32.mrb[0].mxu0
    %v6011 = vadd.f32 0.0, %v6010
    %v6012 = vpop.f32.mrb[0].mxu0
    %6013 = vdwg.mxu0
    %6014 = vmatprep.subr.bf16.mxu0 0
    %6015 = vmatpush1.bf16.msra.mxu0 %v5909
    %6016 = vmatprep.subr.bf16.mxu0 0
    %6017 = vmatpush1.bf16.msra.mxu0 %v5910
    %6018 = vmatprep.subr.bf16.mxu0 0
    %6019 = vmatpush1.bf16.msra.mxu0 %v5911
    %6020 = vmatprep.subr.bf16.mxu0 0
    %6021 = vmatpush1.bf16.msra.mxu0 %v5912
    %6022 = vmatprep.subr.bf16.mxu0 0
    %6023 = vmatpush1.bf16.msra.mxu0 %v5913
    %6024 = vmatprep.subr.bf16.mxu0 0
    %6025 = vmatpush1.bf16.msra.mxu0 %v5914
    %6026 = vmatprep.subr.bf16.mxu0 0
    %6027 = vmatpush1.bf16.msra.mxu0 %v5915
    %6028 = vmatprep.subr.bf16.mxu0 0
    %6029 = vmatpush1.bf16.msra.mxu0 %v5916
    %6030 = vmatprep.subr.bf16.mxu0 0
    %6031 = vmatpush1.bf16.msra.mxu0 %v5917
    %6032 = vmatprep.subr.bf16.mxu0 0
    %6033 = vmatpush1.bf16.msra.mxu0 %v5918
    %6034 = vmatprep.subr.bf16.mxu0 0
    %6035 = vmatpush1.bf16.msra.mxu0 %v5919
    %6036 = vmatprep.subr.bf16.mxu0 0
    %6037 = vmatpush1.bf16.msra.mxu0 %v5920
    %6038 = vmatprep.subr.bf16.mxu0 0
    %6039 = vmatpush1.bf16.msra.mxu0 %v5921
    %6040 = vmatprep.subr.bf16.mxu0 0
    %6041 = vmatpush1.bf16.msra.mxu0 %v5922
    %6042 = vmatprep.subr.bf16.mxu0 0
    %6043 = vmatpush1.bf16.msra.mxu0 %v5923
    %6044 = vmatprep.subr.bf16.mxu0 0
    %6045 = vmatpush1.bf16.msra.mxu0 %v5924
    %6046 = vmatprep.mubr.bf16.mxu0 %v5726
    %6047 = vmatmul.mubr.bf16.gmra.mrb[0].mxu0 %v5725
    %v6048 = vpop.f32.mrb[0].mxu0
    %v6049 = vadd.f32 %v6008, %v6048
    %v6050 = vpop.f32.mrb[0].mxu0
    %v6051 = vpop.f32.mrb[0].mxu0
    %v6052 = vadd.f32 %v6011, %v6051
    %v6053 = vpop.f32.mrb[0].mxu0
    %6054 = vdwg.mxu0
    %6055 = vmatprep.subr.bf16.mxu0 0
    %6056 = vmatpush1.bf16.msra.mxu0 %v5925
    %6057 = vmatprep.subr.bf16.mxu0 0
    %6058 = vmatpush1.bf16.msra.mxu0 %v5926
    %6059 = vmatprep.subr.bf16.mxu0 0
    %6060 = vmatpush1.bf16.msra.mxu0 %v5927
    %6061 = vmatprep.subr.bf16.mxu0 0
    %6062 = vmatpush1.bf16.msra.mxu0 %v5928
    %6063 = vmatprep.subr.bf16.mxu0 0
    %6064 = vmatpush1.bf16.msra.mxu0 %v5929
    %6065 = vmatprep.subr.bf16.mxu0 0
    %6066 = vmatpush1.bf16.msra.mxu0 %v5930
    %6067 = vmatprep.subr.bf16.mxu0 0
    %6068 = vmatpush1.bf16.msra.mxu0 %v5931
    %6069 = vmatprep.subr.bf16.mxu0 0
    %6070 = vmatpush1.bf16.msra.mxu0 %v5932
    %6071 = vmatprep.subr.bf16.mxu0 0
    %6072 = vmatpush1.bf16.msra.mxu0 0
    %6073 = vmatprep.subr.bf16.mxu0 0
    %6074 = vmatpush1.bf16.msra.mxu0 0
    %6075 = vmatprep.subr.bf16.mxu0 0
    %6076 = vmatpush1.bf16.msra.mxu0 0
    %6077 = vmatprep.subr.bf16.mxu0 0
    %6078 = vmatpush1.bf16.msra.mxu0 0
    %6079 = vmatprep.subr.bf16.mxu0 0
    %6080 = vmatpush1.bf16.msra.mxu0 0
    %6081 = vmatprep.subr.bf16.mxu0 0
    %6082 = vmatpush1.bf16.msra.mxu0 0
    %6083 = vmatprep.subr.bf16.mxu0 0
    %6084 = vmatpush1.bf16.msra.mxu0 0
    %6085 = vmatprep.subr.bf16.mxu0 0
    %6086 = vmatpush1.bf16.msra.mxu0 0
    %6087 = vmatprep.mubr.bf16.mxu0 0
    %6088 = vmatmul.mubr.bf16.gmra.mrb[0].mxu0 %v5727
    %v6089 = vpop.f32.mrb[0].mxu0
    %v6090 = vadd.f32 %v6049, %v6089
    %v6091 = vpop.f32.mrb[0].mxu0
    %v6092 = vpop.f32.mrb[0].mxu0
    %v6093 = vadd.f32 %v6052, %v6092
    %v6094 = vpop.f32.mrb[0].mxu0
    %6095 = vdwg.mxu0
    %s6096 = scalar_lea.vmem [#allocation11], 9
    %v6097 = vld [vmem:[%s6096] sm:$0x1]
    %v6099 = vlaneseq
    %v6100 = vshrl.u32 %v6099, 7
    %v6101 = vsub.s32 0, %v6100
    %v6102 = vrot.slane %v6097, %v6101
    %v6104 = vadd.f32 %v6090, %v6102
    %v6105 = vadd.f32 %v6093, %v6102
    %v6106 = vadd.f32 %v5040, %v6104
    %v6107 = vadd.f32 %v5041, %v6105
    %v6108 = vpack.c.bf16 %v6107, %v6106
    %v6109 = vld [vmem:[#allocation12] sm:$0xf]
    %v6110 = vld [vmem:[#allocation12 + $0x4] sm:$0xf]
    %v6111 = vld [vmem:[#allocation12 + $0x8] sm:$0xf]
    %v6112 = vld [vmem:[#allocation12 + $0xc] sm:$0xf]
    %v6113 = vld [vmem:[#allocation12 + $0x10] sm:$0xf]
    %v6114 = vld [vmem:[#allocation12 + $0x14] sm:$0xf]
    %v6115 = vld [vmem:[#allocation12 + $0x18] sm:$0xf]
    %v6116 = vld [vmem:[#allocation12 + $0x1c] sm:$0xf]
    %v6117 = vld [vmem:[#allocation12 + $0x20] sm:$0xf]
    %v6118 = vld [vmem:[#allocation12 + $0x24] sm:$0xf]
    %v6119 = vld [vmem:[#allocation12 + $0x28] sm:$0xf]
    %v6120 = vld [vmem:[#allocation12 + $0x2c] sm:$0xf]
    %v6121 = vld [vmem:[#allocation12 + $0x30] sm:$0xf]
    %v6122 = vld [vmem:[#allocation12 + $0x34] sm:$0xf]
    %v6123 = vld [vmem:[#allocation12 + $0x38] sm:$0xf]
    %v6124 = vld [vmem:[#allocation12 + $0x3c] sm:$0xf]
    %v6125 = vld [vmem:[#allocation14] sm:$0x1]
    %v6127 = vlaneseq
    %v6128 = vshrl.u32 %v6127, 7
    %v6129 = vsub.s32 0, %v6128
    %v6130 = vrot.slane %v6125, %v6129
    %v6148 = vunpack.c.l.b16 %v6109
    %v6149 = vunpack.c.l.b16 %v6110
    %v6150 = vunpack.c.l.b16 %v6111
    %v6151 = vunpack.c.l.b16 %v6112
    %v6152 = vunpack.c.l.b16 %v6113
    %v6153 = vunpack.c.l.b16 %v6114
    %v6154 = vunpack.c.l.b16 %v6115
    %v6155 = vunpack.c.l.b16 %v6116
    %v6156 = vunpack.c.l.b16 %v6117
    %v6157 = vunpack.c.l.b16 %v6118
    %v6158 = vunpack.c.l.b16 %v6119
    %v6159 = vunpack.c.l.b16 %v6120
    %v6160 = vunpack.c.l.b16 %v6121
    %v6161 = vunpack.c.l.b16 %v6122
    %v6162 = vunpack.c.l.b16 %v6123
    %v6163 = vunpack.c.l.b16 %v6124
    %v6164 = vpack.c.b16 %v6149, %v6148
    %v6165 = vpack.c.b16 %v6151, %v6150
    %v6166 = vpack.c.b16 %v6153, %v6152
    %v6167 = vpack.c.b16 %v6155, %v6154
    %v6168 = vpack.c.b16 %v6157, %v6156
    %v6169 = vpack.c.b16 %v6159, %v6158
    %v6170 = vpack.c.b16 %v6161, %v6160
    %v6171 = vpack.c.b16 %v6163, %v6162
    %6180 = vmatprep.subr.bf16.mxu0 0
    %6181 = vmatpush1.bf16.msra.mxu0 %v6164
    %6182 = vmatprep.subr.bf16.mxu0 0
    %6183 = vmatpush1.bf16.msra.mxu0 %v6165
    %6184 = vmatprep.subr.bf16.mxu0 0
    %6185 = vmatpush1.bf16.msra.mxu0 %v6166
    %6186 = vmatprep.subr.bf16.mxu0 0
    %6187 = vmatpush1.bf16.msra.mxu0 %v6167
    %6188 = vmatprep.subr.bf16.mxu0 0
    %6189 = vmatpush1.bf16.msra.mxu0 %v6168
    %6190 = vmatprep.subr.bf16.mxu0 0
    %6191 = vmatpush1.bf16.msra.mxu0 %v6169
    %6192 = vmatprep.subr.bf16.mxu0 0
    %6193 = vmatpush1.bf16.msra.mxu0 %v6170
    %6194 = vmatprep.subr.bf16.mxu0 0
    %6195 = vmatpush1.bf16.msra.mxu0 %v6171
    %6196 = vmatprep.subr.bf16.mxu0 0
    %6197 = vmatpush1.bf16.msra.mxu0 0
    %6198 = vmatprep.subr.bf16.mxu0 0
    %6199 = vmatpush1.bf16.msra.mxu0 0
    %6200 = vmatprep.subr.bf16.mxu0 0
    %6201 = vmatpush1.bf16.msra.mxu0 0
    %6202 = vmatprep.subr.bf16.mxu0 0
    %6203 = vmatpush1.bf16.msra.mxu0 0
    %6204 = vmatprep.subr.bf16.mxu0 0
    %6205 = vmatpush1.bf16.msra.mxu0 0
    %6206 = vmatprep.subr.bf16.mxu0 0
    %6207 = vmatpush1.bf16.msra.mxu0 0
    %6208 = vmatprep.subr.bf16.mxu0 0
    %6209 = vmatpush1.bf16.msra.mxu0 0
    %6210 = vmatprep.subr.bf16.mxu0 0
    %6211 = vmatpush1.bf16.msra.mxu0 0
    %6212 = vmatprep.mubr.bf16.mxu0 0
    %6213 = vmatmul.mubr.bf16.gmra.mrb[0].mxu0 %v6108
    %v6214 = vpop.f32.mrb[0].mxu0
    %v6215 = vadd.f32 %v6130, %v6214
    %v6216 = vpop.f32.mrb[0].mxu0
    %v6217 = vpop.f32.mrb[0].mxu0
    %v6218 = vadd.f32 %v6130, %v6217
    %v6219 = vpop.f32.mrb[0].mxu0
    %6220 = vdwg.mxu0
    %v6221 = vld [vmem:[#allocation15] sm:$0xf]
    %v6222 = vld [vmem:[#allocation15 + $0x4] sm:$0xf]
    %v6223 = vunpack.c.l.bf16 %v6221
    %v6224 = vunpack.c.l.bf16 %v6222
    %v6225 = vadd.f32 %v6215, %v6223
    %v6226 = vadd.f32 %v6218, %v6224
    %v6227 = vmul.f32 %v6225, 2.0
    %v6228 = vmul.f32 %v6226, 2.0
    %6229 = vmax.xlane.f32.xlu0 %v6227
    %v6230 = vpop.xlane.xlu0 %6229
    %6231 = vmax.xlane.f32.xlu0 %v6228
    %v6232 = vpop.xlane.xlu0 %6231
    %v6233 = vsub.f32 %v6227, %v6230
    %v6234 = vsub.f32 %v6228, %v6232
    %v6235 = vmul.f32 %v6233, 1.442695
    %v6236 = vpow.pop %v6235
    %v6237 = vmul.f32 %v6234, 1.442695
    %v6238 = vpow.pop %v6237
    %6239 = vadd.xlane.f32.xlu0 %v6236
    %v6240 = vpop.xlane.xlu0 %6239
    %6241 = vadd.xlane.f32.xlu0 %v6238
    %v6242 = vpop.xlane.xlu0 %6241
    %v6243 = vrcp.pop %v6240
    %v6244 = vmul.f32 %v6236, %v6243
    %v6245 = vrcp.pop %v6242
    %v6246 = vmul.f32 %v6238, %v6245
    %v6247 = vpack.c.bf16 %v6244, %v6244
    %v6248 = vpack.c.bf16 %v6246, %v6246
    %6249 = vst [vmem:[#allocation17] sm:$0xf] %v6247
    %6250 = vst [vmem:[#allocation17 + $0x4] sm:$0xf] %v6248
    // Predicated region
    $region66: #{tpu_custom_call.1} parent=1 // pred_check
      _
    $region67: #{tpu_custom_call.1} parent=1 // pred_check_branch
      %6252 = sbr.rel (0) target = $region69
    $region68: #{tpu_custom_call.1} parent=1 // pred_region
      %s6254 = ssub.s32 128, 128
      %6255 = vsyncadd [#allocation5], %s6254
      %s6256 = sshll.u32 [#allocation17], 4
      %s6257 = int_to_ptr.vmem [resolvable:$true] %s6256
      %6262 = dma.vmem_to_hbm [thread:$0]  %s6257, 128, %s8, [#allocation5], 64, 64, 4
    $region69: #{tpu_custom_call.1} parent=1 // pred_fallthru
      _
    // Predicated region
    $region70: #{tpu_custom_call.1} parent=1 // pred_check
      _
    $region71: #{tpu_custom_call.1} parent=1 // pred_check_branch
      %6264 = sbr.rel (0) target = $region73
    $region72: #{tpu_custom_call.1} parent=1 // pred_region
      %6265 = dma.done [#allocation5], 128
    $region73: #{tpu_custom_call.1} parent=1 // pred_fallthru
      _
    %6266 = vsyncpa [#allocation4], 1
    %6267 = vsyncpa [#allocation7], 1
    %6268 = vsyncpa [#allocation10], 1
    %6269 = vsyncpa [#allocation13], 1
    %6270 = vsyncpa [#allocation16], 1
    %6271 = vsyncpa [#allocation5], 1

</llo_original>
